<compile_context>
chip_gen: v7x
topology: tpu7x:2x2x1
jax: 0.10.0
libtpu: 0.0.40
codegen_flags: <defaults>
</compile_context>

<pallas_src>
import functools

import jax
import jax.numpy as jnp
from jax import lax
from jax.experimental import pallas as pl
from jax.experimental.pallas import tpu as pltpu


_LANE = 128
_TILE_M = 2048          # lane-tile cap for the large-M (2-phase) path


def _round_up(x, m):
    return (x + m - 1) // m * m


def _pad_and_tile(m):
    """Return (padded M, lane tile). tile == padded M means 'single block'."""
    if m <= _TILE_M:
        mp = m if m < _LANE else _round_up(m, _LANE)
        return mp, mp
    return _round_up(m, _TILE_M), _TILE_M


# -----------------------------------------------------------------------------
# In-kernel BatchNorm statistics (training mode, biased variance, eps=1e-5)
# -----------------------------------------------------------------------------
def _bn_scale_shift(y, gamma, beta, m_true, m_pad, eps):
    """Per-channel BN scale/shift from the f32 conv output y of shape (C, m_pad).

    Padded lane columns of y are exactly zero (zero patches, no bias), so the
    raw sum is unaffected; the centered sum-of-squares gets an exact correction
    for the (m_pad - m_true) zero columns.  Centered accumulation avoids the
    E[x^2] - E[x]^2 cancellation problem.
    """
    inv_m = 1.0 / float(m_true)
    mean = jnp.sum(y, axis=1, keepdims=True) * inv_m
    d = y - mean
    ssq = jnp.sum(d * d, axis=1, keepdims=True)
    ssq = ssq - float(m_pad - m_true) * mean * mean
    var = jnp.maximum(ssq * inv_m, 0.0)
    inv_std = lax.rsqrt(var + eps)
    scale = gamma * inv_std
    shift = beta - mean * scale
    return scale, shift


# -----------------------------------------------------------------------------
# Pallas kernels
# -----------------------------------------------------------------------------
def _conv_bn_relu_single_kernel(*refs, n_in, eps, m_true):
    """One-step fused conv + training-BN + ReLU (whole M fits in one block)."""
    ps = refs[:n_in]
    ws = refs[n_in:2 * n_in]
    gamma_ref = refs[2 * n_in]
    beta_ref = refs[2 * n_in + 1]
    out_ref = refs[2 * n_in + 2]

    acc = jnp.dot(ws[0][...], ps[0][...], preferred_element_type=jnp.float32)
    for i in range(1, n_in):
        acc = acc + jnp.dot(ws[i][...], ps[i][...],
                            preferred_element_type=jnp.float32)
    scale, shift = _bn_scale_shift(acc, gamma_ref[...], beta_ref[...],
                                   m_true, acc.shape[-1], eps)
    out_ref[...] = jnp.maximum(acc * scale + shift, 0.0).astype(out_ref.dtype)


def _conv_bn_relu_tiled_kernel(*refs, n_in, eps, m_true, tile_m):
    """2-phase fused conv + BN + ReLU for large M.

    grid = (2, T): phase 0 streams patch tiles (weights stay resident) and
    writes f32 conv tiles into a VMEM-resident scratch; phase 1 derives the
    batch stats once (t == 0) and streams scale/shift + ReLU tiles to HBM.
    """
    ps = refs[:n_in]
    ws = refs[n_in:2 * n_in]
    gamma_ref = refs[2 * n_in]
    beta_ref = refs[2 * n_in + 1]
    out_ref = refs[2 * n_in + 2]
    y_scr = refs[2 * n_in + 3]
    sc_scr = refs[2 * n_in + 4]
    sh_scr = refs[2 * n_in + 5]

    phase = pl.program_id(0)
    t = pl.program_id(1)
    off = pl.multiple_of(t * tile_m, _LANE)

    @pl.when(phase == 0)
    def _():
        acc = jnp.dot(ws[0][...], ps[0][...], preferred_element_type=jnp.float32)
        for i in range(1, n_in):
            acc = acc + jnp.dot(ws[i][...], ps[i][...],
                                preferred_element_type=jnp.float32)
        y_scr[:, pl.ds(off, tile_m)] = acc

    @pl.when(phase == 1)
    def _():
        @pl.when(t == 0)
        def _():
            scale, shift = _bn_scale_shift(y_scr[...], gamma_ref[...],
                                           beta_ref[...], m_true,
                                           y_scr.shape[-1], eps)
            sc_scr[...] = scale
            sh_scr[...] = shift

        y = y_scr[:, pl.ds(off, tile_m)]
        out_ref[...] = jnp.maximum(y * sc_scr[...] + sh_scr[...],
                                   0.0).astype(out_ref.dtype)


def _conv_sigmoid_kernel(*refs, n_in):
    """Final 1x1 conv with bias + sigmoid, output (Cout, TILE_M)."""
    ps = refs[:n_in]
    ws = refs[n_in:2 * n_in]
    b_ref = refs[2 * n_in]
    out_ref = refs[2 * n_in + 1]

    acc = jnp.dot(ws[0][...], ps[0][...], preferred_element_type=jnp.float32)
    for i in range(1, n_in):
        acc = acc + jnp.dot(ws[i][...], ps[i][...],
                            preferred_element_type=jnp.float32)
    acc = acc + b_ref[...]
    # exp lands on the EUP slot; exact divide keeps the output strictly in [0,1].
    out_ref[...] = 1.0 / (1.0 + jnp.exp(-acc))


# -----------------------------------------------------------------------------
# pallas_call dispatchers
# -----------------------------------------------------------------------------
def _conv_bn_relu_call(ps2d, ws2d, gamma, beta, m_true, *, eps, out_dtype):
    n_in = len(ps2d)
    cout = ws2d[0].shape[0]
    mp, tile_m = _pad_and_tile(m_true)
    ps_p = [jnp.pad(x, ((0, 0), (0, mp - m_true))) if mp != m_true else x
            for x in ps2d]

    if tile_m == mp:
        # Single-block path: one grid step, no activation round trip at all.
        in_specs = ([pl.BlockSpec(x.shape, lambda i: (0, 0)) for x in ps_p]
                    + [pl.BlockSpec(w.shape, lambda i: (0, 0)) for w in ws2d]
                    + [pl.BlockSpec((cout, 1), lambda i: (0, 0))] * 2)
        kernel = functools.partial(_conv_bn_relu_single_kernel,
                                   n_in=n_in, eps=eps, m_true=m_true)
        return pl.pallas_call(
            kernel,
            grid=(1,),
            in_specs=in_specs,
            out_specs=pl.BlockSpec((cout, mp), lambda i: (0, 0)),
            out_shape=jax.ShapeDtypeStruct((cout, mp), out_dtype),
            compiler_params=pltpu.CompilerParams(
                dimension_semantics=("arbitrary",)),
        )(*ps_p, *ws2d, gamma, beta)

    # Large-M path.  Phase 0 streams patch tile t; phase 1 re-uses block (0, 0)
    # so the patches are not re-read.  The output block index only starts
    # advancing in phase 1, so no junk block is ever written back.
    num_t = mp // tile_m
    in_specs = ([pl.BlockSpec((x.shape[0], tile_m),
                              lambda ph, t: (0, t * (1 - ph))) for x in ps_p]
                + [pl.BlockSpec(w.shape, lambda ph, t: (0, 0)) for w in ws2d]
                + [pl.BlockSpec((cout, 1), lambda ph, t: (0, 0))] * 2)
    kernel = functools.partial(_conv_bn_relu_tiled_kernel, n_in=n_in, eps=eps,
                               m_true=m_true, tile_m=tile_m)
    return pl.pallas_call(
        kernel,
        grid=(2, num_t),
        in_specs=in_specs,
        out_specs=pl.BlockSpec((cout, tile_m), lambda ph, t: (0, t * ph)),
        out_shape=jax.ShapeDtypeStruct((cout, mp), out_dtype),
        scratch_shapes=[pltpu.VMEM((cout, mp), jnp.float32),   # resident conv out
                        pltpu.VMEM((cout, 1), jnp.float32),    # BN scale
                        pltpu.VMEM((cout, 1), jnp.float32)],   # BN shift
        compiler_params=pltpu.CompilerParams(
            # Conv output is carried in VMEM scratch across both grid axes.
            dimension_semantics=("arbitrary", "arbitrary")),
    )(*ps_p, *ws2d, gamma, beta)


def _conv_sigmoid_call(ps2d, ws2d, bias, m_true):
    n_in = len(ps2d)
    cout = ws2d[0].shape[0]
    mp, tile_m = _pad_and_tile(m_true)
    ps_p = [jnp.pad(x, ((0, 0), (0, mp - m_true))) if mp != m_true else x
            for x in ps2d]
    in_specs = ([pl.BlockSpec((x.shape[0], tile_m), lambda t: (0, t))
                 for x in ps_p]
                + [pl.BlockSpec(w.shape, lambda t: (0, 0)) for w in ws2d]
                + [pl.BlockSpec((cout, 1), lambda t: (0, 0))])
    return pl.pallas_call(
        functools.partial(_conv_sigmoid_kernel, n_in=n_in),
        grid=(mp // tile_m,),
        in_specs=in_specs,
        out_specs=pl.BlockSpec((cout, tile_m), lambda t: (0, t)),
        out_shape=jax.ShapeDtypeStruct((cout, mp), jnp.float32),
        compiler_params=pltpu.CompilerParams(
            dimension_semantics=("parallel",)),
    )(*ps_p, *ws2d, bias)


# -----------------------------------------------------------------------------
# JAX glue: im2col (channel-first), conv wrappers, 2x bilinear upsample
# -----------------------------------------------------------------------------
def _im2col_cfirst(x, k, stride):
    """(C, N, H, W) -> (k*k*C, N*OH*OW) patches, rows ordered (kh, kw, c)."""
    c, n, h, w = x.shape
    pad = k // 2
    oh = (h + 2 * pad - k) // stride + 1
    ow = (w + 2 * pad - k) // stride + 1
    if k == 1 and stride == 1:
        return x.reshape(c, n * h * w), oh, ow
    xp = jnp.pad(x, ((0, 0), (0, 0), (pad, pad), (pad, pad)))
    rows = []
    for kh in range(k):
        for kw in range(k):
            rows.append(xp[:, :, kh:kh + stride * oh:stride,
                           kw:kw + stride * ow:stride])
    patches = jnp.concatenate(rows, axis=0)            # (k*k*C, N, OH, OW)
    # TODO(synk): move this into the conv kernel (halo'd tile + shifted dots)
    #             to remove the 9x HBM patch amplification for 3x3 convs.
    return patches.reshape(k * k * c, n * oh * ow), oh, ow


def _conv_inputs(xs, w, *, stride):
    """Per-input bf16 patches and the matching (Cout, K_i) weight slices."""
    k = w.shape[0]
    cout = w.shape[-1]
    ps2d, ws2d = [], []
    off = 0
    oh = ow = None
    for x in xs:
        ci = x.shape[0]
        wi = w[:, :, off:off + ci, :]                  # (k, k, ci, cout)
        off += ci
        p, oh, ow = _im2col_cfirst(x.astype(jnp.bfloat16), k, stride)
        ps2d.append(p)
        ws2d.append(jnp.transpose(wi, (3, 0, 1, 2))
                    .reshape(cout, k * k * ci).astype(jnp.bfloat16))
    n = xs[0].shape[1]
    return ps2d, ws2d, n, oh, ow


def conv_bn_relu(xs, conv_p, bn_p, *, stride=1, eps=1e-5):
    """Fused Conv -> training-mode BatchNorm -> ReLU (single pallas_call).

    The conv bias is dropped: it cancels exactly against the batch mean.
    """
    ps2d, ws2d, n, oh, ow = _conv_inputs(xs, conv_p["w"], stride=stride)
    cout = conv_p["w"].shape[-1]
    m = n * oh * ow
    gamma = bn_p["gamma"].reshape(cout, 1).astype(jnp.float32)
    beta = bn_p["beta"].reshape(cout, 1).astype(jnp.float32)
    y = _conv_bn_relu_call(ps2d, ws2d, gamma, beta, m, eps=eps,
                           out_dtype=jnp.bfloat16)
    return y[:, :m].reshape(cout, n, oh, ow)


def conv_sigmoid(xs, conv_p):
    """Final 1x1 conv with fused sigmoid (skip concat never materialized)."""
    ps2d, ws2d, n, oh, ow = _conv_inputs(xs, conv_p["w"], stride=1)
    cout = conv_p["w"].shape[-1]
    m = n * oh * ow
    bias = conv_p["b"].reshape(cout, 1).astype(jnp.float32)
    y = _conv_sigmoid_call(ps2d, ws2d, bias, m)
    return y[:, :m].reshape(cout, n, oh, ow)


def _upsample2x_axis(x, axis):
    l = x.shape[axis]
    first = lax.slice_in_dim(x, 0, 1, axis=axis)
    last = lax.slice_in_dim(x, l - 1, l, axis=axis)
    xl = jnp.concatenate([first, lax.slice_in_dim(x, 0, l - 1, axis=axis)], axis=axis)
    xr = jnp.concatenate([lax.slice_in_dim(x, 1, l, axis=axis), last], axis=axis)
    even = 0.75 * x + 0.25 * xl       # out[2k]   (edge-clamped, align_corners=False)
    odd = 0.75 * x + 0.25 * xr        # out[2k+1]
    stacked = jnp.stack([even, odd], axis=axis + 1)
    new_shape = list(x.shape)
    new_shape[axis] = 2 * l
    return stacked.reshape(new_shape)


def upsample2x_bilinear(x):
    # (C, N, H, W): upsample H (axis=2) then W (axis=3);
    # matches nn.Upsample(scale_factor=2, mode='bilinear').
    # TODO(synk): fuse into the up-block conv2 epilogue to avoid the plain-JAX
    #             temporaries.
    return _upsample2x_axis(_upsample2x_axis(x, 2), 3)


# -----------------------------------------------------------------------------
# Parameter initialization (deterministic, synthetic)
# -----------------------------------------------------------------------------
class KeyGen:
    def __init__(self, key):
        self._key = key
        self._i = 0

    def __call__(self):
        self._i += 1
        return jax.random.fold_in(self._key, self._i)


def init_conv(key, k, cin, cout):
    kw, kb = jax.random.split(key)
    fan_in = k * k * cin
    w = jax.random.normal(kw, (k, k, cin, cout), jnp.float32) / jnp.sqrt(float(fan_in))
    b = 0.01 * jax.random.normal(kb, (cout,), jnp.float32)
    return {"w": w, "b": b}


def init_bn(key, c):
    kg, kb = jax.random.split(key)
    gamma = 1.0 + 0.1 * jax.random.normal(kg, (c,), jnp.float32)
    beta = 0.1 * jax.random.normal(kb, (c,), jnp.float32)
    return {"gamma": gamma, "beta": beta}


def init_down_block(kg, cin, cout):
    return {"conv1": init_conv(kg(), 3, cin, cout), "bn1": init_bn(kg(), cout),
            "conv2": init_conv(kg(), 3, cout, cout), "bn2": init_bn(kg(), cout)}


def init_skip_block(kg, cin, cout):
    return {"conv": init_conv(kg(), 1, cin, cout), "bn": init_bn(kg(), cout)}


def init_up_block(kg, cin, cout):
    return {"conv1": init_conv(kg(), 3, cin, cout), "bn1": init_bn(kg(), cout),
            "conv2": init_conv(kg(), 1, cout, cout), "bn2": init_bn(kg(), cout)}


def init_dip(key, in_channels, down_channels, up_channels, skip_channels, out_channels):
    assert len(down_channels) == len(up_channels) == len(skip_channels)
    layers = len(down_channels)
    enc = [in_channels] + list(down_channels)
    dec = list(up_channels) + [down_channels[-1]]
    kg = KeyGen(key)
    params = {"down": [], "up": [], "skip": []}
    for l in range(layers):
        if skip_channels[l] == 0:
            params["skip"].append(None)
        else:
            params["skip"].append(init_skip_block(kg, enc[l], skip_channels[l]))
        params["down"].append(init_down_block(kg, enc[l], enc[l + 1]))
        if l != layers - 1:
            params["up"].append(init_up_block(kg, skip_channels[l + 1] + dec[l + 1], dec[l]))
        else:
            params["up"].append(init_up_block(kg, dec[l + 1], dec[l]))
    params["out"] = init_conv(kg(), 1, dec[0] + skip_channels[0], out_channels)
    return params


# -----------------------------------------------------------------------------
# Block / model forward (mirrors the PyTorch module exactly)
# -----------------------------------------------------------------------------
def down_block_apply(x, p):
    x = conv_bn_relu([x], p["conv1"], p["bn1"], stride=2)
    x = conv_bn_relu([x], p["conv2"], p["bn2"], stride=1)
    return x


def skip_block_apply(x, p):
    return conv_bn_relu([x], p["conv"], p["bn"], stride=1)


def up_block_apply(xs, p):
    x = conv_bn_relu(xs, p["conv1"], p["bn1"], stride=1)
    x = conv_bn_relu([x], p["conv2"], p["bn2"], stride=1)
    return upsample2x_bilinear(x)


def dip_forward(params, x_nchw):
    """DIP forward; input/output are PyTorch-style NCHW."""
    x = jnp.transpose(x_nchw, (1, 0, 2, 3))          # internal (C, N, H, W) layout
    layers = len(params["down"])                     # static Python int
    skips = []
    for l in range(layers):
        if params["skip"][l] is None:
            skips.append(None)
        else:
            skips.append(skip_block_apply(x, params["skip"][l]))
        x = down_block_apply(x, params["down"][l])
    for l in reversed(range(layers)):
        if l == layers - 1 or skips[l + 1] is None:
            x = up_block_apply([x], params["up"][l])
        else:
            x = up_block_apply([x, skips[l + 1]], params["up"][l])   # no concat
    if skips[0] is None:
        out = conv_sigmoid([x], params["out"])
    else:
        out = conv_sigmoid([x, skips[0]], params["out"])             # no concat
    return jnp.transpose(out, (1, 0, 2, 3))          # back to NCHW


# -----------------------------------------------------------------------------
# Demo
# -----------------------------------------------------------------------------
if __name__ == "__main__":
    # Small DIP config (module allows configurable widths/depth).
    in_channels = 8
    down_channels = [16, 16, 16]
    up_channels = [16, 16, 16]
    skip_channels = [4, 4, 4]
    out_channels = 3
    N, H, W = 2, 16, 16          # spatial divisible by 2**layers

    key = jax.random.PRNGKey(0)
    k_param, k_x = jax.random.split(key)

    params = init_dip(k_param, in_channels, down_channels, up_channels,
                      skip_channels, out_channels)

    x = jax.random.normal(k_x, (N, in_channels, H, W), jnp.float32)   # NCHW

    fwd = jax.jit(dip_forward)
    out = jax.block_until_ready(fwd(params, x))

    assert out.shape == (N, out_channels, H, W)
    assert bool(jnp.all(jnp.isfinite(out)))
    assert bool(jnp.all((out >= 0.0) & (out <= 1.0)))   # sigmoid output

    print("KERNEL_OK")
</pallas_src>

<mosaic_0001>
module attributes {stable_mosaic.version = 11 : i64} {
  func.func @_conv_bn_relu_single_kernel(%arg0: i32, %arg1: memref<72x128xbf16, #tpu.memory_space<vmem>>, %arg2: memref<16x72xbf16, #tpu.memory_space<vmem>>, %arg3: memref<16x1xf32, #tpu.memory_space<vmem>>, %arg4: memref<16x1xf32, #tpu.memory_space<vmem>>, %arg5: memref<16x128xbf16, #tpu.memory_space<vmem>>) attributes {dimension_semantics = [#tpu.dimension_semantics<arbitrary>], iteration_bounds = array<i64: 1>, scalar_prefetch = 0 : i64, scratch_operands = 0 : i64, tpu.core_type = #tpu.core_type<tc>, window_params = [{pipeline_mode = #tpu.pipeline_mode<synchronous>, transform_indices = @transform_0, window_bounds = array<i64: 72, 128>}, {pipeline_mode = #tpu.pipeline_mode<synchronous>, transform_indices = @transform_1, window_bounds = array<i64: 16, 72>}, {pipeline_mode = #tpu.pipeline_mode<synchronous>, transform_indices = @transform_2, window_bounds = array<i64: 16, 1>}, {pipeline_mode = #tpu.pipeline_mode<synchronous>, transform_indices = @transform_3, window_bounds = array<i64: 16, 1>}, {pipeline_mode = #tpu.pipeline_mode<synchronous>, transform_indices = @transform_4, window_bounds = array<i64: 16, 128>}]} {
    %c0 = arith.constant 0 : index
    %c0_0 = arith.constant 0 : index
    %0 = vector.load %arg2[%c0, %c0_0] : memref<16x72xbf16, #tpu.memory_space<vmem>>, vector<16x72xbf16>
    %c0_1 = arith.constant 0 : index
    %c0_2 = arith.constant 0 : index
    %1 = vector.load %arg1[%c0_1, %c0_2] : memref<72x128xbf16, #tpu.memory_space<vmem>>, vector<72x128xbf16>
    %cst = arith.constant dense<0.000000e+00> : vector<16x128xf32>
    %2 = tpu.matmul %0, %1, %cst {dimension_numbers = #tpu.dot_dimension_numbers<[1], [0], [0], [1], [0, 0, 1, 1], [], []>} : vector<16x72xbf16>, vector<72x128xbf16>, vector<16x128xf32> -> vector<16x128xf32>
    %c0_3 = arith.constant 0 : index
    %c0_4 = arith.constant 0 : index
    %3 = vector.load %arg3[%c0_3, %c0_4] : memref<16x1xf32, #tpu.memory_space<vmem>>, vector<16x1xf32>
    %c0_5 = arith.constant 0 : index
    %c0_6 = arith.constant 0 : index
    %4 = vector.load %arg4[%c0_5, %c0_6] : memref<16x1xf32, #tpu.memory_space<vmem>>, vector<16x1xf32>
    %cst_7 = arith.constant dense<0.000000e+00> : vector<16xf32>
    %5 = vector.multi_reduction <add>, %2, %cst_7 [1] : vector<16x128xf32> to vector<16xf32>
    %6 = vector.shape_cast %5 : vector<16xf32> to vector<16x1xf32>
    %cst_8 = arith.constant 7.812500e-03 : f32
    %7 = vector.broadcast %cst_8 : f32 to vector<16x1xf32>
    %8 = arith.mulf %6, %7 : vector<16x1xf32>
    %9 = vector.broadcast %8 : vector<16x1xf32> to vector<16x128xf32>
    %10 = arith.subf %2, %9 : vector<16x128xf32>
    %11 = arith.mulf %10, %10 : vector<16x128xf32>
    %cst_9 = arith.constant dense<0.000000e+00> : vector<16xf32>
    %12 = vector.multi_reduction <add>, %11, %cst_9 [1] : vector<16x128xf32> to vector<16xf32>
    %13 = vector.shape_cast %12 : vector<16xf32> to vector<16x1xf32>
    %cst_10 = arith.constant 0.000000e+00 : f32
    %14 = vector.broadcast %cst_10 : f32 to vector<16x1xf32>
    %15 = arith.mulf %14, %8 : vector<16x1xf32>
    %16 = arith.mulf %15, %8 : vector<16x1xf32>
    %17 = arith.subf %13, %16 : vector<16x1xf32>
    %cst_11 = arith.constant 7.812500e-03 : f32
    %18 = vector.broadcast %cst_11 : f32 to vector<16x1xf32>
    %19 = arith.mulf %17, %18 : vector<16x1xf32>
    %cst_12 = arith.constant 0.000000e+00 : f32
    %20 = vector.broadcast %cst_12 : f32 to vector<16x1xf32>
    %21 = arith.maximumf %19, %20 : vector<16x1xf32>
    %cst_13 = arith.constant 9.99999974E-6 : f32
    %22 = vector.broadcast %cst_13 : f32 to vector<16x1xf32>
    %23 = arith.addf %21, %22 : vector<16x1xf32>
    %24 = math.rsqrt %23 : vector<16x1xf32>
    %25 = arith.mulf %3, %24 : vector<16x1xf32>
    %26 = arith.mulf %8, %25 : vector<16x1xf32>
    %27 = arith.subf %4, %26 : vector<16x1xf32>
    %28 = vector.broadcast %25 : vector<16x1xf32> to vector<16x128xf32>
    %29 = arith.mulf %2, %28 : vector<16x128xf32>
    %30 = vector.broadcast %27 : vector<16x1xf32> to vector<16x128xf32>
    %31 = arith.addf %29, %30 : vector<16x128xf32>
    %cst_14 = arith.constant 0.000000e+00 : f32
    %32 = vector.broadcast %cst_14 : f32 to vector<16x128xf32>
    %33 = arith.maximumf %31, %32 : vector<16x128xf32>
    %34 = arith.truncf %33 : vector<16x128xf32> to vector<16x128xbf16>
    %c0_15 = arith.constant 0 : index
    %c0_16 = arith.constant 0 : index
    %35 = vector.load %arg5[%c0_15, %c0_16] : memref<16x128xbf16, #tpu.memory_space<vmem>>, vector<16x128xbf16>
    tpu.vector_store %arg5[%c0_15, %c0_16], %34 {strides = array<i32>} : memref<16x128xbf16, #tpu.memory_space<vmem>>, vector<16x128xbf16>,
    return
  }
  func.func @transform_0(%arg0: i32) -> (i32, i32) {
    %c0_i32 = arith.constant 0 : i32
    %c0_i32_0 = arith.constant 0 : i32
    %c0_i32_1 = arith.constant 0 : i32
    return %c0_i32, %c0_i32_0 : i32, i32
  }
  func.func @transform_1(%arg0: i32) -> (i32, i32) {
    %c0_i32 = arith.constant 0 : i32
    %c0_i32_0 = arith.constant 0 : i32
    %c0_i32_1 = arith.constant 0 : i32
    return %c0_i32, %c0_i32_0 : i32, i32
  }
  func.func @transform_2(%arg0: i32) -> (i32, i32) {
    %c0_i32 = arith.constant 0 : i32
    %c0_i32_0 = arith.constant 0 : i32
    %c0_i32_1 = arith.constant 0 : i32
    return %c0_i32, %c0_i32_0 : i32, i32
  }
  func.func @transform_3(%arg0: i32) -> (i32, i32) {
    %c0_i32 = arith.constant 0 : i32
    %c0_i32_0 = arith.constant 0 : i32
    %c0_i32_1 = arith.constant 0 : i32
    return %c0_i32, %c0_i32_0 : i32, i32
  }
  func.func @transform_4(%arg0: i32) -> (i32, i32) {
    %c0_i32 = arith.constant 0 : i32
    %c0_i32_0 = arith.constant 0 : i32
    %c0_i32_1 = arith.constant 0 : i32
    return %c0_i32, %c0_i32_0 : i32, i32
  }
}

module attributes {stable_mosaic.version = 11 : i64} {
  func.func @_conv_bn_relu_single_kernel(%arg0: i32, %arg1: memref<144x128xbf16, #tpu.memory_space<vmem>>, %arg2: memref<16x144xbf16, #tpu.memory_space<vmem>>, %arg3: memref<16x1xf32, #tpu.memory_space<vmem>>, %arg4: memref<16x1xf32, #tpu.memory_space<vmem>>, %arg5: memref<16x128xbf16, #tpu.memory_space<vmem>>) attributes {dimension_semantics = [#tpu.dimension_semantics<arbitrary>], iteration_bounds = array<i64: 1>, scalar_prefetch = 0 : i64, scratch_operands = 0 : i64, tpu.core_type = #tpu.core_type<tc>, window_params = [{pipeline_mode = #tpu.pipeline_mode<synchronous>, transform_indices = @transform_0, window_bounds = array<i64: 144, 128>}, {pipeline_mode = #tpu.pipeline_mode<synchronous>, transform_indices = @transform_1, window_bounds = array<i64: 16, 144>}, {pipeline_mode = #tpu.pipeline_mode<synchronous>, transform_indices = @transform_2, window_bounds = array<i64: 16, 1>}, {pipeline_mode = #tpu.pipeline_mode<synchronous>, transform_indices = @transform_3, window_bounds = array<i64: 16, 1>}, {pipeline_mode = #tpu.pipeline_mode<synchronous>, transform_indices = @transform_4, window_bounds = array<i64: 16, 128>}]} {
    %c0 = arith.constant 0 : index
    %c0_0 = arith.constant 0 : index
    %0 = vector.load %arg2[%c0, %c0_0] : memref<16x144xbf16, #tpu.memory_space<vmem>>, vector<16x144xbf16>
    %c0_1 = arith.constant 0 : index
    %c0_2 = arith.constant 0 : index
    %1 = vector.load %arg1[%c0_1, %c0_2] : memref<144x128xbf16, #tpu.memory_space<vmem>>, vector<144x128xbf16>
    %cst = arith.constant dense<0.000000e+00> : vector<16x128xf32>
    %2 = tpu.matmul %0, %1, %cst {dimension_numbers = #tpu.dot_dimension_numbers<[1], [0], [0], [1], [0, 0, 1, 1], [], []>} : vector<16x144xbf16>, vector<144x128xbf16>, vector<16x128xf32> -> vector<16x128xf32>
    %c0_3 = arith.constant 0 : index
    %c0_4 = arith.constant 0 : index
    %3 = vector.load %arg3[%c0_3, %c0_4] : memref<16x1xf32, #tpu.memory_space<vmem>>, vector<16x1xf32>
    %c0_5 = arith.constant 0 : index
    %c0_6 = arith.constant 0 : index
    %4 = vector.load %arg4[%c0_5, %c0_6] : memref<16x1xf32, #tpu.memory_space<vmem>>, vector<16x1xf32>
    %cst_7 = arith.constant dense<0.000000e+00> : vector<16xf32>
    %5 = vector.multi_reduction <add>, %2, %cst_7 [1] : vector<16x128xf32> to vector<16xf32>
    %6 = vector.shape_cast %5 : vector<16xf32> to vector<16x1xf32>
    %cst_8 = arith.constant 7.812500e-03 : f32
    %7 = vector.broadcast %cst_8 : f32 to vector<16x1xf32>
    %8 = arith.mulf %6, %7 : vector<16x1xf32>
    %9 = vector.broadcast %8 : vector<16x1xf32> to vector<16x128xf32>
    %10 = arith.subf %2, %9 : vector<16x128xf32>
    %11 = arith.mulf %10, %10 : vector<16x128xf32>
    %cst_9 = arith.constant dense<0.000000e+00> : vector<16xf32>
    %12 = vector.multi_reduction <add>, %11, %cst_9 [1] : vector<16x128xf32> to vector<16xf32>
    %13 = vector.shape_cast %12 : vector<16xf32> to vector<16x1xf32>
    %cst_10 = arith.constant 0.000000e+00 : f32
    %14 = vector.broadcast %cst_10 : f32 to vector<16x1xf32>
    %15 = arith.mulf %14, %8 : vector<16x1xf32>
    %16 = arith.mulf %15, %8 : vector<16x1xf32>
    %17 = arith.subf %13, %16 : vector<16x1xf32>
    %cst_11 = arith.constant 7.812500e-03 : f32
    %18 = vector.broadcast %cst_11 : f32 to vector<16x1xf32>
    %19 = arith.mulf %17, %18 : vector<16x1xf32>
    %cst_12 = arith.constant 0.000000e+00 : f32
    %20 = vector.broadcast %cst_12 : f32 to vector<16x1xf32>
    %21 = arith.maximumf %19, %20 : vector<16x1xf32>
    %cst_13 = arith.constant 9.99999974E-6 : f32
    %22 = vector.broadcast %cst_13 : f32 to vector<16x1xf32>
    %23 = arith.addf %21, %22 : vector<16x1xf32>
    %24 = math.rsqrt %23 : vector<16x1xf32>
    %25 = arith.mulf %3, %24 : vector<16x1xf32>
    %26 = arith.mulf %8, %25 : vector<16x1xf32>
    %27 = arith.subf %4, %26 : vector<16x1xf32>
    %28 = vector.broadcast %25 : vector<16x1xf32> to vector<16x128xf32>
    %29 = arith.mulf %2, %28 : vector<16x128xf32>
    %30 = vector.broadcast %27 : vector<16x1xf32> to vector<16x128xf32>
    %31 = arith.addf %29, %30 : vector<16x128xf32>
    %cst_14 = arith.constant 0.000000e+00 : f32
    %32 = vector.broadcast %cst_14 : f32 to vector<16x128xf32>
    %33 = arith.maximumf %31, %32 : vector<16x128xf32>
    %34 = arith.truncf %33 : vector<16x128xf32> to vector<16x128xbf16>
    %c0_15 = arith.constant 0 : index
    %c0_16 = arith.constant 0 : index
    %35 = vector.load %arg5[%c0_15, %c0_16] : memref<16x128xbf16, #tpu.memory_space<vmem>>, vector<16x128xbf16>
    tpu.vector_store %arg5[%c0_15, %c0_16], %34 {strides = array<i32>} : memref<16x128xbf16, #tpu.memory_space<vmem>>, vector<16x128xbf16>,
    return
  }
  func.func @transform_0(%arg0: i32) -> (i32, i32) {
    %c0_i32 = arith.constant 0 : i32
    %c0_i32_0 = arith.constant 0 : i32
    %c0_i32_1 = arith.constant 0 : i32
    return %c0_i32, %c0_i32_0 : i32, i32
  }
  func.func @transform_1(%arg0: i32) -> (i32, i32) {
    %c0_i32 = arith.constant 0 : i32
    %c0_i32_0 = arith.constant 0 : i32
    %c0_i32_1 = arith.constant 0 : i32
    return %c0_i32, %c0_i32_0 : i32, i32
  }
  func.func @transform_2(%arg0: i32) -> (i32, i32) {
    %c0_i32 = arith.constant 0 : i32
    %c0_i32_0 = arith.constant 0 : i32
    %c0_i32_1 = arith.constant 0 : i32
    return %c0_i32, %c0_i32_0 : i32, i32
  }
  func.func @transform_3(%arg0: i32) -> (i32, i32) {
    %c0_i32 = arith.constant 0 : i32
    %c0_i32_0 = arith.constant 0 : i32
    %c0_i32_1 = arith.constant 0 : i32
    return %c0_i32, %c0_i32_0 : i32, i32
  }
  func.func @transform_4(%arg0: i32) -> (i32, i32) {
    %c0_i32 = arith.constant 0 : i32
    %c0_i32_0 = arith.constant 0 : i32
    %c0_i32_1 = arith.constant 0 : i32
    return %c0_i32, %c0_i32_0 : i32, i32
  }
}

module attributes {stable_mosaic.version = 11 : i64} {
  func.func @_conv_bn_relu_single_kernel(%arg0: i32, %arg1: memref<16x128xbf16, #tpu.memory_space<vmem>>, %arg2: memref<4x16xbf16, #tpu.memory_space<vmem>>, %arg3: memref<4x1xf32, #tpu.memory_space<vmem>>, %arg4: memref<4x1xf32, #tpu.memory_space<vmem>>, %arg5: memref<4x128xbf16, #tpu.memory_space<vmem>>) attributes {dimension_semantics = [#tpu.dimension_semantics<arbitrary>], iteration_bounds = array<i64: 1>, scalar_prefetch = 0 : i64, scratch_operands = 0 : i64, tpu.core_type = #tpu.core_type<tc>, window_params = [{pipeline_mode = #tpu.pipeline_mode<synchronous>, transform_indices = @transform_0, window_bounds = array<i64: 16, 128>}, {pipeline_mode = #tpu.pipeline_mode<synchronous>, transform_indices = @transform_1, window_bounds = array<i64: 4, 16>}, {pipeline_mode = #tpu.pipeline_mode<synchronous>, transform_indices = @transform_2, window_bounds = array<i64: 4, 1>}, {pipeline_mode = #tpu.pipeline_mode<synchronous>, transform_indices = @transform_3, window_bounds = array<i64: 4, 1>}, {pipeline_mode = #tpu.pipeline_mode<synchronous>, transform_indices = @transform_4, window_bounds = array<i64: 4, 128>}]} {
    %c0 = arith.constant 0 : index
    %c0_0 = arith.constant 0 : index
    %0 = vector.load %arg2[%c0, %c0_0] : memref<4x16xbf16, #tpu.memory_space<vmem>>, vector<4x16xbf16>
    %c0_1 = arith.constant 0 : index
    %c0_2 = arith.constant 0 : index
    %1 = vector.load %arg1[%c0_1, %c0_2] : memref<16x128xbf16, #tpu.memory_space<vmem>>, vector<16x128xbf16>
    %cst = arith.constant dense<0.000000e+00> : vector<4x128xf32>
    %2 = tpu.matmul %0, %1, %cst {dimension_numbers = #tpu.dot_dimension_numbers<[1], [0], [0], [1], [0, 0, 1, 1], [], []>} : vector<4x16xbf16>, vector<16x128xbf16>, vector<4x128xf32> -> vector<4x128xf32>
    %c0_3 = arith.constant 0 : index
    %c0_4 = arith.constant 0 : index
    %3 = vector.load %arg3[%c0_3, %c0_4] : memref<4x1xf32, #tpu.memory_space<vmem>>, vector<4x1xf32>
    %c0_5 = arith.constant 0 : index
    %c0_6 = arith.constant 0 : index
    %4 = vector.load %arg4[%c0_5, %c0_6] : memref<4x1xf32, #tpu.memory_space<vmem>>, vector<4x1xf32>
    %cst_7 = arith.constant dense<0.000000e+00> : vector<4xf32>
    %5 = vector.multi_reduction <add>, %2, %cst_7 [1] : vector<4x128xf32> to vector<4xf32>
    %6 = vector.shape_cast %5 : vector<4xf32> to vector<4x1xf32>
    %cst_8 = arith.constant 7.812500e-03 : f32
    %7 = vector.broadcast %cst_8 : f32 to vector<4x1xf32>
    %8 = arith.mulf %6, %7 : vector<4x1xf32>
    %9 = vector.broadcast %8 : vector<4x1xf32> to vector<4x128xf32>
    %10 = arith.subf %2, %9 : vector<4x128xf32>
    %11 = arith.mulf %10, %10 : vector<4x128xf32>
    %cst_9 = arith.constant dense<0.000000e+00> : vector<4xf32>
    %12 = vector.multi_reduction <add>, %11, %cst_9 [1] : vector<4x128xf32> to vector<4xf32>
    %13 = vector.shape_cast %12 : vector<4xf32> to vector<4x1xf32>
    %cst_10 = arith.constant 0.000000e+00 : f32
    %14 = vector.broadcast %cst_10 : f32 to vector<4x1xf32>
    %15 = arith.mulf %14, %8 : vector<4x1xf32>
    %16 = arith.mulf %15, %8 : vector<4x1xf32>
    %17 = arith.subf %13, %16 : vector<4x1xf32>
    %cst_11 = arith.constant 7.812500e-03 : f32
    %18 = vector.broadcast %cst_11 : f32 to vector<4x1xf32>
    %19 = arith.mulf %17, %18 : vector<4x1xf32>
    %cst_12 = arith.constant 0.000000e+00 : f32
    %20 = vector.broadcast %cst_12 : f32 to vector<4x1xf32>
    %21 = arith.maximumf %19, %20 : vector<4x1xf32>
    %cst_13 = arith.constant 9.99999974E-6 : f32
    %22 = vector.broadcast %cst_13 : f32 to vector<4x1xf32>
    %23 = arith.addf %21, %22 : vector<4x1xf32>
    %24 = math.rsqrt %23 : vector<4x1xf32>
    %25 = arith.mulf %3, %24 : vector<4x1xf32>
    %26 = arith.mulf %8, %25 : vector<4x1xf32>
    %27 = arith.subf %4, %26 : vector<4x1xf32>
    %28 = vector.broadcast %25 : vector<4x1xf32> to vector<4x128xf32>
    %29 = arith.mulf %2, %28 : vector<4x128xf32>
    %30 = vector.broadcast %27 : vector<4x1xf32> to vector<4x128xf32>
    %31 = arith.addf %29, %30 : vector<4x128xf32>
    %cst_14 = arith.constant 0.000000e+00 : f32
    %32 = vector.broadcast %cst_14 : f32 to vector<4x128xf32>
    %33 = arith.maximumf %31, %32 : vector<4x128xf32>
    %34 = arith.truncf %33 : vector<4x128xf32> to vector<4x128xbf16>
    %c0_15 = arith.constant 0 : index
    %c0_16 = arith.constant 0 : index
    %35 = vector.load %arg5[%c0_15, %c0_16] : memref<4x128xbf16, #tpu.memory_space<vmem>>, vector<4x128xbf16>
    tpu.vector_store %arg5[%c0_15, %c0_16], %34 {strides = array<i32>} : memref<4x128xbf16, #tpu.memory_space<vmem>>, vector<4x128xbf16>,
    return
  }
  func.func @transform_0(%arg0: i32) -> (i32, i32) {
    %c0_i32 = arith.constant 0 : i32
    %c0_i32_0 = arith.constant 0 : i32
    %c0_i32_1 = arith.constant 0 : i32
    return %c0_i32, %c0_i32_0 : i32, i32
  }
  func.func @transform_1(%arg0: i32) -> (i32, i32) {
    %c0_i32 = arith.constant 0 : i32
    %c0_i32_0 = arith.constant 0 : i32
    %c0_i32_1 = arith.constant 0 : i32
    return %c0_i32, %c0_i32_0 : i32, i32
  }
  func.func @transform_2(%arg0: i32) -> (i32, i32) {
    %c0_i32 = arith.constant 0 : i32
    %c0_i32_0 = arith.constant 0 : i32
    %c0_i32_1 = arith.constant 0 : i32
    return %c0_i32, %c0_i32_0 : i32, i32
  }
  func.func @transform_3(%arg0: i32) -> (i32, i32) {
    %c0_i32 = arith.constant 0 : i32
    %c0_i32_0 = arith.constant 0 : i32
    %c0_i32_1 = arith.constant 0 : i32
    return %c0_i32, %c0_i32_0 : i32, i32
  }
  func.func @transform_4(%arg0: i32) -> (i32, i32) {
    %c0_i32 = arith.constant 0 : i32
    %c0_i32_0 = arith.constant 0 : i32
    %c0_i32_1 = arith.constant 0 : i32
    return %c0_i32, %c0_i32_0 : i32, i32
  }
}

module attributes {stable_mosaic.version = 11 : i64} {
  func.func @_conv_bn_relu_single_kernel(%arg0: i32, %arg1: memref<144x32xbf16, #tpu.memory_space<vmem>>, %arg2: memref<16x144xbf16, #tpu.memory_space<vmem>>, %arg3: memref<16x1xf32, #tpu.memory_space<vmem>>, %arg4: memref<16x1xf32, #tpu.memory_space<vmem>>, %arg5: memref<16x32xbf16, #tpu.memory_space<vmem>>) attributes {dimension_semantics = [#tpu.dimension_semantics<arbitrary>], iteration_bounds = array<i64: 1>, scalar_prefetch = 0 : i64, scratch_operands = 0 : i64, tpu.core_type = #tpu.core_type<tc>, window_params = [{pipeline_mode = #tpu.pipeline_mode<synchronous>, transform_indices = @transform_0, window_bounds = array<i64: 144, 32>}, {pipeline_mode = #tpu.pipeline_mode<synchronous>, transform_indices = @transform_1, window_bounds = array<i64: 16, 144>}, {pipeline_mode = #tpu.pipeline_mode<synchronous>, transform_indices = @transform_2, window_bounds = array<i64: 16, 1>}, {pipeline_mode = #tpu.pipeline_mode<synchronous>, transform_indices = @transform_3, window_bounds = array<i64: 16, 1>}, {pipeline_mode = #tpu.pipeline_mode<synchronous>, transform_indices = @transform_4, window_bounds = array<i64: 16, 32>}]} {
    %c0 = arith.constant 0 : index
    %c0_0 = arith.constant 0 : index
    %0 = vector.load %arg2[%c0, %c0_0] : memref<16x144xbf16, #tpu.memory_space<vmem>>, vector<16x144xbf16>
    %c0_1 = arith.constant 0 : index
    %c0_2 = arith.constant 0 : index
    %1 = vector.load %arg1[%c0_1, %c0_2] : memref<144x32xbf16, #tpu.memory_space<vmem>>, vector<144x32xbf16>
    %cst = arith.constant dense<0.000000e+00> : vector<16x32xf32>
    %2 = tpu.matmul %0, %1, %cst {dimension_numbers = #tpu.dot_dimension_numbers<[1], [0], [0], [1], [0, 0, 1, 1], [], []>} : vector<16x144xbf16>, vector<144x32xbf16>, vector<16x32xf32> -> vector<16x32xf32>
    %c0_3 = arith.constant 0 : index
    %c0_4 = arith.constant 0 : index
    %3 = vector.load %arg3[%c0_3, %c0_4] : memref<16x1xf32, #tpu.memory_space<vmem>>, vector<16x1xf32>
    %c0_5 = arith.constant 0 : index
    %c0_6 = arith.constant 0 : index
    %4 = vector.load %arg4[%c0_5, %c0_6] : memref<16x1xf32, #tpu.memory_space<vmem>>, vector<16x1xf32>
    %cst_7 = arith.constant dense<0.000000e+00> : vector<16xf32>
    %5 = vector.multi_reduction <add>, %2, %cst_7 [1] : vector<16x32xf32> to vector<16xf32>
    %6 = vector.shape_cast %5 : vector<16xf32> to vector<16x1xf32>
    %cst_8 = arith.constant 3.125000e-02 : f32
    %7 = vector.broadcast %cst_8 : f32 to vector<16x1xf32>
    %8 = arith.mulf %6, %7 : vector<16x1xf32>
    %9 = vector.broadcast %8 : vector<16x1xf32> to vector<16x32xf32>
    %10 = arith.subf %2, %9 : vector<16x32xf32>
    %11 = arith.mulf %10, %10 : vector<16x32xf32>
    %cst_9 = arith.constant dense<0.000000e+00> : vector<16xf32>
    %12 = vector.multi_reduction <add>, %11, %cst_9 [1] : vector<16x32xf32> to vector<16xf32>
    %13 = vector.shape_cast %12 : vector<16xf32> to vector<16x1xf32>
    %cst_10 = arith.constant 0.000000e+00 : f32
    %14 = vector.broadcast %cst_10 : f32 to vector<16x1xf32>
    %15 = arith.mulf %14, %8 : vector<16x1xf32>
    %16 = arith.mulf %15, %8 : vector<16x1xf32>
    %17 = arith.subf %13, %16 : vector<16x1xf32>
    %cst_11 = arith.constant 3.125000e-02 : f32
    %18 = vector.broadcast %cst_11 : f32 to vector<16x1xf32>
    %19 = arith.mulf %17, %18 : vector<16x1xf32>
    %cst_12 = arith.constant 0.000000e+00 : f32
    %20 = vector.broadcast %cst_12 : f32 to vector<16x1xf32>
    %21 = arith.maximumf %19, %20 : vector<16x1xf32>
    %cst_13 = arith.constant 9.99999974E-6 : f32
    %22 = vector.broadcast %cst_13 : f32 to vector<16x1xf32>
    %23 = arith.addf %21, %22 : vector<16x1xf32>
    %24 = math.rsqrt %23 : vector<16x1xf32>
    %25 = arith.mulf %3, %24 : vector<16x1xf32>
    %26 = arith.mulf %8, %25 : vector<16x1xf32>
    %27 = arith.subf %4, %26 : vector<16x1xf32>
    %28 = vector.broadcast %25 : vector<16x1xf32> to vector<16x32xf32>
    %29 = arith.mulf %2, %28 : vector<16x32xf32>
    %30 = vector.broadcast %27 : vector<16x1xf32> to vector<16x32xf32>
    %31 = arith.addf %29, %30 : vector<16x32xf32>
    %cst_14 = arith.constant 0.000000e+00 : f32
    %32 = vector.broadcast %cst_14 : f32 to vector<16x32xf32>
    %33 = arith.maximumf %31, %32 : vector<16x32xf32>
    %34 = arith.truncf %33 : vector<16x32xf32> to vector<16x32xbf16>
    %c0_15 = arith.constant 0 : index
    %c0_16 = arith.constant 0 : index
    %35 = vector.load %arg5[%c0_15, %c0_16] : memref<16x32xbf16, #tpu.memory_space<vmem>>, vector<16x32xbf16>
    tpu.vector_store %arg5[%c0_15, %c0_16], %34 {strides = array<i32>} : memref<16x32xbf16, #tpu.memory_space<vmem>>, vector<16x32xbf16>,
    return
  }
  func.func @transform_0(%arg0: i32) -> (i32, i32) {
    %c0_i32 = arith.constant 0 : i32
    %c0_i32_0 = arith.constant 0 : i32
    %c0_i32_1 = arith.constant 0 : i32
    return %c0_i32, %c0_i32_0 : i32, i32
  }
  func.func @transform_1(%arg0: i32) -> (i32, i32) {
    %c0_i32 = arith.constant 0 : i32
    %c0_i32_0 = arith.constant 0 : i32
    %c0_i32_1 = arith.constant 0 : i32
    return %c0_i32, %c0_i32_0 : i32, i32
  }
  func.func @transform_2(%arg0: i32) -> (i32, i32) {
    %c0_i32 = arith.constant 0 : i32
    %c0_i32_0 = arith.constant 0 : i32
    %c0_i32_1 = arith.constant 0 : i32
    return %c0_i32, %c0_i32_0 : i32, i32
  }
  func.func @transform_3(%arg0: i32) -> (i32, i32) {
    %c0_i32 = arith.constant 0 : i32
    %c0_i32_0 = arith.constant 0 : i32
    %c0_i32_1 = arith.constant 0 : i32
    return %c0_i32, %c0_i32_0 : i32, i32
  }
  func.func @transform_4(%arg0: i32) -> (i32, i32) {
    %c0_i32 = arith.constant 0 : i32
    %c0_i32_0 = arith.constant 0 : i32
    %c0_i32_1 = arith.constant 0 : i32
    return %c0_i32, %c0_i32_0 : i32, i32
  }
}

module attributes {stable_mosaic.version = 11 : i64} {
  func.func @_conv_bn_relu_single_kernel(%arg0: i32, %arg1: memref<16x32xbf16, #tpu.memory_space<vmem>>, %arg2: memref<4x16xbf16, #tpu.memory_space<vmem>>, %arg3: memref<4x1xf32, #tpu.memory_space<vmem>>, %arg4: memref<4x1xf32, #tpu.memory_space<vmem>>, %arg5: memref<4x32xbf16, #tpu.memory_space<vmem>>) attributes {dimension_semantics = [#tpu.dimension_semantics<arbitrary>], iteration_bounds = array<i64: 1>, scalar_prefetch = 0 : i64, scratch_operands = 0 : i64, tpu.core_type = #tpu.core_type<tc>, window_params = [{pipeline_mode = #tpu.pipeline_mode<synchronous>, transform_indices = @transform_0, window_bounds = array<i64: 16, 32>}, {pipeline_mode = #tpu.pipeline_mode<synchronous>, transform_indices = @transform_1, window_bounds = array<i64: 4, 16>}, {pipeline_mode = #tpu.pipeline_mode<synchronous>, transform_indices = @transform_2, window_bounds = array<i64: 4, 1>}, {pipeline_mode = #tpu.pipeline_mode<synchronous>, transform_indices = @transform_3, window_bounds = array<i64: 4, 1>}, {pipeline_mode = #tpu.pipeline_mode<synchronous>, transform_indices = @transform_4, window_bounds = array<i64: 4, 32>}]} {
    %c0 = arith.constant 0 : index
    %c0_0 = arith.constant 0 : index
    %0 = vector.load %arg2[%c0, %c0_0] : memref<4x16xbf16, #tpu.memory_space<vmem>>, vector<4x16xbf16>
    %c0_1 = arith.constant 0 : index
    %c0_2 = arith.constant 0 : index
    %1 = vector.load %arg1[%c0_1, %c0_2] : memref<16x32xbf16, #tpu.memory_space<vmem>>, vector<16x32xbf16>
    %cst = arith.constant dense<0.000000e+00> : vector<4x32xf32>
    %2 = tpu.matmul %0, %1, %cst {dimension_numbers = #tpu.dot_dimension_numbers<[1], [0], [0], [1], [0, 0, 1, 1], [], []>} : vector<4x16xbf16>, vector<16x32xbf16>, vector<4x32xf32> -> vector<4x32xf32>
    %c0_3 = arith.constant 0 : index
    %c0_4 = arith.constant 0 : index
    %3 = vector.load %arg3[%c0_3, %c0_4] : memref<4x1xf32, #tpu.memory_space<vmem>>, vector<4x1xf32>
    %c0_5 = arith.constant 0 : index
    %c0_6 = arith.constant 0 : index
    %4 = vector.load %arg4[%c0_5, %c0_6] : memref<4x1xf32, #tpu.memory_space<vmem>>, vector<4x1xf32>
    %cst_7 = arith.constant dense<0.000000e+00> : vector<4xf32>
    %5 = vector.multi_reduction <add>, %2, %cst_7 [1] : vector<4x32xf32> to vector<4xf32>
    %6 = vector.shape_cast %5 : vector<4xf32> to vector<4x1xf32>
    %cst_8 = arith.constant 3.125000e-02 : f32
    %7 = vector.broadcast %cst_8 : f32 to vector<4x1xf32>
    %8 = arith.mulf %6, %7 : vector<4x1xf32>
    %9 = vector.broadcast %8 : vector<4x1xf32> to vector<4x32xf32>
    %10 = arith.subf %2, %9 : vector<4x32xf32>
    %11 = arith.mulf %10, %10 : vector<4x32xf32>
    %cst_9 = arith.constant dense<0.000000e+00> : vector<4xf32>
    %12 = vector.multi_reduction <add>, %11, %cst_9 [1] : vector<4x32xf32> to vector<4xf32>
    %13 = vector.shape_cast %12 : vector<4xf32> to vector<4x1xf32>
    %cst_10 = arith.constant 0.000000e+00 : f32
    %14 = vector.broadcast %cst_10 : f32 to vector<4x1xf32>
    %15 = arith.mulf %14, %8 : vector<4x1xf32>
    %16 = arith.mulf %15, %8 : vector<4x1xf32>
    %17 = arith.subf %13, %16 : vector<4x1xf32>
    %cst_11 = arith.constant 3.125000e-02 : f32
    %18 = vector.broadcast %cst_11 : f32 to vector<4x1xf32>
    %19 = arith.mulf %17, %18 : vector<4x1xf32>
    %cst_12 = arith.constant 0.000000e+00 : f32
    %20 = vector.broadcast %cst_12 : f32 to vector<4x1xf32>
    %21 = arith.maximumf %19, %20 : vector<4x1xf32>
    %cst_13 = arith.constant 9.99999974E-6 : f32
    %22 = vector.broadcast %cst_13 : f32 to vector<4x1xf32>
    %23 = arith.addf %21, %22 : vector<4x1xf32>
    %24 = math.rsqrt %23 : vector<4x1xf32>
    %25 = arith.mulf %3, %24 : vector<4x1xf32>
    %26 = arith.mulf %8, %25 : vector<4x1xf32>
    %27 = arith.subf %4, %26 : vector<4x1xf32>
    %28 = vector.broadcast %25 : vector<4x1xf32> to vector<4x32xf32>
    %29 = arith.mulf %2, %28 : vector<4x32xf32>
    %30 = vector.broadcast %27 : vector<4x1xf32> to vector<4x32xf32>
    %31 = arith.addf %29, %30 : vector<4x32xf32>
    %cst_14 = arith.constant 0.000000e+00 : f32
    %32 = vector.broadcast %cst_14 : f32 to vector<4x32xf32>
    %33 = arith.maximumf %31, %32 : vector<4x32xf32>
    %34 = arith.truncf %33 : vector<4x32xf32> to vector<4x32xbf16>
    %c0_15 = arith.constant 0 : index
    %c0_16 = arith.constant 0 : index
    %35 = vector.load %arg5[%c0_15, %c0_16] : memref<4x32xbf16, #tpu.memory_space<vmem>>, vector<4x32xbf16>
    tpu.vector_store %arg5[%c0_15, %c0_16], %34 {strides = array<i32>} : memref<4x32xbf16, #tpu.memory_space<vmem>>, vector<4x32xbf16>,
    return
  }
  func.func @transform_0(%arg0: i32) -> (i32, i32) {
    %c0_i32 = arith.constant 0 : i32
    %c0_i32_0 = arith.constant 0 : i32
    %c0_i32_1 = arith.constant 0 : i32
    return %c0_i32, %c0_i32_0 : i32, i32
  }
  func.func @transform_1(%arg0: i32) -> (i32, i32) {
    %c0_i32 = arith.constant 0 : i32
    %c0_i32_0 = arith.constant 0 : i32
    %c0_i32_1 = arith.constant 0 : i32
    return %c0_i32, %c0_i32_0 : i32, i32
  }
  func.func @transform_2(%arg0: i32) -> (i32, i32) {
    %c0_i32 = arith.constant 0 : i32
    %c0_i32_0 = arith.constant 0 : i32
    %c0_i32_1 = arith.constant 0 : i32
    return %c0_i32, %c0_i32_0 : i32, i32
  }
  func.func @transform_3(%arg0: i32) -> (i32, i32) {
    %c0_i32 = arith.constant 0 : i32
    %c0_i32_0 = arith.constant 0 : i32
    %c0_i32_1 = arith.constant 0 : i32
    return %c0_i32, %c0_i32_0 : i32, i32
  }
  func.func @transform_4(%arg0: i32) -> (i32, i32) {
    %c0_i32 = arith.constant 0 : i32
    %c0_i32_0 = arith.constant 0 : i32
    %c0_i32_1 = arith.constant 0 : i32
    return %c0_i32, %c0_i32_0 : i32, i32
  }
}

module attributes {stable_mosaic.version = 11 : i64} {
  func.func @_conv_bn_relu_single_kernel(%arg0: i32, %arg1: memref<144x8xbf16, #tpu.memory_space<vmem>>, %arg2: memref<16x144xbf16, #tpu.memory_space<vmem>>, %arg3: memref<16x1xf32, #tpu.memory_space<vmem>>, %arg4: memref<16x1xf32, #tpu.memory_space<vmem>>, %arg5: memref<16x8xbf16, #tpu.memory_space<vmem>>) attributes {dimension_semantics = [#tpu.dimension_semantics<arbitrary>], iteration_bounds = array<i64: 1>, scalar_prefetch = 0 : i64, scratch_operands = 0 : i64, tpu.core_type = #tpu.core_type<tc>, window_params = [{pipeline_mode = #tpu.pipeline_mode<synchronous>, transform_indices = @transform_0, window_bounds = array<i64: 144, 8>}, {pipeline_mode = #tpu.pipeline_mode<synchronous>, transform_indices = @transform_1, window_bounds = array<i64: 16, 144>}, {pipeline_mode = #tpu.pipeline_mode<synchronous>, transform_indices = @transform_2, window_bounds = array<i64: 16, 1>}, {pipeline_mode = #tpu.pipeline_mode<synchronous>, transform_indices = @transform_3, window_bounds = array<i64: 16, 1>}, {pipeline_mode = #tpu.pipeline_mode<synchronous>, transform_indices = @transform_4, window_bounds = array<i64: 16, 8>}]} {
    %c0 = arith.constant 0 : index
    %c0_0 = arith.constant 0 : index
    %0 = vector.load %arg2[%c0, %c0_0] : memref<16x144xbf16, #tpu.memory_space<vmem>>, vector<16x144xbf16>
    %c0_1 = arith.constant 0 : index
    %c0_2 = arith.constant 0 : index
    %1 = vector.load %arg1[%c0_1, %c0_2] : memref<144x8xbf16, #tpu.memory_space<vmem>>, vector<144x8xbf16>
    %cst = arith.constant dense<0.000000e+00> : vector<16x8xf32>
    %2 = tpu.matmul %0, %1, %cst {dimension_numbers = #tpu.dot_dimension_numbers<[1], [0], [0], [1], [0, 0, 1, 1], [], []>} : vector<16x144xbf16>, vector<144x8xbf16>, vector<16x8xf32> -> vector<16x8xf32>
    %c0_3 = arith.constant 0 : index
    %c0_4 = arith.constant 0 : index
    %3 = vector.load %arg3[%c0_3, %c0_4] : memref<16x1xf32, #tpu.memory_space<vmem>>, vector<16x1xf32>
    %c0_5 = arith.constant 0 : index
    %c0_6 = arith.constant 0 : index
    %4 = vector.load %arg4[%c0_5, %c0_6] : memref<16x1xf32, #tpu.memory_space<vmem>>, vector<16x1xf32>
    %cst_7 = arith.constant dense<0.000000e+00> : vector<16xf32>
    %5 = vector.multi_reduction <add>, %2, %cst_7 [1] : vector<16x8xf32> to vector<16xf32>
    %6 = vector.shape_cast %5 : vector<16xf32> to vector<16x1xf32>
    %cst_8 = arith.constant 1.250000e-01 : f32
    %7 = vector.broadcast %cst_8 : f32 to vector<16x1xf32>
    %8 = arith.mulf %6, %7 : vector<16x1xf32>
    %9 = vector.broadcast %8 : vector<16x1xf32> to vector<16x8xf32>
    %10 = arith.subf %2, %9 : vector<16x8xf32>
    %11 = arith.mulf %10, %10 : vector<16x8xf32>
    %cst_9 = arith.constant dense<0.000000e+00> : vector<16xf32>
    %12 = vector.multi_reduction <add>, %11, %cst_9 [1] : vector<16x8xf32> to vector<16xf32>
    %13 = vector.shape_cast %12 : vector<16xf32> to vector<16x1xf32>
    %cst_10 = arith.constant 0.000000e+00 : f32
    %14 = vector.broadcast %cst_10 : f32 to vector<16x1xf32>
    %15 = arith.mulf %14, %8 : vector<16x1xf32>
    %16 = arith.mulf %15, %8 : vector<16x1xf32>
    %17 = arith.subf %13, %16 : vector<16x1xf32>
    %cst_11 = arith.constant 1.250000e-01 : f32
    %18 = vector.broadcast %cst_11 : f32 to vector<16x1xf32>
    %19 = arith.mulf %17, %18 : vector<16x1xf32>
    %cst_12 = arith.constant 0.000000e+00 : f32
    %20 = vector.broadcast %cst_12 : f32 to vector<16x1xf32>
    %21 = arith.maximumf %19, %20 : vector<16x1xf32>
    %cst_13 = arith.constant 9.99999974E-6 : f32
    %22 = vector.broadcast %cst_13 : f32 to vector<16x1xf32>
    %23 = arith.addf %21, %22 : vector<16x1xf32>
    %24 = math.rsqrt %23 : vector<16x1xf32>
    %25 = arith.mulf %3, %24 : vector<16x1xf32>
    %26 = arith.mulf %8, %25 : vector<16x1xf32>
    %27 = arith.subf %4, %26 : vector<16x1xf32>
    %28 = vector.broadcast %25 : vector<16x1xf32> to vector<16x8xf32>
    %29 = arith.mulf %2, %28 : vector<16x8xf32>
    %30 = vector.broadcast %27 : vector<16x1xf32> to vector<16x8xf32>
    %31 = arith.addf %29, %30 : vector<16x8xf32>
    %cst_14 = arith.constant 0.000000e+00 : f32
    %32 = vector.broadcast %cst_14 : f32 to vector<16x8xf32>
    %33 = arith.maximumf %31, %32 : vector<16x8xf32>
    %34 = arith.truncf %33 : vector<16x8xf32> to vector<16x8xbf16>
    %c0_15 = arith.constant 0 : index
    %c0_16 = arith.constant 0 : index
    %35 = vector.load %arg5[%c0_15, %c0_16] : memref<16x8xbf16, #tpu.memory_space<vmem>>, vector<16x8xbf16>
    tpu.vector_store %arg5[%c0_15, %c0_16], %34 {strides = array<i32>} : memref<16x8xbf16, #tpu.memory_space<vmem>>, vector<16x8xbf16>,
    return
  }
  func.func @transform_0(%arg0: i32) -> (i32, i32) {
    %c0_i32 = arith.constant 0 : i32
    %c0_i32_0 = arith.constant 0 : i32
    %c0_i32_1 = arith.constant 0 : i32
    return %c0_i32, %c0_i32_0 : i32, i32
  }
  func.func @transform_1(%arg0: i32) -> (i32, i32) {
    %c0_i32 = arith.constant 0 : i32
    %c0_i32_0 = arith.constant 0 : i32
    %c0_i32_1 = arith.constant 0 : i32
    return %c0_i32, %c0_i32_0 : i32, i32
  }
  func.func @transform_2(%arg0: i32) -> (i32, i32) {
    %c0_i32 = arith.constant 0 : i32
    %c0_i32_0 = arith.constant 0 : i32
    %c0_i32_1 = arith.constant 0 : i32
    return %c0_i32, %c0_i32_0 : i32, i32
  }
  func.func @transform_3(%arg0: i32) -> (i32, i32) {
    %c0_i32 = arith.constant 0 : i32
    %c0_i32_0 = arith.constant 0 : i32
    %c0_i32_1 = arith.constant 0 : i32
    return %c0_i32, %c0_i32_0 : i32, i32
  }
  func.func @transform_4(%arg0: i32) -> (i32, i32) {
    %c0_i32 = arith.constant 0 : i32
    %c0_i32_0 = arith.constant 0 : i32
    %c0_i32_1 = arith.constant 0 : i32
    return %c0_i32, %c0_i32_0 : i32, i32
  }
}

module attributes {stable_mosaic.version = 11 : i64} {
  func.func @_conv_bn_relu_single_kernel(%arg0: i32, %arg1: memref<16x8xbf16, #tpu.memory_space<vmem>>, %arg2: memref<16x16xbf16, #tpu.memory_space<vmem>>, %arg3: memref<16x1xf32, #tpu.memory_space<vmem>>, %arg4: memref<16x1xf32, #tpu.memory_space<vmem>>, %arg5: memref<16x8xbf16, #tpu.memory_space<vmem>>) attributes {dimension_semantics = [#tpu.dimension_semantics<arbitrary>], iteration_bounds = array<i64: 1>, scalar_prefetch = 0 : i64, scratch_operands = 0 : i64, tpu.core_type = #tpu.core_type<tc>, window_params = [{pipeline_mode = #tpu.pipeline_mode<synchronous>, transform_indices = @transform_0, window_bounds = array<i64: 16, 8>}, {pipeline_mode = #tpu.pipeline_mode<synchronous>, transform_indices = @transform_1, window_bounds = array<i64: 16, 16>}, {pipeline_mode = #tpu.pipeline_mode<synchronous>, transform_indices = @transform_2, window_bounds = array<i64: 16, 1>}, {pipeline_mode = #tpu.pipeline_mode<synchronous>, transform_indices = @transform_3, window_bounds = array<i64: 16, 1>}, {pipeline_mode = #tpu.pipeline_mode<synchronous>, transform_indices = @transform_4, window_bounds = array<i64: 16, 8>}]} {
    %c0 = arith.constant 0 : index
    %c0_0 = arith.constant 0 : index
    %0 = vector.load %arg2[%c0, %c0_0] : memref<16x16xbf16, #tpu.memory_space<vmem>>, vector<16x16xbf16>
    %c0_1 = arith.constant 0 : index
    %c0_2 = arith.constant 0 : index
    %1 = vector.load %arg1[%c0_1, %c0_2] : memref<16x8xbf16, #tpu.memory_space<vmem>>, vector<16x8xbf16>
    %cst = arith.constant dense<0.000000e+00> : vector<16x8xf32>
    %2 = tpu.matmul %0, %1, %cst {dimension_numbers = #tpu.dot_dimension_numbers<[1], [0], [0], [1], [0, 0, 1, 1], [], []>} : vector<16x16xbf16>, vector<16x8xbf16>, vector<16x8xf32> -> vector<16x8xf32>
    %c0_3 = arith.constant 0 : index
    %c0_4 = arith.constant 0 : index
    %3 = vector.load %arg3[%c0_3, %c0_4] : memref<16x1xf32, #tpu.memory_space<vmem>>, vector<16x1xf32>
    %c0_5 = arith.constant 0 : index
    %c0_6 = arith.constant 0 : index
    %4 = vector.load %arg4[%c0_5, %c0_6] : memref<16x1xf32, #tpu.memory_space<vmem>>, vector<16x1xf32>
    %cst_7 = arith.constant dense<0.000000e+00> : vector<16xf32>
    %5 = vector.multi_reduction <add>, %2, %cst_7 [1] : vector<16x8xf32> to vector<16xf32>
    %6 = vector.shape_cast %5 : vector<16xf32> to vector<16x1xf32>
    %cst_8 = arith.constant 1.250000e-01 : f32
    %7 = vector.broadcast %cst_8 : f32 to vector<16x1xf32>
    %8 = arith.mulf %6, %7 : vector<16x1xf32>
    %9 = vector.broadcast %8 : vector<16x1xf32> to vector<16x8xf32>
    %10 = arith.subf %2, %9 : vector<16x8xf32>
    %11 = arith.mulf %10, %10 : vector<16x8xf32>
    %cst_9 = arith.constant dense<0.000000e+00> : vector<16xf32>
    %12 = vector.multi_reduction <add>, %11, %cst_9 [1] : vector<16x8xf32> to vector<16xf32>
    %13 = vector.shape_cast %12 : vector<16xf32> to vector<16x1xf32>
    %cst_10 = arith.constant 0.000000e+00 : f32
    %14 = vector.broadcast %cst_10 : f32 to vector<16x1xf32>
    %15 = arith.mulf %14, %8 : vector<16x1xf32>
    %16 = arith.mulf %15, %8 : vector<16x1xf32>
    %17 = arith.subf %13, %16 : vector<16x1xf32>
    %cst_11 = arith.constant 1.250000e-01 : f32
    %18 = vector.broadcast %cst_11 : f32 to vector<16x1xf32>
    %19 = arith.mulf %17, %18 : vector<16x1xf32>
    %cst_12 = arith.constant 0.000000e+00 : f32
    %20 = vector.broadcast %cst_12 : f32 to vector<16x1xf32>
    %21 = arith.maximumf %19, %20 : vector<16x1xf32>
    %cst_13 = arith.constant 9.99999974E-6 : f32
    %22 = vector.broadcast %cst_13 : f32 to vector<16x1xf32>
    %23 = arith.addf %21, %22 : vector<16x1xf32>
    %24 = math.rsqrt %23 : vector<16x1xf32>
    %25 = arith.mulf %3, %24 : vector<16x1xf32>
    %26 = arith.mulf %8, %25 : vector<16x1xf32>
    %27 = arith.subf %4, %26 : vector<16x1xf32>
    %28 = vector.broadcast %25 : vector<16x1xf32> to vector<16x8xf32>
    %29 = arith.mulf %2, %28 : vector<16x8xf32>
    %30 = vector.broadcast %27 : vector<16x1xf32> to vector<16x8xf32>
    %31 = arith.addf %29, %30 : vector<16x8xf32>
    %cst_14 = arith.constant 0.000000e+00 : f32
    %32 = vector.broadcast %cst_14 : f32 to vector<16x8xf32>
    %33 = arith.maximumf %31, %32 : vector<16x8xf32>
    %34 = arith.truncf %33 : vector<16x8xf32> to vector<16x8xbf16>
    %c0_15 = arith.constant 0 : index
    %c0_16 = arith.constant 0 : index
    %35 = vector.load %arg5[%c0_15, %c0_16] : memref<16x8xbf16, #tpu.memory_space<vmem>>, vector<16x8xbf16>
    tpu.vector_store %arg5[%c0_15, %c0_16], %34 {strides = array<i32>} : memref<16x8xbf16, #tpu.memory_space<vmem>>, vector<16x8xbf16>,
    return
  }
  func.func @transform_0(%arg0: i32) -> (i32, i32) {
    %c0_i32 = arith.constant 0 : i32
    %c0_i32_0 = arith.constant 0 : i32
    %c0_i32_1 = arith.constant 0 : i32
    return %c0_i32, %c0_i32_0 : i32, i32
  }
  func.func @transform_1(%arg0: i32) -> (i32, i32) {
    %c0_i32 = arith.constant 0 : i32
    %c0_i32_0 = arith.constant 0 : i32
    %c0_i32_1 = arith.constant 0 : i32
    return %c0_i32, %c0_i32_0 : i32, i32
  }
  func.func @transform_2(%arg0: i32) -> (i32, i32) {
    %c0_i32 = arith.constant 0 : i32
    %c0_i32_0 = arith.constant 0 : i32
    %c0_i32_1 = arith.constant 0 : i32
    return %c0_i32, %c0_i32_0 : i32, i32
  }
  func.func @transform_3(%arg0: i32) -> (i32, i32) {
    %c0_i32 = arith.constant 0 : i32
    %c0_i32_0 = arith.constant 0 : i32
    %c0_i32_1 = arith.constant 0 : i32
    return %c0_i32, %c0_i32_0 : i32, i32
  }
  func.func @transform_4(%arg0: i32) -> (i32, i32) {
    %c0_i32 = arith.constant 0 : i32
    %c0_i32_0 = arith.constant 0 : i32
    %c0_i32_1 = arith.constant 0 : i32
    return %c0_i32, %c0_i32_0 : i32, i32
  }
}

module attributes {stable_mosaic.version = 11 : i64} {
  func.func @_conv_bn_relu_single_kernel(%arg0: i32, %arg1: memref<144x32xbf16, #tpu.memory_space<vmem>>, %arg2: memref<36x32xbf16, #tpu.memory_space<vmem>>, %arg3: memref<16x144xbf16, #tpu.memory_space<vmem>>, %arg4: memref<16x36xbf16, #tpu.memory_space<vmem>>, %arg5: memref<16x1xf32, #tpu.memory_space<vmem>>, %arg6: memref<16x1xf32, #tpu.memory_space<vmem>>, %arg7: memref<16x32xbf16, #tpu.memory_space<vmem>>) attributes {dimension_semantics = [#tpu.dimension_semantics<arbitrary>], iteration_bounds = array<i64: 1>, scalar_prefetch = 0 : i64, scratch_operands = 0 : i64, tpu.core_type = #tpu.core_type<tc>, window_params = [{pipeline_mode = #tpu.pipeline_mode<synchronous>, transform_indices = @transform_0, window_bounds = array<i64: 144, 32>}, {pipeline_mode = #tpu.pipeline_mode<synchronous>, transform_indices = @transform_1, window_bounds = array<i64: 36, 32>}, {pipeline_mode = #tpu.pipeline_mode<synchronous>, transform_indices = @transform_2, window_bounds = array<i64: 16, 144>}, {pipeline_mode = #tpu.pipeline_mode<synchronous>, transform_indices = @transform_3, window_bounds = array<i64: 16, 36>}, {pipeline_mode = #tpu.pipeline_mode<synchronous>, transform_indices = @transform_4, window_bounds = array<i64: 16, 1>}, {pipeline_mode = #tpu.pipeline_mode<synchronous>, transform_indices = @transform_5, window_bounds = array<i64: 16, 1>}, {pipeline_mode = #tpu.pipeline_mode<synchronous>, transform_indices = @transform_6, window_bounds = array<i64: 16, 32>}]} {
    %c0 = arith.constant 0 : index
    %c0_0 = arith.constant 0 : index
    %0 = vector.load %arg3[%c0, %c0_0] : memref<16x144xbf16, #tpu.memory_space<vmem>>, vector<16x144xbf16>
    %c0_1 = arith.constant 0 : index
    %c0_2 = arith.constant 0 : index
    %1 = vector.load %arg1[%c0_1, %c0_2] : memref<144x32xbf16, #tpu.memory_space<vmem>>, vector<144x32xbf16>
    %cst = arith.constant dense<0.000000e+00> : vector<16x32xf32>
    %2 = tpu.matmul %0, %1, %cst {dimension_numbers = #tpu.dot_dimension_numbers<[1], [0], [0], [1], [0, 0, 1, 1], [], []>} : vector<16x144xbf16>, vector<144x32xbf16>, vector<16x32xf32> -> vector<16x32xf32>
    %c0_3 = arith.constant 0 : index
    %c0_4 = arith.constant 0 : index
    %3 = vector.load %arg4[%c0_3, %c0_4] : memref<16x36xbf16, #tpu.memory_space<vmem>>, vector<16x36xbf16>
    %c0_5 = arith.constant 0 : index
    %c0_6 = arith.constant 0 : index
    %4 = vector.load %arg2[%c0_5, %c0_6] : memref<36x32xbf16, #tpu.memory_space<vmem>>, vector<36x32xbf16>
    %cst_7 = arith.constant dense<0.000000e+00> : vector<16x32xf32>
    %5 = tpu.matmul %3, %4, %cst_7 {dimension_numbers = #tpu.dot_dimension_numbers<[1], [0], [0], [1], [0, 0, 1, 1], [], []>} : vector<16x36xbf16>, vector<36x32xbf16>, vector<16x32xf32> -> vector<16x32xf32>
    %6 = arith.addf %2, %5 : vector<16x32xf32>
    %c0_8 = arith.constant 0 : index
    %c0_9 = arith.constant 0 : index
    %7 = vector.load %arg5[%c0_8, %c0_9] : memref<16x1xf32, #tpu.memory_space<vmem>>, vector<16x1xf32>
    %c0_10 = arith.constant 0 : index
    %c0_11 = arith.constant 0 : index
    %8 = vector.load %arg6[%c0_10, %c0_11] : memref<16x1xf32, #tpu.memory_space<vmem>>, vector<16x1xf32>
    %cst_12 = arith.constant dense<0.000000e+00> : vector<16xf32>
    %9 = vector.multi_reduction <add>, %6, %cst_12 [1] : vector<16x32xf32> to vector<16xf32>
    %10 = vector.shape_cast %9 : vector<16xf32> to vector<16x1xf32>
    %cst_13 = arith.constant 3.125000e-02 : f32
    %11 = vector.broadcast %cst_13 : f32 to vector<16x1xf32>
    %12 = arith.mulf %10, %11 : vector<16x1xf32>
    %13 = vector.broadcast %12 : vector<16x1xf32> to vector<16x32xf32>
    %14 = arith.subf %6, %13 : vector<16x32xf32>
    %15 = arith.mulf %14, %14 : vector<16x32xf32>
    %cst_14 = arith.constant dense<0.000000e+00> : vector<16xf32>
    %16 = vector.multi_reduction <add>, %15, %cst_14 [1] : vector<16x32xf32> to vector<16xf32>
    %17 = vector.shape_cast %16 : vector<16xf32> to vector<16x1xf32>
    %cst_15 = arith.constant 0.000000e+00 : f32
    %18 = vector.broadcast %cst_15 : f32 to vector<16x1xf32>
    %19 = arith.mulf %18, %12 : vector<16x1xf32>
    %20 = arith.mulf %19, %12 : vector<16x1xf32>
    %21 = arith.subf %17, %20 : vector<16x1xf32>
    %cst_16 = arith.constant 3.125000e-02 : f32
    %22 = vector.broadcast %cst_16 : f32 to vector<16x1xf32>
    %23 = arith.mulf %21, %22 : vector<16x1xf32>
    %cst_17 = arith.constant 0.000000e+00 : f32
    %24 = vector.broadcast %cst_17 : f32 to vector<16x1xf32>
    %25 = arith.maximumf %23, %24 : vector<16x1xf32>
    %cst_18 = arith.constant 9.99999974E-6 : f32
    %26 = vector.broadcast %cst_18 : f32 to vector<16x1xf32>
    %27 = arith.addf %25, %26 : vector<16x1xf32>
    %28 = math.rsqrt %27 : vector<16x1xf32>
    %29 = arith.mulf %7, %28 : vector<16x1xf32>
    %30 = arith.mulf %12, %29 : vector<16x1xf32>
    %31 = arith.subf %8, %30 : vector<16x1xf32>
    %32 = vector.broadcast %29 : vector<16x1xf32> to vector<16x32xf32>
    %33 = arith.mulf %6, %32 : vector<16x32xf32>
    %34 = vector.broadcast %31 : vector<16x1xf32> to vector<16x32xf32>
    %35 = arith.addf %33, %34 : vector<16x32xf32>
    %cst_19 = arith.constant 0.000000e+00 : f32
    %36 = vector.broadcast %cst_19 : f32 to vector<16x32xf32>
    %37 = arith.maximumf %35, %36 : vector<16x32xf32>
    %38 = arith.truncf %37 : vector<16x32xf32> to vector<16x32xbf16>
    %c0_20 = arith.constant 0 : index
    %c0_21 = arith.constant 0 : index
    %39 = vector.load %arg7[%c0_20, %c0_21] : memref<16x32xbf16, #tpu.memory_space<vmem>>, vector<16x32xbf16>
    tpu.vector_store %arg7[%c0_20, %c0_21], %38 {strides = array<i32>} : memref<16x32xbf16, #tpu.memory_space<vmem>>, vector<16x32xbf16>,
    return
  }
  func.func @transform_0(%arg0: i32) -> (i32, i32) {
    %c0_i32 = arith.constant 0 : i32
    %c0_i32_0 = arith.constant 0 : i32
    %c0_i32_1 = arith.constant 0 : i32
    return %c0_i32, %c0_i32_0 : i32, i32
  }
  func.func @transform_1(%arg0: i32) -> (i32, i32) {
    %c0_i32 = arith.constant 0 : i32
    %c0_i32_0 = arith.constant 0 : i32
    %c0_i32_1 = arith.constant 0 : i32
    return %c0_i32, %c0_i32_0 : i32, i32
  }
  func.func @transform_2(%arg0: i32) -> (i32, i32) {
    %c0_i32 = arith.constant 0 : i32
    %c0_i32_0 = arith.constant 0 : i32
    %c0_i32_1 = arith.constant 0 : i32
    return %c0_i32, %c0_i32_0 : i32, i32
  }
  func.func @transform_3(%arg0: i32) -> (i32, i32) {
    %c0_i32 = arith.constant 0 : i32
    %c0_i32_0 = arith.constant 0 : i32
    %c0_i32_1 = arith.constant 0 : i32
    return %c0_i32, %c0_i32_0 : i32, i32
  }
  func.func @transform_4(%arg0: i32) -> (i32, i32) {
    %c0_i32 = arith.constant 0 : i32
    %c0_i32_0 = arith.constant 0 : i32
    %c0_i32_1 = arith.constant 0 : i32
    return %c0_i32, %c0_i32_0 : i32, i32
  }
  func.func @transform_5(%arg0: i32) -> (i32, i32) {
    %c0_i32 = arith.constant 0 : i32
    %c0_i32_0 = arith.constant 0 : i32
    %c0_i32_1 = arith.constant 0 : i32
    return %c0_i32, %c0_i32_0 : i32, i32
  }
  func.func @transform_6(%arg0: i32) -> (i32, i32) {
    %c0_i32 = arith.constant 0 : i32
    %c0_i32_0 = arith.constant 0 : i32
    %c0_i32_1 = arith.constant 0 : i32
    return %c0_i32, %c0_i32_0 : i32, i32
  }
}

module attributes {stable_mosaic.version = 11 : i64} {
  func.func @_conv_bn_relu_single_kernel(%arg0: i32, %arg1: memref<16x32xbf16, #tpu.memory_space<vmem>>, %arg2: memref<16x16xbf16, #tpu.memory_space<vmem>>, %arg3: memref<16x1xf32, #tpu.memory_space<vmem>>, %arg4: memref<16x1xf32, #tpu.memory_space<vmem>>, %arg5: memref<16x32xbf16, #tpu.memory_space<vmem>>) attributes {dimension_semantics = [#tpu.dimension_semantics<arbitrary>], iteration_bounds = array<i64: 1>, scalar_prefetch = 0 : i64, scratch_operands = 0 : i64, tpu.core_type = #tpu.core_type<tc>, window_params = [{pipeline_mode = #tpu.pipeline_mode<synchronous>, transform_indices = @transform_0, window_bounds = array<i64: 16, 32>}, {pipeline_mode = #tpu.pipeline_mode<synchronous>, transform_indices = @transform_1, window_bounds = array<i64: 16, 16>}, {pipeline_mode = #tpu.pipeline_mode<synchronous>, transform_indices = @transform_2, window_bounds = array<i64: 16, 1>}, {pipeline_mode = #tpu.pipeline_mode<synchronous>, transform_indices = @transform_3, window_bounds = array<i64: 16, 1>}, {pipeline_mode = #tpu.pipeline_mode<synchronous>, transform_indices = @transform_4, window_bounds = array<i64: 16, 32>}]} {
    %c0 = arith.constant 0 : index
    %c0_0 = arith.constant 0 : index
    %0 = vector.load %arg2[%c0, %c0_0] : memref<16x16xbf16, #tpu.memory_space<vmem>>, vector<16x16xbf16>
    %c0_1 = arith.constant 0 : index
    %c0_2 = arith.constant 0 : index
    %1 = vector.load %arg1[%c0_1, %c0_2] : memref<16x32xbf16, #tpu.memory_space<vmem>>, vector<16x32xbf16>
    %cst = arith.constant dense<0.000000e+00> : vector<16x32xf32>
    %2 = tpu.matmul %0, %1, %cst {dimension_numbers = #tpu.dot_dimension_numbers<[1], [0], [0], [1], [0, 0, 1, 1], [], []>} : vector<16x16xbf16>, vector<16x32xbf16>, vector<16x32xf32> -> vector<16x32xf32>
    %c0_3 = arith.constant 0 : index
    %c0_4 = arith.constant 0 : index
    %3 = vector.load %arg3[%c0_3, %c0_4] : memref<16x1xf32, #tpu.memory_space<vmem>>, vector<16x1xf32>
    %c0_5 = arith.constant 0 : index
    %c0_6 = arith.constant 0 : index
    %4 = vector.load %arg4[%c0_5, %c0_6] : memref<16x1xf32, #tpu.memory_space<vmem>>, vector<16x1xf32>
    %cst_7 = arith.constant dense<0.000000e+00> : vector<16xf32>
    %5 = vector.multi_reduction <add>, %2, %cst_7 [1] : vector<16x32xf32> to vector<16xf32>
    %6 = vector.shape_cast %5 : vector<16xf32> to vector<16x1xf32>
    %cst_8 = arith.constant 3.125000e-02 : f32
    %7 = vector.broadcast %cst_8 : f32 to vector<16x1xf32>
    %8 = arith.mulf %6, %7 : vector<16x1xf32>
    %9 = vector.broadcast %8 : vector<16x1xf32> to vector<16x32xf32>
    %10 = arith.subf %2, %9 : vector<16x32xf32>
    %11 = arith.mulf %10, %10 : vector<16x32xf32>
    %cst_9 = arith.constant dense<0.000000e+00> : vector<16xf32>
    %12 = vector.multi_reduction <add>, %11, %cst_9 [1] : vector<16x32xf32> to vector<16xf32>
    %13 = vector.shape_cast %12 : vector<16xf32> to vector<16x1xf32>
    %cst_10 = arith.constant 0.000000e+00 : f32
    %14 = vector.broadcast %cst_10 : f32 to vector<16x1xf32>
    %15 = arith.mulf %14, %8 : vector<16x1xf32>
    %16 = arith.mulf %15, %8 : vector<16x1xf32>
    %17 = arith.subf %13, %16 : vector<16x1xf32>
    %cst_11 = arith.constant 3.125000e-02 : f32
    %18 = vector.broadcast %cst_11 : f32 to vector<16x1xf32>
    %19 = arith.mulf %17, %18 : vector<16x1xf32>
    %cst_12 = arith.constant 0.000000e+00 : f32
    %20 = vector.broadcast %cst_12 : f32 to vector<16x1xf32>
    %21 = arith.maximumf %19, %20 : vector<16x1xf32>
    %cst_13 = arith.constant 9.99999974E-6 : f32
    %22 = vector.broadcast %cst_13 : f32 to vector<16x1xf32>
    %23 = arith.addf %21, %22 : vector<16x1xf32>
    %24 = math.rsqrt %23 : vector<16x1xf32>
    %25 = arith.mulf %3, %24 : vector<16x1xf32>
    %26 = arith.mulf %8, %25 : vector<16x1xf32>
    %27 = arith.subf %4, %26 : vector<16x1xf32>
    %28 = vector.broadcast %25 : vector<16x1xf32> to vector<16x32xf32>
    %29 = arith.mulf %2, %28 : vector<16x32xf32>
    %30 = vector.broadcast %27 : vector<16x1xf32> to vector<16x32xf32>
    %31 = arith.addf %29, %30 : vector<16x32xf32>
    %cst_14 = arith.constant 0.000000e+00 : f32
    %32 = vector.broadcast %cst_14 : f32 to vector<16x32xf32>
    %33 = arith.maximumf %31, %32 : vector<16x32xf32>
    %34 = arith.truncf %33 : vector<16x32xf32> to vector<16x32xbf16>
    %c0_15 = arith.constant 0 : index
    %c0_16 = arith.constant 0 : index
    %35 = vector.load %arg5[%c0_15, %c0_16] : memref<16x32xbf16, #tpu.memory_space<vmem>>, vector<16x32xbf16>
    tpu.vector_store %arg5[%c0_15, %c0_16], %34 {strides = array<i32>} : memref<16x32xbf16, #tpu.memory_space<vmem>>, vector<16x32xbf16>,
    return
  }
  func.func @transform_0(%arg0: i32) -> (i32, i32) {
    %c0_i32 = arith.constant 0 : i32
    %c0_i32_0 = arith.constant 0 : i32
    %c0_i32_1 = arith.constant 0 : i32
    return %c0_i32, %c0_i32_0 : i32, i32
  }
  func.func @transform_1(%arg0: i32) -> (i32, i32) {
    %c0_i32 = arith.constant 0 : i32
    %c0_i32_0 = arith.constant 0 : i32
    %c0_i32_1 = arith.constant 0 : i32
    return %c0_i32, %c0_i32_0 : i32, i32
  }
  func.func @transform_2(%arg0: i32) -> (i32, i32) {
    %c0_i32 = arith.constant 0 : i32
    %c0_i32_0 = arith.constant 0 : i32
    %c0_i32_1 = arith.constant 0 : i32
    return %c0_i32, %c0_i32_0 : i32, i32
  }
  func.func @transform_3(%arg0: i32) -> (i32, i32) {
    %c0_i32 = arith.constant 0 : i32
    %c0_i32_0 = arith.constant 0 : i32
    %c0_i32_1 = arith.constant 0 : i32
    return %c0_i32, %c0_i32_0 : i32, i32
  }
  func.func @transform_4(%arg0: i32) -> (i32, i32) {
    %c0_i32 = arith.constant 0 : i32
    %c0_i32_0 = arith.constant 0 : i32
    %c0_i32_1 = arith.constant 0 : i32
    return %c0_i32, %c0_i32_0 : i32, i32
  }
}

module attributes {stable_mosaic.version = 11 : i64} {
  func.func @_conv_bn_relu_single_kernel(%arg0: i32, %arg1: memref<144x128xbf16, #tpu.memory_space<vmem>>, %arg2: memref<36x128xbf16, #tpu.memory_space<vmem>>, %arg3: memref<16x144xbf16, #tpu.memory_space<vmem>>, %arg4: memref<16x36xbf16, #tpu.memory_space<vmem>>, %arg5: memref<16x1xf32, #tpu.memory_space<vmem>>, %arg6: memref<16x1xf32, #tpu.memory_space<vmem>>, %arg7: memref<16x128xbf16, #tpu.memory_space<vmem>>) attributes {dimension_semantics = [#tpu.dimension_semantics<arbitrary>], iteration_bounds = array<i64: 1>, scalar_prefetch = 0 : i64, scratch_operands = 0 : i64, tpu.core_type = #tpu.core_type<tc>, window_params = [{pipeline_mode = #tpu.pipeline_mode<synchronous>, transform_indices = @transform_0, window_bounds = array<i64: 144, 128>}, {pipeline_mode = #tpu.pipeline_mode<synchronous>, transform_indices = @transform_1, window_bounds = array<i64: 36, 128>}, {pipeline_mode = #tpu.pipeline_mode<synchronous>, transform_indices = @transform_2, window_bounds = array<i64: 16, 144>}, {pipeline_mode = #tpu.pipeline_mode<synchronous>, transform_indices = @transform_3, window_bounds = array<i64: 16, 36>}, {pipeline_mode = #tpu.pipeline_mode<synchronous>, transform_indices = @transform_4, window_bounds = array<i64: 16, 1>}, {pipeline_mode = #tpu.pipeline_mode<synchronous>, transform_indices = @transform_5, window_bounds = array<i64: 16, 1>}, {pipeline_mode = #tpu.pipeline_mode<synchronous>, transform_indices = @transform_6, window_bounds = array<i64: 16, 128>}]} {
    %c0 = arith.constant 0 : index
    %c0_0 = arith.constant 0 : index
    %0 = vector.load %arg3[%c0, %c0_0] : memref<16x144xbf16, #tpu.memory_space<vmem>>, vector<16x144xbf16>
    %c0_1 = arith.constant 0 : index
    %c0_2 = arith.constant 0 : index
    %1 = vector.load %arg1[%c0_1, %c0_2] : memref<144x128xbf16, #tpu.memory_space<vmem>>, vector<144x128xbf16>
    %cst = arith.constant dense<0.000000e+00> : vector<16x128xf32>
    %2 = tpu.matmul %0, %1, %cst {dimension_numbers = #tpu.dot_dimension_numbers<[1], [0], [0], [1], [0, 0, 1, 1], [], []>} : vector<16x144xbf16>, vector<144x128xbf16>, vector<16x128xf32> -> vector<16x128xf32>
    %c0_3 = arith.constant 0 : index
    %c0_4 = arith.constant 0 : index
    %3 = vector.load %arg4[%c0_3, %c0_4] : memref<16x36xbf16, #tpu.memory_space<vmem>>, vector<16x36xbf16>
    %c0_5 = arith.constant 0 : index
    %c0_6 = arith.constant 0 : index
    %4 = vector.load %arg2[%c0_5, %c0_6] : memref<36x128xbf16, #tpu.memory_space<vmem>>, vector<36x128xbf16>
    %cst_7 = arith.constant dense<0.000000e+00> : vector<16x128xf32>
    %5 = tpu.matmul %3, %4, %cst_7 {dimension_numbers = #tpu.dot_dimension_numbers<[1], [0], [0], [1], [0, 0, 1, 1], [], []>} : vector<16x36xbf16>, vector<36x128xbf16>, vector<16x128xf32> -> vector<16x128xf32>
    %6 = arith.addf %2, %5 : vector<16x128xf32>
    %c0_8 = arith.constant 0 : index
    %c0_9 = arith.constant 0 : index
    %7 = vector.load %arg5[%c0_8, %c0_9] : memref<16x1xf32, #tpu.memory_space<vmem>>, vector<16x1xf32>
    %c0_10 = arith.constant 0 : index
    %c0_11 = arith.constant 0 : index
    %8 = vector.load %arg6[%c0_10, %c0_11] : memref<16x1xf32, #tpu.memory_space<vmem>>, vector<16x1xf32>
    %cst_12 = arith.constant dense<0.000000e+00> : vector<16xf32>
    %9 = vector.multi_reduction <add>, %6, %cst_12 [1] : vector<16x128xf32> to vector<16xf32>
    %10 = vector.shape_cast %9 : vector<16xf32> to vector<16x1xf32>
    %cst_13 = arith.constant 7.812500e-03 : f32
    %11 = vector.broadcast %cst_13 : f32 to vector<16x1xf32>
    %12 = arith.mulf %10, %11 : vector<16x1xf32>
    %13 = vector.broadcast %12 : vector<16x1xf32> to vector<16x128xf32>
    %14 = arith.subf %6, %13 : vector<16x128xf32>
    %15 = arith.mulf %14, %14 : vector<16x128xf32>
    %cst_14 = arith.constant dense<0.000000e+00> : vector<16xf32>
    %16 = vector.multi_reduction <add>, %15, %cst_14 [1] : vector<16x128xf32> to vector<16xf32>
    %17 = vector.shape_cast %16 : vector<16xf32> to vector<16x1xf32>
    %cst_15 = arith.constant 0.000000e+00 : f32
    %18 = vector.broadcast %cst_15 : f32 to vector<16x1xf32>
    %19 = arith.mulf %18, %12 : vector<16x1xf32>
    %20 = arith.mulf %19, %12 : vector<16x1xf32>
    %21 = arith.subf %17, %20 : vector<16x1xf32>
    %cst_16 = arith.constant 7.812500e-03 : f32
    %22 = vector.broadcast %cst_16 : f32 to vector<16x1xf32>
    %23 = arith.mulf %21, %22 : vector<16x1xf32>
    %cst_17 = arith.constant 0.000000e+00 : f32
    %24 = vector.broadcast %cst_17 : f32 to vector<16x1xf32>
    %25 = arith.maximumf %23, %24 : vector<16x1xf32>
    %cst_18 = arith.constant 9.99999974E-6 : f32
    %26 = vector.broadcast %cst_18 : f32 to vector<16x1xf32>
    %27 = arith.addf %25, %26 : vector<16x1xf32>
    %28 = math.rsqrt %27 : vector<16x1xf32>
    %29 = arith.mulf %7, %28 : vector<16x1xf32>
    %30 = arith.mulf %12, %29 : vector<16x1xf32>
    %31 = arith.subf %8, %30 : vector<16x1xf32>
    %32 = vector.broadcast %29 : vector<16x1xf32> to vector<16x128xf32>
    %33 = arith.mulf %6, %32 : vector<16x128xf32>
    %34 = vector.broadcast %31 : vector<16x1xf32> to vector<16x128xf32>
    %35 = arith.addf %33, %34 : vector<16x128xf32>
    %cst_19 = arith.constant 0.000000e+00 : f32
    %36 = vector.broadcast %cst_19 : f32 to vector<16x128xf32>
    %37 = arith.maximumf %35, %36 : vector<16x128xf32>
    %38 = arith.truncf %37 : vector<16x128xf32> to vector<16x128xbf16>
    %c0_20 = arith.constant 0 : index
    %c0_21 = arith.constant 0 : index
    %39 = vector.load %arg7[%c0_20, %c0_21] : memref<16x128xbf16, #tpu.memory_space<vmem>>, vector<16x128xbf16>
    tpu.vector_store %arg7[%c0_20, %c0_21], %38 {strides = array<i32>} : memref<16x128xbf16, #tpu.memory_space<vmem>>, vector<16x128xbf16>,
    return
  }
  func.func @transform_0(%arg0: i32) -> (i32, i32) {
    %c0_i32 = arith.constant 0 : i32
    %c0_i32_0 = arith.constant 0 : i32
    %c0_i32_1 = arith.constant 0 : i32
    return %c0_i32, %c0_i32_0 : i32, i32
  }
  func.func @transform_1(%arg0: i32) -> (i32, i32) {
    %c0_i32 = arith.constant 0 : i32
    %c0_i32_0 = arith.constant 0 : i32
    %c0_i32_1 = arith.constant 0 : i32
    return %c0_i32, %c0_i32_0 : i32, i32
  }
  func.func @transform_2(%arg0: i32) -> (i32, i32) {
    %c0_i32 = arith.constant 0 : i32
    %c0_i32_0 = arith.constant 0 : i32
    %c0_i32_1 = arith.constant 0 : i32
    return %c0_i32, %c0_i32_0 : i32, i32
  }
  func.func @transform_3(%arg0: i32) -> (i32, i32) {
    %c0_i32 = arith.constant 0 : i32
    %c0_i32_0 = arith.constant 0 : i32
    %c0_i32_1 = arith.constant 0 : i32
    return %c0_i32, %c0_i32_0 : i32, i32
  }
  func.func @transform_4(%arg0: i32) -> (i32, i32) {
    %c0_i32 = arith.constant 0 : i32
    %c0_i32_0 = arith.constant 0 : i32
    %c0_i32_1 = arith.constant 0 : i32
    return %c0_i32, %c0_i32_0 : i32, i32
  }
  func.func @transform_5(%arg0: i32) -> (i32, i32) {
    %c0_i32 = arith.constant 0 : i32
    %c0_i32_0 = arith.constant 0 : i32
    %c0_i32_1 = arith.constant 0 : i32
    return %c0_i32, %c0_i32_0 : i32, i32
  }
  func.func @transform_6(%arg0: i32) -> (i32, i32) {
    %c0_i32 = arith.constant 0 : i32
    %c0_i32_0 = arith.constant 0 : i32
    %c0_i32_1 = arith.constant 0 : i32
    return %c0_i32, %c0_i32_0 : i32, i32
  }
}

module attributes {stable_mosaic.version = 11 : i64} {
  func.func @_conv_bn_relu_single_kernel(%arg0: i32, %arg1: memref<16x128xbf16, #tpu.memory_space<vmem>>, %arg2: memref<16x16xbf16, #tpu.memory_space<vmem>>, %arg3: memref<16x1xf32, #tpu.memory_space<vmem>>, %arg4: memref<16x1xf32, #tpu.memory_space<vmem>>, %arg5: memref<16x128xbf16, #tpu.memory_space<vmem>>) attributes {dimension_semantics = [#tpu.dimension_semantics<arbitrary>], iteration_bounds = array<i64: 1>, scalar_prefetch = 0 : i64, scratch_operands = 0 : i64, tpu.core_type = #tpu.core_type<tc>, window_params = [{pipeline_mode = #tpu.pipeline_mode<synchronous>, transform_indices = @transform_0, window_bounds = array<i64: 16, 128>}, {pipeline_mode = #tpu.pipeline_mode<synchronous>, transform_indices = @transform_1, window_bounds = array<i64: 16, 16>}, {pipeline_mode = #tpu.pipeline_mode<synchronous>, transform_indices = @transform_2, window_bounds = array<i64: 16, 1>}, {pipeline_mode = #tpu.pipeline_mode<synchronous>, transform_indices = @transform_3, window_bounds = array<i64: 16, 1>}, {pipeline_mode = #tpu.pipeline_mode<synchronous>, transform_indices = @transform_4, window_bounds = array<i64: 16, 128>}]} {
    %c0 = arith.constant 0 : index
    %c0_0 = arith.constant 0 : index
    %0 = vector.load %arg2[%c0, %c0_0] : memref<16x16xbf16, #tpu.memory_space<vmem>>, vector<16x16xbf16>
    %c0_1 = arith.constant 0 : index
    %c0_2 = arith.constant 0 : index
    %1 = vector.load %arg1[%c0_1, %c0_2] : memref<16x128xbf16, #tpu.memory_space<vmem>>, vector<16x128xbf16>
    %cst = arith.constant dense<0.000000e+00> : vector<16x128xf32>
    %2 = tpu.matmul %0, %1, %cst {dimension_numbers = #tpu.dot_dimension_numbers<[1], [0], [0], [1], [0, 0, 1, 1], [], []>} : vector<16x16xbf16>, vector<16x128xbf16>, vector<16x128xf32> -> vector<16x128xf32>
    %c0_3 = arith.constant 0 : index
    %c0_4 = arith.constant 0 : index
    %3 = vector.load %arg3[%c0_3, %c0_4] : memref<16x1xf32, #tpu.memory_space<vmem>>, vector<16x1xf32>
    %c0_5 = arith.constant 0 : index
    %c0_6 = arith.constant 0 : index
    %4 = vector.load %arg4[%c0_5, %c0_6] : memref<16x1xf32, #tpu.memory_space<vmem>>, vector<16x1xf32>
    %cst_7 = arith.constant dense<0.000000e+00> : vector<16xf32>
    %5 = vector.multi_reduction <add>, %2, %cst_7 [1] : vector<16x128xf32> to vector<16xf32>
    %6 = vector.shape_cast %5 : vector<16xf32> to vector<16x1xf32>
    %cst_8 = arith.constant 7.812500e-03 : f32
    %7 = vector.broadcast %cst_8 : f32 to vector<16x1xf32>
    %8 = arith.mulf %6, %7 : vector<16x1xf32>
    %9 = vector.broadcast %8 : vector<16x1xf32> to vector<16x128xf32>
    %10 = arith.subf %2, %9 : vector<16x128xf32>
    %11 = arith.mulf %10, %10 : vector<16x128xf32>
    %cst_9 = arith.constant dense<0.000000e+00> : vector<16xf32>
    %12 = vector.multi_reduction <add>, %11, %cst_9 [1] : vector<16x128xf32> to vector<16xf32>
    %13 = vector.shape_cast %12 : vector<16xf32> to vector<16x1xf32>
    %cst_10 = arith.constant 0.000000e+00 : f32
    %14 = vector.broadcast %cst_10 : f32 to vector<16x1xf32>
    %15 = arith.mulf %14, %8 : vector<16x1xf32>
    %16 = arith.mulf %15, %8 : vector<16x1xf32>
    %17 = arith.subf %13, %16 : vector<16x1xf32>
    %cst_11 = arith.constant 7.812500e-03 : f32
    %18 = vector.broadcast %cst_11 : f32 to vector<16x1xf32>
    %19 = arith.mulf %17, %18 : vector<16x1xf32>
    %cst_12 = arith.constant 0.000000e+00 : f32
    %20 = vector.broadcast %cst_12 : f32 to vector<16x1xf32>
    %21 = arith.maximumf %19, %20 : vector<16x1xf32>
    %cst_13 = arith.constant 9.99999974E-6 : f32
    %22 = vector.broadcast %cst_13 : f32 to vector<16x1xf32>
    %23 = arith.addf %21, %22 : vector<16x1xf32>
    %24 = math.rsqrt %23 : vector<16x1xf32>
    %25 = arith.mulf %3, %24 : vector<16x1xf32>
    %26 = arith.mulf %8, %25 : vector<16x1xf32>
    %27 = arith.subf %4, %26 : vector<16x1xf32>
    %28 = vector.broadcast %25 : vector<16x1xf32> to vector<16x128xf32>
    %29 = arith.mulf %2, %28 : vector<16x128xf32>
    %30 = vector.broadcast %27 : vector<16x1xf32> to vector<16x128xf32>
    %31 = arith.addf %29, %30 : vector<16x128xf32>
    %cst_14 = arith.constant 0.000000e+00 : f32
    %32 = vector.broadcast %cst_14 : f32 to vector<16x128xf32>
    %33 = arith.maximumf %31, %32 : vector<16x128xf32>
    %34 = arith.truncf %33 : vector<16x128xf32> to vector<16x128xbf16>
    %c0_15 = arith.constant 0 : index
    %c0_16 = arith.constant 0 : index
    %35 = vector.load %arg5[%c0_15, %c0_16] : memref<16x128xbf16, #tpu.memory_space<vmem>>, vector<16x128xbf16>
    tpu.vector_store %arg5[%c0_15, %c0_16], %34 {strides = array<i32>} : memref<16x128xbf16, #tpu.memory_space<vmem>>, vector<16x128xbf16>,
    return
  }
  func.func @transform_0(%arg0: i32) -> (i32, i32) {
    %c0_i32 = arith.constant 0 : i32
    %c0_i32_0 = arith.constant 0 : i32
    %c0_i32_1 = arith.constant 0 : i32
    return %c0_i32, %c0_i32_0 : i32, i32
  }
  func.func @transform_1(%arg0: i32) -> (i32, i32) {
    %c0_i32 = arith.constant 0 : i32
    %c0_i32_0 = arith.constant 0 : i32
    %c0_i32_1 = arith.constant 0 : i32
    return %c0_i32, %c0_i32_0 : i32, i32
  }
  func.func @transform_2(%arg0: i32) -> (i32, i32) {
    %c0_i32 = arith.constant 0 : i32
    %c0_i32_0 = arith.constant 0 : i32
    %c0_i32_1 = arith.constant 0 : i32
    return %c0_i32, %c0_i32_0 : i32, i32
  }
  func.func @transform_3(%arg0: i32) -> (i32, i32) {
    %c0_i32 = arith.constant 0 : i32
    %c0_i32_0 = arith.constant 0 : i32
    %c0_i32_1 = arith.constant 0 : i32
    return %c0_i32, %c0_i32_0 : i32, i32
  }
  func.func @transform_4(%arg0: i32) -> (i32, i32) {
    %c0_i32 = arith.constant 0 : i32
    %c0_i32_0 = arith.constant 0 : i32
    %c0_i32_1 = arith.constant 0 : i32
    return %c0_i32, %c0_i32_0 : i32, i32
  }
}

module attributes {stable_mosaic.version = 11 : i64} {
  func.func @_conv_bn_relu_single_kernel(%arg0: i32, %arg1: memref<8x512xbf16, #tpu.memory_space<vmem>>, %arg2: memref<4x8xbf16, #tpu.memory_space<vmem>>, %arg3: memref<4x1xf32, #tpu.memory_space<vmem>>, %arg4: memref<4x1xf32, #tpu.memory_space<vmem>>, %arg5: memref<4x512xbf16, #tpu.memory_space<vmem>>) attributes {dimension_semantics = [#tpu.dimension_semantics<arbitrary>], iteration_bounds = array<i64: 1>, scalar_prefetch = 0 : i64, scratch_operands = 0 : i64, tpu.core_type = #tpu.core_type<tc>, window_params = [{pipeline_mode = #tpu.pipeline_mode<synchronous>, transform_indices = @transform_0, window_bounds = array<i64: 8, 512>}, {pipeline_mode = #tpu.pipeline_mode<synchronous>, transform_indices = @transform_1, window_bounds = array<i64: 4, 8>}, {pipeline_mode = #tpu.pipeline_mode<synchronous>, transform_indices = @transform_2, window_bounds = array<i64: 4, 1>}, {pipeline_mode = #tpu.pipeline_mode<synchronous>, transform_indices = @transform_3, window_bounds = array<i64: 4, 1>}, {pipeline_mode = #tpu.pipeline_mode<synchronous>, transform_indices = @transform_4, window_bounds = array<i64: 4, 512>}]} {
    %c0 = arith.constant 0 : index
    %c0_0 = arith.constant 0 : index
    %0 = vector.load %arg2[%c0, %c0_0] : memref<4x8xbf16, #tpu.memory_space<vmem>>, vector<4x8xbf16>
    %c0_1 = arith.constant 0 : index
    %c0_2 = arith.constant 0 : index
    %1 = vector.load %arg1[%c0_1, %c0_2] : memref<8x512xbf16, #tpu.memory_space<vmem>>, vector<8x512xbf16>
    %cst = arith.constant dense<0.000000e+00> : vector<4x512xf32>
    %2 = tpu.matmul %0, %1, %cst {dimension_numbers = #tpu.dot_dimension_numbers<[1], [0], [0], [1], [0, 0, 1, 1], [], []>} : vector<4x8xbf16>, vector<8x512xbf16>, vector<4x512xf32> -> vector<4x512xf32>
    %c0_3 = arith.constant 0 : index
    %c0_4 = arith.constant 0 : index
    %3 = vector.load %arg3[%c0_3, %c0_4] : memref<4x1xf32, #tpu.memory_space<vmem>>, vector<4x1xf32>
    %c0_5 = arith.constant 0 : index
    %c0_6 = arith.constant 0 : index
    %4 = vector.load %arg4[%c0_5, %c0_6] : memref<4x1xf32, #tpu.memory_space<vmem>>, vector<4x1xf32>
    %cst_7 = arith.constant dense<0.000000e+00> : vector<4xf32>
    %5 = vector.multi_reduction <add>, %2, %cst_7 [1] : vector<4x512xf32> to vector<4xf32>
    %6 = vector.shape_cast %5 : vector<4xf32> to vector<4x1xf32>
    %cst_8 = arith.constant 0.001953125 : f32
    %7 = vector.broadcast %cst_8 : f32 to vector<4x1xf32>
    %8 = arith.mulf %6, %7 : vector<4x1xf32>
    %9 = vector.broadcast %8 : vector<4x1xf32> to vector<4x512xf32>
    %10 = arith.subf %2, %9 : vector<4x512xf32>
    %11 = arith.mulf %10, %10 : vector<4x512xf32>
    %cst_9 = arith.constant dense<0.000000e+00> : vector<4xf32>
    %12 = vector.multi_reduction <add>, %11, %cst_9 [1] : vector<4x512xf32> to vector<4xf32>
    %13 = vector.shape_cast %12 : vector<4xf32> to vector<4x1xf32>
    %cst_10 = arith.constant 0.000000e+00 : f32
    %14 = vector.broadcast %cst_10 : f32 to vector<4x1xf32>
    %15 = arith.mulf %14, %8 : vector<4x1xf32>
    %16 = arith.mulf %15, %8 : vector<4x1xf32>
    %17 = arith.subf %13, %16 : vector<4x1xf32>
    %cst_11 = arith.constant 0.001953125 : f32
    %18 = vector.broadcast %cst_11 : f32 to vector<4x1xf32>
    %19 = arith.mulf %17, %18 : vector<4x1xf32>
    %cst_12 = arith.constant 0.000000e+00 : f32
    %20 = vector.broadcast %cst_12 : f32 to vector<4x1xf32>
    %21 = arith.maximumf %19, %20 : vector<4x1xf32>
    %cst_13 = arith.constant 9.99999974E-6 : f32
    %22 = vector.broadcast %cst_13 : f32 to vector<4x1xf32>
    %23 = arith.addf %21, %22 : vector<4x1xf32>
    %24 = math.rsqrt %23 : vector<4x1xf32>
    %25 = arith.mulf %3, %24 : vector<4x1xf32>
    %26 = arith.mulf %8, %25 : vector<4x1xf32>
    %27 = arith.subf %4, %26 : vector<4x1xf32>
    %28 = vector.broadcast %25 : vector<4x1xf32> to vector<4x512xf32>
    %29 = arith.mulf %2, %28 : vector<4x512xf32>
    %30 = vector.broadcast %27 : vector<4x1xf32> to vector<4x512xf32>
    %31 = arith.addf %29, %30 : vector<4x512xf32>
    %cst_14 = arith.constant 0.000000e+00 : f32
    %32 = vector.broadcast %cst_14 : f32 to vector<4x512xf32>
    %33 = arith.maximumf %31, %32 : vector<4x512xf32>
    %34 = arith.truncf %33 : vector<4x512xf32> to vector<4x512xbf16>
    %c0_15 = arith.constant 0 : index
    %c0_16 = arith.constant 0 : index
    %35 = vector.load %arg5[%c0_15, %c0_16] : memref<4x512xbf16, #tpu.memory_space<vmem>>, vector<4x512xbf16>
    tpu.vector_store %arg5[%c0_15, %c0_16], %34 {strides = array<i32>} : memref<4x512xbf16, #tpu.memory_space<vmem>>, vector<4x512xbf16>,
    return
  }
  func.func @transform_0(%arg0: i32) -> (i32, i32) {
    %c0_i32 = arith.constant 0 : i32
    %c0_i32_0 = arith.constant 0 : i32
    %c0_i32_1 = arith.constant 0 : i32
    return %c0_i32, %c0_i32_0 : i32, i32
  }
  func.func @transform_1(%arg0: i32) -> (i32, i32) {
    %c0_i32 = arith.constant 0 : i32
    %c0_i32_0 = arith.constant 0 : i32
    %c0_i32_1 = arith.constant 0 : i32
    return %c0_i32, %c0_i32_0 : i32, i32
  }
  func.func @transform_2(%arg0: i32) -> (i32, i32) {
    %c0_i32 = arith.constant 0 : i32
    %c0_i32_0 = arith.constant 0 : i32
    %c0_i32_1 = arith.constant 0 : i32
    return %c0_i32, %c0_i32_0 : i32, i32
  }
  func.func @transform_3(%arg0: i32) -> (i32, i32) {
    %c0_i32 = arith.constant 0 : i32
    %c0_i32_0 = arith.constant 0 : i32
    %c0_i32_1 = arith.constant 0 : i32
    return %c0_i32, %c0_i32_0 : i32, i32
  }
  func.func @transform_4(%arg0: i32) -> (i32, i32) {
    %c0_i32 = arith.constant 0 : i32
    %c0_i32_0 = arith.constant 0 : i32
    %c0_i32_1 = arith.constant 0 : i32
    return %c0_i32, %c0_i32_0 : i32, i32
  }
}

module attributes {stable_mosaic.version = 11 : i64} {
  func.func @_conv_sigmoid_kernel(%arg0: i32, %arg1: memref<16x512xbf16, #tpu.memory_space<vmem>>, %arg2: memref<4x512xbf16, #tpu.memory_space<vmem>>, %arg3: memref<3x16xbf16, #tpu.memory_space<vmem>>, %arg4: memref<3x4xbf16, #tpu.memory_space<vmem>>, %arg5: memref<3x1xf32, #tpu.memory_space<vmem>>, %arg6: memref<3x512xf32, #tpu.memory_space<vmem>>) attributes {dimension_semantics = [#tpu.dimension_semantics<parallel>], iteration_bounds = array<i64: 1>, scalar_prefetch = 0 : i64, scratch_operands = 0 : i64, tpu.core_type = #tpu.core_type<tc>, window_params = [{transform_indices = @transform_0, window_bounds = array<i64: 16, 512>}, {transform_indices = @transform_1, window_bounds = array<i64: 4, 512>}, {pipeline_mode = #tpu.pipeline_mode<synchronous>, transform_indices = @transform_2, window_bounds = array<i64: 3, 16>}, {pipeline_mode = #tpu.pipeline_mode<synchronous>, transform_indices = @transform_3, window_bounds = array<i64: 3, 4>}, {pipeline_mode = #tpu.pipeline_mode<synchronous>, transform_indices = @transform_4, window_bounds = array<i64: 3, 1>}, {transform_indices = @transform_5, window_bounds = array<i64: 3, 512>}]} {
    %c0 = arith.constant 0 : index
    %c0_0 = arith.constant 0 : index
    %0 = vector.load %arg3[%c0, %c0_0] : memref<3x16xbf16, #tpu.memory_space<vmem>>, vector<3x16xbf16>
    %c0_1 = arith.constant 0 : index
    %c0_2 = arith.constant 0 : index
    %1 = vector.load %arg1[%c0_1, %c0_2] : memref<16x512xbf16, #tpu.memory_space<vmem>>, vector<16x512xbf16>
    %cst = arith.constant dense<0.000000e+00> : vector<3x512xf32>
    %2 = tpu.matmul %0, %1, %cst {dimension_numbers = #tpu.dot_dimension_numbers<[1], [0], [0], [1], [0, 0, 1, 1], [], []>} : vector<3x16xbf16>, vector<16x512xbf16>, vector<3x512xf32> -> vector<3x512xf32>
    %c0_3 = arith.constant 0 : index
    %c0_4 = arith.constant 0 : index
    %3 = vector.load %arg4[%c0_3, %c0_4] : memref<3x4xbf16, #tpu.memory_space<vmem>>, vector<3x4xbf16>
    %c0_5 = arith.constant 0 : index
    %c0_6 = arith.constant 0 : index
    %4 = vector.load %arg2[%c0_5, %c0_6] : memref<4x512xbf16, #tpu.memory_space<vmem>>, vector<4x512xbf16>
    %cst_7 = arith.constant dense<0.000000e+00> : vector<3x512xf32>
    %5 = tpu.matmul %3, %4, %cst_7 {dimension_numbers = #tpu.dot_dimension_numbers<[1], [0], [0], [1], [0, 0, 1, 1], [], []>} : vector<3x4xbf16>, vector<4x512xbf16>, vector<3x512xf32> -> vector<3x512xf32>
    %6 = arith.addf %2, %5 : vector<3x512xf32>
    %c0_8 = arith.constant 0 : index
    %c0_9 = arith.constant 0 : index
    %7 = vector.load %arg5[%c0_8, %c0_9] : memref<3x1xf32, #tpu.memory_space<vmem>>, vector<3x1xf32>
    %8 = vector.broadcast %7 : vector<3x1xf32> to vector<3x512xf32>
    %9 = arith.addf %6, %8 : vector<3x512xf32>
    %cst_10 = arith.constant 0.000000e+00 : f32
    %10 = vector.broadcast %cst_10 : f32 to vector<3x512xf32>
    %11 = arith.subf %10, %9 : vector<3x512xf32>
    %12 = math.exp %11 : vector<3x512xf32>
    %cst_11 = arith.constant 1.000000e+00 : f32
    %13 = vector.broadcast %cst_11 : f32 to vector<3x512xf32>
    %14 = arith.addf %13, %12 : vector<3x512xf32>
    %cst_12 = arith.constant 1.000000e+00 : f32
    %15 = vector.broadcast %cst_12 : f32 to vector<3x512xf32>
    %16 = arith.divf %15, %14 : vector<3x512xf32>
    %c0_13 = arith.constant 0 : index
    %c0_14 = arith.constant 0 : index
    %17 = vector.load %arg6[%c0_13, %c0_14] : memref<3x512xf32, #tpu.memory_space<vmem>>, vector<3x512xf32>
    tpu.vector_store %arg6[%c0_13, %c0_14], %16 {strides = array<i32>} : memref<3x512xf32, #tpu.memory_space<vmem>>, vector<3x512xf32>,
    return
  }
  func.func @transform_0(%arg0: i32) -> (i32, i32) {
    %c0_i32 = arith.constant 0 : i32
    %c0_i32_0 = arith.constant 0 : i32
    return %c0_i32, %arg0 : i32, i32
  }
  func.func @transform_1(%arg0: i32) -> (i32, i32) {
    %c0_i32 = arith.constant 0 : i32
    %c0_i32_0 = arith.constant 0 : i32
    return %c0_i32, %arg0 : i32, i32
  }
  func.func @transform_2(%arg0: i32) -> (i32, i32) {
    %c0_i32 = arith.constant 0 : i32
    %c0_i32_0 = arith.constant 0 : i32
    %c0_i32_1 = arith.constant 0 : i32
    return %c0_i32, %c0_i32_0 : i32, i32
  }
  func.func @transform_3(%arg0: i32) -> (i32, i32) {
    %c0_i32 = arith.constant 0 : i32
    %c0_i32_0 = arith.constant 0 : i32
    %c0_i32_1 = arith.constant 0 : i32
    return %c0_i32, %c0_i32_0 : i32, i32
  }
  func.func @transform_4(%arg0: i32) -> (i32, i32) {
    %c0_i32 = arith.constant 0 : i32
    %c0_i32_0 = arith.constant 0 : i32
    %c0_i32_1 = arith.constant 0 : i32
    return %c0_i32, %c0_i32_0 : i32, i32
  }
  func.func @transform_5(%arg0: i32) -> (i32, i32) {
    %c0_i32 = arith.constant 0 : i32
    %c0_i32_0 = arith.constant 0 : i32
    return %c0_i32, %arg0 : i32, i32
  }
}

</mosaic_0001>

<llo_original>
// kernel: dip_forward.17
$region0: #{dip_forward.17}
  #allocation0 [shape = 'u32[]', space=smem, size = 0x4, offset = 0x4, fixed_abs, tag = 'smem constant byte address 0x4 - core index']
  #allocation1 [shape = 'u32[144,128]{1,0:T(1,128)}', space=vmem, size = 0x12000, scoped, tag = 'internal scratch']
  %s0 = inlined_call_operand.vmem [shape: bf16[72,128], index: 0, kind: input, shape index: {}]
  %s1 = inlined_call_operand.vmem [shape: bf16[16,72], index: 1, kind: input, shape index: {}]
  %s2 = inlined_call_operand.vmem [shape: f32[16,1], index: 2, kind: input, shape index: {}]
  %s3 = inlined_call_operand.vmem [shape: f32[16,1], index: 3, kind: input, shape index: {}]
  %s4 = inlined_call_operand.vmem [shape: bf16[16,128], index: 4, kind: output, shape index: {}]
  %s5 = sld [smem:[#allocation0]]
  $region26: #{dip_forward.17} parent=0
    _
  %s7 = ssub.s32 1, %s5
  %s8 = scalar_select 0, %s7, %s5
  // Predicated region
  $region2: #{dip_forward.17} parent=0 // pred_check
    _
  $region3: #{dip_forward.17} parent=0 // pred_check_branch
    %10 = sbr.rel (0) target = $region5
  $region4: #{dip_forward.17} parent=0 // pred_region
    _
  $region5: #{dip_forward.17} parent=0 // pred_fallthru
    _
  // Predicated region
  $region6: #{dip_forward.17} parent=0 // pred_check
    _
  $region7: #{dip_forward.17} parent=0 // pred_check_branch
    %12 = sbr.rel (0) target = $region9
  $region8: #{dip_forward.17} parent=0 // pred_region
    _
  $region9: #{dip_forward.17} parent=0 // pred_fallthru
    _
  // Predicated region
  $region10: #{dip_forward.17} parent=0 // pred_check
    _
  $region11: #{dip_forward.17} parent=0 // pred_check_branch
    %14 = sbr.rel (0) target = $region13
  $region12: #{dip_forward.17} parent=0 // pred_region
    _
  $region13: #{dip_forward.17} parent=0 // pred_fallthru
    _
  // Predicated region
  $region14: #{dip_forward.17} parent=0 // pred_check
    _
  $region15: #{dip_forward.17} parent=0 // pred_check_branch
    %16 = sbr.rel (0) target = $region17
  $region16: #{dip_forward.17} parent=0 // pred_region
    _
  $region17: #{dip_forward.17} parent=0 // pred_fallthru
    _
  %v18 = vld [vmem:[%s1] sm:$0xf]
  %v19 = vld [vmem:[%s1 + $0x4] sm:$0xf]
  %v20 = vld [vmem:[%s0] sm:$0xf]
  %v21 = vld [vmem:[%s0 + $0x4] sm:$0xf]
  %v22 = vld [vmem:[%s0 + $0x8] sm:$0xf]
  %v23 = vld [vmem:[%s0 + $0xc] sm:$0xf]
  %v24 = vld [vmem:[%s0 + $0x10] sm:$0xf]
  %v25 = vld [vmem:[%s0 + $0x14] sm:$0xf]
  %v26 = vld [vmem:[%s0 + $0x18] sm:$0xf]
  %v27 = vld [vmem:[%s0 + $0x1c] sm:$0xf]
  %v28 = vld [vmem:[%s0 + $0x20] sm:$0xf]
  %v31 = vunpack.c.l.b16 %v18
  %v32 = vunpack.c.l.b16 %v19
  %v33 = vpack.c.b16 %v32, %v31
  %v43 = vunpack.c.l.b16 %v20
  %v44 = vunpack.c.l.b16 %v21
  %v45 = vunpack.c.l.b16 %v22
  %v46 = vunpack.c.l.b16 %v23
  %v47 = vunpack.c.l.b16 %v24
  %v48 = vunpack.c.l.b16 %v25
  %v49 = vunpack.c.l.b16 %v26
  %v50 = vunpack.c.l.b16 %v27
  %v51 = vunpack.c.l.b16 %v28
  %v52 = vpack.c.b16 %v44, %v43
  %v53 = vpack.c.b16 %v46, %v45
  %v54 = vpack.c.b16 %v48, %v47
  %v55 = vpack.c.b16 %v50, %v49
  %v56 = vpack.c.b16 %v51, %v51
  %vm61 = vcmask 588800
  %v63 = vsel %vm61, %v33, 0
  %vm65 = vcmask 1043456
  %v67 = vsel %vm65, %v56, 0
  %69 = vmatprep.subr.bf16.mxu0 0
  %70 = vmatpush1.bf16.msra.mxu0 %v52
  %71 = vmatprep.subr.bf16.mxu0 0
  %72 = vmatpush1.bf16.msra.mxu0 %v53
  %73 = vmatprep.subr.bf16.mxu0 0
  %74 = vmatpush1.bf16.msra.mxu0 %v54
  %75 = vmatprep.subr.bf16.mxu0 0
  %76 = vmatpush1.bf16.msra.mxu0 %v55
  %77 = vmatprep.subr.bf16.mxu0 0
  %78 = vmatpush1.bf16.msra.mxu0 %v67
  %79 = vmatprep.subr.bf16.mxu0 0
  %80 = vmatpush1.bf16.msra.mxu0 0
  %81 = vmatprep.subr.bf16.mxu0 0
  %82 = vmatpush1.bf16.msra.mxu0 0
  %83 = vmatprep.subr.bf16.mxu0 0
  %84 = vmatpush1.bf16.msra.mxu0 0
  %85 = vmatprep.subr.bf16.mxu0 0
  %86 = vmatpush1.bf16.msra.mxu0 0
  %87 = vmatprep.subr.bf16.mxu0 0
  %88 = vmatpush1.bf16.msra.mxu0 0
  %89 = vmatprep.subr.bf16.mxu0 0
  %90 = vmatpush1.bf16.msra.mxu0 0
  %91 = vmatprep.subr.bf16.mxu0 0
  %92 = vmatpush1.bf16.msra.mxu0 0
  %93 = vmatprep.subr.bf16.mxu0 0
  %94 = vmatpush1.bf16.msra.mxu0 0
  %95 = vmatprep.subr.bf16.mxu0 0
  %96 = vmatpush1.bf16.msra.mxu0 0
  %97 = vmatprep.subr.bf16.mxu0 0
  %98 = vmatpush1.bf16.msra.mxu0 0
  %99 = vmatprep.subr.bf16.mxu0 0
  %100 = vmatpush1.bf16.msra.mxu0 0
  %101 = vmatprep.mubr.bf16.mxu0 0
  %102 = vmatmul.mubr.bf16.gmra.mrb[0].mxu0 %v63
  %v103 = vpop.f32.mrb[0].mxu0
  %v104 = vadd.f32 0.0, %v103
  %v105 = vpop.f32.mrb[0].mxu0
  %v106 = vpop.f32.mrb[0].mxu0
  %v107 = vadd.f32 0.0, %v106
  %v108 = vpop.f32.mrb[0].mxu0
  %109 = vdwg.mxu0
  %v110 = vld [vmem:[%s2] sm:$0xff]
  %v111 = vld [vmem:[%s2 + $0x8] sm:$0xff]
  %v112 = vld [vmem:[%s3] sm:$0xff]
  %v113 = vld [vmem:[%s3 + $0x8] sm:$0xff]
  %114 = vadd.xlane.f32.xlu0 %v104
  %v115 = vpop.xlane.xlu0 %114
  %116 = vadd.xlane.f32.xlu0 %v107
  %v117 = vpop.xlane.xlu0 %116
  %v118 = vmul.f32 %v115, 0.0078125
  %v119 = vmul.f32 %v117, 0.0078125
  %v120 = vsub.f32 %v104, %v118
  %v121 = vsub.f32 %v107, %v119
  %v122 = vmul.f32 %v120, %v120
  %v123 = vmul.f32 %v121, %v121
  %124 = vadd.xlane.f32.xlu0 %v122
  %v125 = vpop.xlane.xlu0 %124
  %126 = vadd.xlane.f32.xlu0 %v123
  %v127 = vpop.xlane.xlu0 %126
  %v128 = vmul.f32 %v118, 0.0
  %v129 = vmul.f32 %v119, 0.0
  %v130 = vmul.f32 %v128, %v118
  %v131 = vmul.f32 %v129, %v119
  %v132 = vsub.f32 %v125, %v130
  %v133 = vsub.f32 %v127, %v131
  %v134 = vmul.f32 %v132, 0.0078125
  %v135 = vmul.f32 %v133, 0.0078125
  %v136 = vmax.f32 %v134, 0.0
  %v137 = vmax.f32 %v135, 0.0
  %v138 = vadd.f32 %v136, 1e-05
  %v139 = vadd.f32 %v137, 1e-05
  %v140 = vrsqrt.pop %v138
  %v141 = vrsqrt.pop %v139
  %v142 = vmul.f32 %v110, %v140
  %v143 = vmul.f32 %v111, %v141
  %v144 = vmul.f32 %v118, %v142
  %v145 = vmul.f32 %v119, %v143
  %v146 = vsub.f32 %v112, %v144
  %v147 = vsub.f32 %v113, %v145
  %149 = vset.pattern.permute.xlu0 0
  %150 = vperm.xlu0 %149, %v142
  %v151 = vpop.permute.xlu0 %150
  %154 = vset.pattern.permute.xlu0 0
  %155 = vperm.xlu0 %154, %v143
  %v156 = vpop.permute.xlu0 %155
  %v158 = vmul.f32 %v104, %v151
  %v159 = vmul.f32 %v107, %v156
  %161 = vset.pattern.permute.xlu0 0
  %162 = vperm.xlu0 %161, %v146
  %v163 = vpop.permute.xlu0 %162
  %166 = vset.pattern.permute.xlu0 0
  %167 = vperm.xlu0 %166, %v147
  %v168 = vpop.permute.xlu0 %167
  %v170 = vadd.f32 %v158, %v163
  %v171 = vadd.f32 %v159, %v168
  %v172 = vmax.f32 %v170, 0.0
  %v173 = vmax.f32 %v171, 0.0
  %v174 = vpack.c.bf16 %v173, %v172
  %v176 = vunpack.c.l.b16 %v174
  %v177 = vunpack.c.h.b16 %v174
  %v178 = vpack.c.b16 %v176, %v176
  %v179 = vpack.c.b16 %v177, %v177
  %182 = vst [vmem:[%s4] sm:$0xf] %v178
  %183 = vst [vmem:[%s4 + $0x4] sm:$0xf] %v179
  // Predicated region
  $region18: #{dip_forward.17} parent=0 // pred_check
    _
  $region19: #{dip_forward.17} parent=0 // pred_check_branch
    %185 = sbr.rel (0) target = $region21
  $region20: #{dip_forward.17} parent=0 // pred_region
    _
  $region21: #{dip_forward.17} parent=0 // pred_fallthru
    _
  // Predicated region
  $region22: #{dip_forward.17} parent=0 // pred_check
    _
  $region23: #{dip_forward.17} parent=0 // pred_check_branch
    %187 = sbr.rel (0) target = $region25
  $region24: #{dip_forward.17} parent=0 // pred_region
    _
  $region25: #{dip_forward.17} parent=0 // pred_fallthru
    _

// kernel: dip_forward.19
$region0: #{dip_forward.19}
  #allocation0 [shape = 'u32[]', space=smem, size = 0x4, offset = 0x4, fixed_abs, tag = 'smem constant byte address 0x4 - core index']
  #allocation1 [shape = 'u32[144,128]{1,0:T(1,128)}', space=vmem, size = 0x12000, scoped, tag = 'internal scratch']
  %s0 = inlined_call_operand.vmem [shape: bf16[16,128], index: 0, kind: input, shape index: {}]
  %s1 = inlined_call_operand.vmem [shape: bf16[4,16], index: 1, kind: input, shape index: {}]
  %s2 = inlined_call_operand.vmem [shape: f32[4,1], index: 2, kind: input, shape index: {}]
  %s3 = inlined_call_operand.vmem [shape: f32[4,1], index: 3, kind: input, shape index: {}]
  %s4 = inlined_call_operand.vmem [shape: bf16[4,128], index: 4, kind: output, shape index: {}]
  %s5 = sld [smem:[#allocation0]]
  $region26: #{dip_forward.19} parent=0
    _
  %s7 = ssub.s32 1, %s5
  %s8 = scalar_select 0, %s7, %s5
  // Predicated region
  $region2: #{dip_forward.19} parent=0 // pred_check
    _
  $region3: #{dip_forward.19} parent=0 // pred_check_branch
    %10 = sbr.rel (0) target = $region5
  $region4: #{dip_forward.19} parent=0 // pred_region
    _
  $region5: #{dip_forward.19} parent=0 // pred_fallthru
    _
  // Predicated region
  $region6: #{dip_forward.19} parent=0 // pred_check
    _
  $region7: #{dip_forward.19} parent=0 // pred_check_branch
    %12 = sbr.rel (0) target = $region9
  $region8: #{dip_forward.19} parent=0 // pred_region
    _
  $region9: #{dip_forward.19} parent=0 // pred_fallthru
    _
  // Predicated region
  $region10: #{dip_forward.19} parent=0 // pred_check
    _
  $region11: #{dip_forward.19} parent=0 // pred_check_branch
    %14 = sbr.rel (0) target = $region13
  $region12: #{dip_forward.19} parent=0 // pred_region
    _
  $region13: #{dip_forward.19} parent=0 // pred_fallthru
    _
  // Predicated region
  $region14: #{dip_forward.19} parent=0 // pred_check
    _
  $region15: #{dip_forward.19} parent=0 // pred_check_branch
    %16 = sbr.rel (0) target = $region17
  $region16: #{dip_forward.19} parent=0 // pred_region
    _
  $region17: #{dip_forward.19} parent=0 // pred_fallthru
    _
  %v18 = vld [vmem:[%s1] sm:$0x3]
  %v19 = vld [vmem:[%s0] sm:$0xf]
  %v20 = vld [vmem:[%s0 + $0x4] sm:$0xf]
  %v23 = vunpack.c.l.b16 %v19
  %v24 = vunpack.c.l.b16 %v20
  %v25 = vpack.c.b16 %v24, %v23
  %vm27 = vcmask 130048
  %v29 = vsel %vm27, %v18, 0
  %31 = vmatprep.subr.bf16.mxu0 0
  %32 = vmatpush1.bf16.msra.mxu0 %v25
  %33 = vmatprep.subr.bf16.mxu0 0
  %34 = vmatpush1.bf16.msra.mxu0 0
  %35 = vmatprep.subr.bf16.mxu0 0
  %36 = vmatpush1.bf16.msra.mxu0 0
  %37 = vmatprep.subr.bf16.mxu0 0
  %38 = vmatpush1.bf16.msra.mxu0 0
  %39 = vmatprep.subr.bf16.mxu0 0
  %40 = vmatpush1.bf16.msra.mxu0 0
  %41 = vmatprep.subr.bf16.mxu0 0
  %42 = vmatpush1.bf16.msra.mxu0 0
  %43 = vmatprep.subr.bf16.mxu0 0
  %44 = vmatpush1.bf16.msra.mxu0 0
  %45 = vmatprep.subr.bf16.mxu0 0
  %46 = vmatpush1.bf16.msra.mxu0 0
  %47 = vmatprep.subr.bf16.mxu0 0
  %48 = vmatpush1.bf16.msra.mxu0 0
  %49 = vmatprep.subr.bf16.mxu0 0
  %50 = vmatpush1.bf16.msra.mxu0 0
  %51 = vmatprep.subr.bf16.mxu0 0
  %52 = vmatpush1.bf16.msra.mxu0 0
  %53 = vmatprep.subr.bf16.mxu0 0
  %54 = vmatpush1.bf16.msra.mxu0 0
  %55 = vmatprep.subr.bf16.mxu0 0
  %56 = vmatpush1.bf16.msra.mxu0 0
  %57 = vmatprep.subr.bf16.mxu0 0
  %58 = vmatpush1.bf16.msra.mxu0 0
  %59 = vmatprep.subr.bf16.mxu0 0
  %60 = vmatpush1.bf16.msra.mxu0 0
  %61 = vmatprep.subr.bf16.mxu0 0
  %62 = vmatpush1.bf16.msra.mxu0 0
  %63 = vmatprep.mubr.bf16.mxu0 0
  %64 = vmatmul.mubr.bf16.gmra.mrb[0].mxu0 %v29
  %v65 = vpop.f32.mrb[0].mxu0
  %v66 = vadd.f32 0.0, %v65
  %v67 = vpop.f32.mrb[0].mxu0
  %v68 = vpop.f32.mrb[0].mxu0
  %v69 = vpop.f32.mrb[0].mxu0
  %70 = vdwg.mxu0
  %v71 = vld [vmem:[%s2] sm:$0xf]
  %v72 = vld [vmem:[%s3] sm:$0xf]
  %vm73 = vcmask 1043456
  %v74 = vsel %vm73, %v66, 0.0
  %75 = vadd.xlane.f32.xlu0 %v74
  %v76 = vpop.xlane.xlu0 %75
  %v77 = vmul.f32 %v76, 0.0078125
  %v78 = vsub.f32 %v66, %v77
  %v79 = vmul.f32 %v78, %v78
  %v80 = vsel %vm73, %v79, 0.0
  %81 = vadd.xlane.f32.xlu0 %v80
  %v82 = vpop.xlane.xlu0 %81
  %v83 = vmul.f32 %v77, 0.0
  %v84 = vmul.f32 %v83, %v77
  %v85 = vsub.f32 %v82, %v84
  %v86 = vmul.f32 %v85, 0.0078125
  %v87 = vmax.f32 %v86, 0.0
  %v88 = vadd.f32 %v87, 1e-05
  %v89 = vrsqrt.pop %v88
  %v90 = vmul.f32 %v71, %v89
  %v91 = vmul.f32 %v77, %v90
  %v92 = vsub.f32 %v72, %v91
  %94 = vset.pattern.permute.xlu0 0
  %95 = vperm.xlu0 %94, %v90
  %v96 = vpop.permute.xlu0 %95
  %v98 = vmul.f32 %v66, %v96
  %100 = vset.pattern.permute.xlu0 0
  %101 = vperm.xlu0 %100, %v92
  %v102 = vpop.permute.xlu0 %101
  %v104 = vadd.f32 %v98, %v102
  %v105 = vmax.f32 %v104, 0.0
  %v106 = vpack.c.bf16 %v105, %v105
  %107 = vst [vmem:[%s4] sm:$0x3] %v106
  // Predicated region
  $region18: #{dip_forward.19} parent=0 // pred_check
    _
  $region19: #{dip_forward.19} parent=0 // pred_check_branch
    %109 = sbr.rel (0) target = $region21
  $region20: #{dip_forward.19} parent=0 // pred_region
    _
  $region21: #{dip_forward.19} parent=0 // pred_fallthru
    _
  // Predicated region
  $region22: #{dip_forward.19} parent=0 // pred_check
    _
  $region23: #{dip_forward.19} parent=0 // pred_check_branch
    %111 = sbr.rel (0) target = $region25
  $region24: #{dip_forward.19} parent=0 // pred_region
    _
  $region25: #{dip_forward.19} parent=0 // pred_fallthru
    _

// kernel: dip_forward.18
$region0: #{dip_forward.18}
  #allocation0 [shape = 'u32[]', space=smem, size = 0x4, offset = 0x4, fixed_abs, tag = 'smem constant byte address 0x4 - core index']
  #allocation1 [shape = 'u32[144,128]{1,0:T(1,128)}', space=vmem, size = 0x12000, scoped, tag = 'internal scratch']
  %s0 = inlined_call_operand.vmem [shape: bf16[144,128], index: 0, kind: input, shape index: {}]
  %s1 = inlined_call_operand.vmem [shape: bf16[16,144], index: 1, kind: input, shape index: {}]
  %s2 = inlined_call_operand.vmem [shape: f32[16,1], index: 2, kind: input, shape index: {}]
  %s3 = inlined_call_operand.vmem [shape: f32[16,1], index: 3, kind: input, shape index: {}]
  %s4 = inlined_call_operand.vmem [shape: bf16[16,128], index: 4, kind: output, shape index: {}]
  %s5 = sld [smem:[#allocation0]]
  $region26: #{dip_forward.18} parent=0
    _
  %s7 = ssub.s32 1, %s5
  %s8 = scalar_select 0, %s7, %s5
  // Predicated region
  $region2: #{dip_forward.18} parent=0 // pred_check
    _
  $region3: #{dip_forward.18} parent=0 // pred_check_branch
    %10 = sbr.rel (0) target = $region5
  $region4: #{dip_forward.18} parent=0 // pred_region
    _
  $region5: #{dip_forward.18} parent=0 // pred_fallthru
    _
  // Predicated region
  $region6: #{dip_forward.18} parent=0 // pred_check
    _
  $region7: #{dip_forward.18} parent=0 // pred_check_branch
    %12 = sbr.rel (0) target = $region9
  $region8: #{dip_forward.18} parent=0 // pred_region
    _
  $region9: #{dip_forward.18} parent=0 // pred_fallthru
    _
  // Predicated region
  $region10: #{dip_forward.18} parent=0 // pred_check
    _
  $region11: #{dip_forward.18} parent=0 // pred_check_branch
    %14 = sbr.rel (0) target = $region13
  $region12: #{dip_forward.18} parent=0 // pred_region
    _
  $region13: #{dip_forward.18} parent=0 // pred_fallthru
    _
  // Predicated region
  $region14: #{dip_forward.18} parent=0 // pred_check
    _
  $region15: #{dip_forward.18} parent=0 // pred_check_branch
    %16 = sbr.rel (0) target = $region17
  $region16: #{dip_forward.18} parent=0 // pred_region
    _
  $region17: #{dip_forward.18} parent=0 // pred_fallthru
    _
  %v18 = vld [vmem:[%s1] sm:$0xff]
  %v19 = vld [vmem:[%s1 + $0x8] sm:$0xff]
  %v20 = vld [vmem:[%s0] sm:$0xf]
  %v21 = vld [vmem:[%s0 + $0x4] sm:$0xf]
  %v22 = vld [vmem:[%s0 + $0x8] sm:$0xf]
  %v23 = vld [vmem:[%s0 + $0xc] sm:$0xf]
  %v24 = vld [vmem:[%s0 + $0x10] sm:$0xf]
  %v25 = vld [vmem:[%s0 + $0x14] sm:$0xf]
  %v26 = vld [vmem:[%s0 + $0x18] sm:$0xf]
  %v27 = vld [vmem:[%s0 + $0x1c] sm:$0xf]
  %v28 = vld [vmem:[%s0 + $0x20] sm:$0xf]
  %v29 = vld [vmem:[%s0 + $0x24] sm:$0xf]
  %v30 = vld [vmem:[%s0 + $0x28] sm:$0xf]
  %v31 = vld [vmem:[%s0 + $0x2c] sm:$0xf]
  %v32 = vld [vmem:[%s0 + $0x30] sm:$0xf]
  %v33 = vld [vmem:[%s0 + $0x34] sm:$0xf]
  %v34 = vld [vmem:[%s0 + $0x38] sm:$0xf]
  %v35 = vld [vmem:[%s0 + $0x3c] sm:$0xf]
  %v36 = vld [vmem:[%s0 + $0x40] sm:$0xf]
  %v37 = vld [vmem:[%s0 + $0x44] sm:$0xf]
  %v40 = vunpack.c.l.b16 %v18
  %v41 = vunpack.c.h.b16 %v18
  %v42 = vunpack.c.l.b16 %v19
  %v43 = vunpack.c.h.b16 %v19
  %v44 = vpack.c.b16 %v42, %v40
  %v45 = vpack.c.b16 %v43, %v41
  %v65 = vunpack.c.l.b16 %v20
  %v66 = vunpack.c.l.b16 %v21
  %v67 = vunpack.c.l.b16 %v22
  %v68 = vunpack.c.l.b16 %v23
  %v69 = vunpack.c.l.b16 %v24
  %v70 = vunpack.c.l.b16 %v25
  %v71 = vunpack.c.l.b16 %v26
  %v72 = vunpack.c.l.b16 %v27
  %v73 = vunpack.c.l.b16 %v28
  %v74 = vunpack.c.l.b16 %v29
  %v75 = vunpack.c.l.b16 %v30
  %v76 = vunpack.c.l.b16 %v31
  %v77 = vunpack.c.l.b16 %v32
  %v78 = vunpack.c.l.b16 %v33
  %v79 = vunpack.c.l.b16 %v34
  %v80 = vunpack.c.l.b16 %v35
  %v81 = vunpack.c.l.b16 %v36
  %v82 = vunpack.c.l.b16 %v37
  %v83 = vpack.c.b16 %v66, %v65
  %v84 = vpack.c.b16 %v68, %v67
  %v85 = vpack.c.b16 %v70, %v69
  %v86 = vpack.c.b16 %v72, %v71
  %v87 = vpack.c.b16 %v74, %v73
  %v88 = vpack.c.b16 %v76, %v75
  %v89 = vpack.c.b16 %v78, %v77
  %v90 = vpack.c.b16 %v80, %v79
  %v91 = vpack.c.b16 %v82, %v81
  %vm101 = vcmask 130048
  %v103 = vsel %vm101, %v45, 0
  %105 = vmatprep.subr.bf16.mxu0 0
  %106 = vmatpush1.bf16.msra.mxu0 %v83
  %107 = vmatprep.subr.bf16.mxu0 0
  %108 = vmatpush1.bf16.msra.mxu0 %v84
  %109 = vmatprep.subr.bf16.mxu0 0
  %110 = vmatpush1.bf16.msra.mxu0 %v85
  %111 = vmatprep.subr.bf16.mxu0 0
  %112 = vmatpush1.bf16.msra.mxu0 %v86
  %113 = vmatprep.subr.bf16.mxu0 0
  %114 = vmatpush1.bf16.msra.mxu0 %v87
  %115 = vmatprep.subr.bf16.mxu0 0
  %116 = vmatpush1.bf16.msra.mxu0 %v88
  %117 = vmatprep.subr.bf16.mxu0 0
  %118 = vmatpush1.bf16.msra.mxu0 %v89
  %119 = vmatprep.subr.bf16.mxu0 0
  %120 = vmatpush1.bf16.msra.mxu0 %v90
  %121 = vmatprep.subr.bf16.mxu0 0
  %122 = vmatpush1.bf16.msra.mxu0 %v91
  %123 = vmatprep.subr.bf16.mxu0 0
  %124 = vmatpush1.bf16.msra.mxu0 0
  %125 = vmatprep.subr.bf16.mxu0 0
  %126 = vmatpush1.bf16.msra.mxu0 0
  %127 = vmatprep.subr.bf16.mxu0 0
  %128 = vmatpush1.bf16.msra.mxu0 0
  %129 = vmatprep.subr.bf16.mxu0 0
  %130 = vmatpush1.bf16.msra.mxu0 0
  %131 = vmatprep.subr.bf16.mxu0 0
  %132 = vmatpush1.bf16.msra.mxu0 0
  %133 = vmatprep.subr.bf16.mxu0 0
  %134 = vmatpush1.bf16.msra.mxu0 0
  %135 = vmatprep.subr.bf16.mxu0 0
  %136 = vmatpush1.bf16.msra.mxu0 0
  %137 = vmatprep.mubr.bf16.mxu0 %v103
  %138 = vmatmul.mubr.bf16.gmra.mrb[0].mxu0 %v44
  %v139 = vpop.f32.mrb[0].mxu0
  %v140 = vadd.f32 0.0, %v139
  %v141 = vpop.f32.mrb[0].mxu0
  %v142 = vpop.f32.mrb[0].mxu0
  %v143 = vadd.f32 0.0, %v142
  %v144 = vpop.f32.mrb[0].mxu0
  %145 = vdwg.mxu0
  %v146 = vld [vmem:[%s2] sm:$0xff]
  %v147 = vld [vmem:[%s2 + $0x8] sm:$0xff]
  %v148 = vld [vmem:[%s3] sm:$0xff]
  %v149 = vld [vmem:[%s3 + $0x8] sm:$0xff]
  %150 = vadd.xlane.f32.xlu0 %v140
  %v151 = vpop.xlane.xlu0 %150
  %152 = vadd.xlane.f32.xlu0 %v143
  %v153 = vpop.xlane.xlu0 %152
  %v154 = vmul.f32 %v151, 0.0078125
  %v155 = vmul.f32 %v153, 0.0078125
  %v156 = vsub.f32 %v140, %v154
  %v157 = vsub.f32 %v143, %v155
  %v158 = vmul.f32 %v156, %v156
  %v159 = vmul.f32 %v157, %v157
  %160 = vadd.xlane.f32.xlu0 %v158
  %v161 = vpop.xlane.xlu0 %160
  %162 = vadd.xlane.f32.xlu0 %v159
  %v163 = vpop.xlane.xlu0 %162
  %v164 = vmul.f32 %v154, 0.0
  %v165 = vmul.f32 %v155, 0.0
  %v166 = vmul.f32 %v164, %v154
  %v167 = vmul.f32 %v165, %v155
  %v168 = vsub.f32 %v161, %v166
  %v169 = vsub.f32 %v163, %v167
  %v170 = vmul.f32 %v168, 0.0078125
  %v171 = vmul.f32 %v169, 0.0078125
  %v172 = vmax.f32 %v170, 0.0
  %v173 = vmax.f32 %v171, 0.0
  %v174 = vadd.f32 %v172, 1e-05
  %v175 = vadd.f32 %v173, 1e-05
  %v176 = vrsqrt.pop %v174
  %v177 = vrsqrt.pop %v175
  %v178 = vmul.f32 %v146, %v176
  %v179 = vmul.f32 %v147, %v177
  %v180 = vmul.f32 %v154, %v178
  %v181 = vmul.f32 %v155, %v179
  %v182 = vsub.f32 %v148, %v180
  %v183 = vsub.f32 %v149, %v181
  %185 = vset.pattern.permute.xlu0 0
  %186 = vperm.xlu0 %185, %v178
  %v187 = vpop.permute.xlu0 %186
  %190 = vset.pattern.permute.xlu0 0
  %191 = vperm.xlu0 %190, %v179
  %v192 = vpop.permute.xlu0 %191
  %v194 = vmul.f32 %v140, %v187
  %v195 = vmul.f32 %v143, %v192
  %197 = vset.pattern.permute.xlu0 0
  %198 = vperm.xlu0 %197, %v182
  %v199 = vpop.permute.xlu0 %198
  %202 = vset.pattern.permute.xlu0 0
  %203 = vperm.xlu0 %202, %v183
  %v204 = vpop.permute.xlu0 %203
  %v206 = vadd.f32 %v194, %v199
  %v207 = vadd.f32 %v195, %v204
  %v208 = vmax.f32 %v206, 0.0
  %v209 = vmax.f32 %v207, 0.0
  %v210 = vpack.c.bf16 %v209, %v208
  %v212 = vunpack.c.l.b16 %v210
  %v213 = vunpack.c.h.b16 %v210
  %v214 = vpack.c.b16 %v212, %v212
  %v215 = vpack.c.b16 %v213, %v213
  %218 = vst [vmem:[%s4] sm:$0xf] %v214
  %219 = vst [vmem:[%s4 + $0x4] sm:$0xf] %v215
  // Predicated region
  $region18: #{dip_forward.18} parent=0 // pred_check
    _
  $region19: #{dip_forward.18} parent=0 // pred_check_branch
    %221 = sbr.rel (0) target = $region21
  $region20: #{dip_forward.18} parent=0 // pred_region
    _
  $region21: #{dip_forward.18} parent=0 // pred_fallthru
    _
  // Predicated region
  $region22: #{dip_forward.18} parent=0 // pred_check
    _
  $region23: #{dip_forward.18} parent=0 // pred_check_branch
    %223 = sbr.rel (0) target = $region25
  $region24: #{dip_forward.18} parent=0 // pred_region
    _
  $region25: #{dip_forward.18} parent=0 // pred_fallthru
    _

// kernel: dip_forward.20
$region0: #{dip_forward.20}
  #allocation0 [shape = 'u32[]', space=smem, size = 0x4, offset = 0x4, fixed_abs, tag = 'smem constant byte address 0x4 - core index']
  #allocation1 [shape = 'u32[144,128]{1,0:T(1,128)}', space=vmem, size = 0x12000, scoped, tag = 'internal scratch']
  %s0 = inlined_call_operand.vmem [shape: bf16[144,32], index: 0, kind: input, shape index: {}]
  %s1 = inlined_call_operand.vmem [shape: bf16[16,144], index: 1, kind: input, shape index: {}]
  %s2 = inlined_call_operand.vmem [shape: f32[16,1], index: 2, kind: input, shape index: {}]
  %s3 = inlined_call_operand.vmem [shape: f32[16,1], index: 3, kind: input, shape index: {}]
  %s4 = inlined_call_operand.vmem [shape: bf16[16,32], index: 4, kind: output, shape index: {}]
  %s5 = sld [smem:[#allocation0]]
  $region26: #{dip_forward.20} parent=0
    _
  %s7 = ssub.s32 1, %s5
  %s8 = scalar_select 0, %s7, %s5
  // Predicated region
  $region2: #{dip_forward.20} parent=0 // pred_check
    _
  $region3: #{dip_forward.20} parent=0 // pred_check_branch
    %10 = sbr.rel (0) target = $region5
  $region4: #{dip_forward.20} parent=0 // pred_region
    _
  $region5: #{dip_forward.20} parent=0 // pred_fallthru
    _
  // Predicated region
  $region6: #{dip_forward.20} parent=0 // pred_check
    _
  $region7: #{dip_forward.20} parent=0 // pred_check_branch
    %12 = sbr.rel (0) target = $region9
  $region8: #{dip_forward.20} parent=0 // pred_region
    _
  $region9: #{dip_forward.20} parent=0 // pred_fallthru
    _
  // Predicated region
  $region10: #{dip_forward.20} parent=0 // pred_check
    _
  $region11: #{dip_forward.20} parent=0 // pred_check_branch
    %14 = sbr.rel (0) target = $region13
  $region12: #{dip_forward.20} parent=0 // pred_region
    _
  $region13: #{dip_forward.20} parent=0 // pred_fallthru
    _
  // Predicated region
  $region14: #{dip_forward.20} parent=0 // pred_check
    _
  $region15: #{dip_forward.20} parent=0 // pred_check_branch
    %16 = sbr.rel (0) target = $region17
  $region16: #{dip_forward.20} parent=0 // pred_region
    _
  $region17: #{dip_forward.20} parent=0 // pred_fallthru
    _
  %v18 = vld [vmem:[%s1] sm:$0xff]
  %v19 = vld [vmem:[%s1 + $0x8] sm:$0xff]
  %v20 = vld [vmem:[%s0] sm:$0xf]
  %v21 = vld [vmem:[%s0 + $0x4] sm:$0xf]
  %v22 = vld [vmem:[%s0 + $0x8] sm:$0xf]
  %v23 = vld [vmem:[%s0 + $0xc] sm:$0xf]
  %v24 = vld [vmem:[%s0 + $0x10] sm:$0xf]
  %v25 = vld [vmem:[%s0 + $0x14] sm:$0xf]
  %v26 = vld [vmem:[%s0 + $0x18] sm:$0xf]
  %v27 = vld [vmem:[%s0 + $0x1c] sm:$0xf]
  %v28 = vld [vmem:[%s0 + $0x20] sm:$0xf]
  %v29 = vld [vmem:[%s0 + $0x24] sm:$0xf]
  %v30 = vld [vmem:[%s0 + $0x28] sm:$0xf]
  %v31 = vld [vmem:[%s0 + $0x2c] sm:$0xf]
  %v32 = vld [vmem:[%s0 + $0x30] sm:$0xf]
  %v33 = vld [vmem:[%s0 + $0x34] sm:$0xf]
  %v34 = vld [vmem:[%s0 + $0x38] sm:$0xf]
  %v35 = vld [vmem:[%s0 + $0x3c] sm:$0xf]
  %v36 = vld [vmem:[%s0 + $0x40] sm:$0xf]
  %v37 = vld [vmem:[%s0 + $0x44] sm:$0xf]
  %v40 = vunpack.c.l.b16 %v18
  %v41 = vunpack.c.h.b16 %v18
  %v42 = vunpack.c.l.b16 %v19
  %v43 = vunpack.c.h.b16 %v19
  %v44 = vpack.c.b16 %v42, %v40
  %v45 = vpack.c.b16 %v43, %v41
  %v65 = vunpack.c.l.b16 %v20
  %v66 = vunpack.c.l.b16 %v21
  %v67 = vunpack.c.l.b16 %v22
  %v68 = vunpack.c.l.b16 %v23
  %v69 = vunpack.c.l.b16 %v24
  %v70 = vunpack.c.l.b16 %v25
  %v71 = vunpack.c.l.b16 %v26
  %v72 = vunpack.c.l.b16 %v27
  %v73 = vunpack.c.l.b16 %v28
  %v74 = vunpack.c.l.b16 %v29
  %v75 = vunpack.c.l.b16 %v30
  %v76 = vunpack.c.l.b16 %v31
  %v77 = vunpack.c.l.b16 %v32
  %v78 = vunpack.c.l.b16 %v33
  %v79 = vunpack.c.l.b16 %v34
  %v80 = vunpack.c.l.b16 %v35
  %v81 = vunpack.c.l.b16 %v36
  %v82 = vunpack.c.l.b16 %v37
  %v83 = vpack.c.b16 %v66, %v65
  %v84 = vpack.c.b16 %v68, %v67
  %v85 = vpack.c.b16 %v70, %v69
  %v86 = vpack.c.b16 %v72, %v71
  %v87 = vpack.c.b16 %v74, %v73
  %v88 = vpack.c.b16 %v76, %v75
  %v89 = vpack.c.b16 %v78, %v77
  %v90 = vpack.c.b16 %v80, %v79
  %v91 = vpack.c.b16 %v82, %v81
  %vm101 = vcmask 130048
  %v103 = vsel %vm101, %v45, 0
  %105 = vmatprep.subr.bf16.mxu0 0
  %106 = vmatpush1.bf16.msra.mxu0 %v83
  %107 = vmatprep.subr.bf16.mxu0 0
  %108 = vmatpush1.bf16.msra.mxu0 %v84
  %109 = vmatprep.subr.bf16.mxu0 0
  %110 = vmatpush1.bf16.msra.mxu0 %v85
  %111 = vmatprep.subr.bf16.mxu0 0
  %112 = vmatpush1.bf16.msra.mxu0 %v86
  %113 = vmatprep.subr.bf16.mxu0 0
  %114 = vmatpush1.bf16.msra.mxu0 %v87
  %115 = vmatprep.subr.bf16.mxu0 0
  %116 = vmatpush1.bf16.msra.mxu0 %v88
  %117 = vmatprep.subr.bf16.mxu0 0
  %118 = vmatpush1.bf16.msra.mxu0 %v89
  %119 = vmatprep.subr.bf16.mxu0 0
  %120 = vmatpush1.bf16.msra.mxu0 %v90
  %121 = vmatprep.subr.bf16.mxu0 0
  %122 = vmatpush1.bf16.msra.mxu0 %v91
  %123 = vmatprep.subr.bf16.mxu0 0
  %124 = vmatpush1.bf16.msra.mxu0 0
  %125 = vmatprep.subr.bf16.mxu0 0
  %126 = vmatpush1.bf16.msra.mxu0 0
  %127 = vmatprep.subr.bf16.mxu0 0
  %128 = vmatpush1.bf16.msra.mxu0 0
  %129 = vmatprep.subr.bf16.mxu0 0
  %130 = vmatpush1.bf16.msra.mxu0 0
  %131 = vmatprep.subr.bf16.mxu0 0
  %132 = vmatpush1.bf16.msra.mxu0 0
  %133 = vmatprep.subr.bf16.mxu0 0
  %134 = vmatpush1.bf16.msra.mxu0 0
  %135 = vmatprep.subr.bf16.mxu0 0
  %136 = vmatpush1.bf16.msra.mxu0 0
  %137 = vmatprep.mubr.bf16.mxu0 %v103
  %138 = vmatmul.mubr.bf16.gmra.mrb[0].mxu0 %v44
  %v139 = vpop.f32.mrb[0].mxu0
  %v140 = vadd.f32 0.0, %v139
  %v141 = vpop.f32.mrb[0].mxu0
  %v142 = vpop.f32.mrb[0].mxu0
  %v143 = vadd.f32 0.0, %v142
  %v144 = vpop.f32.mrb[0].mxu0
  %145 = vdwg.mxu0
  %v146 = vld [vmem:[%s2] sm:$0xff]
  %v147 = vld [vmem:[%s2 + $0x8] sm:$0xff]
  %v148 = vld [vmem:[%s3] sm:$0xff]
  %v149 = vld [vmem:[%s3 + $0x8] sm:$0xff]
  %vm150 = vcmask 261120
  %v151 = vsel %vm150, %v140, 0.0
  %152 = vadd.xlane.f32.xlu0 %v151
  %v153 = vpop.xlane.xlu0 %152
  %v154 = vsel %vm150, %v143, 0.0
  %155 = vadd.xlane.f32.xlu0 %v154
  %v156 = vpop.xlane.xlu0 %155
  %v157 = vmul.f32 %v153, 0.03125
  %v158 = vmul.f32 %v156, 0.03125
  %v159 = vsub.f32 %v140, %v157
  %v160 = vsub.f32 %v143, %v158
  %v161 = vmul.f32 %v159, %v159
  %v162 = vmul.f32 %v160, %v160
  %v163 = vsel %vm150, %v161, 0.0
  %164 = vadd.xlane.f32.xlu0 %v163
  %v165 = vpop.xlane.xlu0 %164
  %v166 = vsel %vm150, %v162, 0.0
  %167 = vadd.xlane.f32.xlu0 %v166
  %v168 = vpop.xlane.xlu0 %167
  %v169 = vmul.f32 %v157, 0.0
  %v170 = vmul.f32 %v158, 0.0
  %v171 = vmul.f32 %v169, %v157
  %v172 = vmul.f32 %v170, %v158
  %v173 = vsub.f32 %v165, %v171
  %v174 = vsub.f32 %v168, %v172
  %v175 = vmul.f32 %v173, 0.03125
  %v176 = vmul.f32 %v174, 0.03125
  %v177 = vmax.f32 %v175, 0.0
  %v178 = vmax.f32 %v176, 0.0
  %v179 = vadd.f32 %v177, 1e-05
  %v180 = vadd.f32 %v178, 1e-05
  %v181 = vrsqrt.pop %v179
  %v182 = vrsqrt.pop %v180
  %v183 = vmul.f32 %v146, %v181
  %v184 = vmul.f32 %v147, %v182
  %v185 = vmul.f32 %v157, %v183
  %v186 = vmul.f32 %v158, %v184
  %v187 = vsub.f32 %v148, %v185
  %v188 = vsub.f32 %v149, %v186
  %190 = vset.pattern.permute.xlu0 0
  %191 = vperm.xlu0 %190, %v183
  %v192 = vpop.permute.xlu0 %191
  %195 = vset.pattern.permute.xlu0 0
  %196 = vperm.xlu0 %195, %v184
  %v197 = vpop.permute.xlu0 %196
  %v199 = vmul.f32 %v140, %v192
  %v200 = vmul.f32 %v143, %v197
  %202 = vset.pattern.permute.xlu0 0
  %203 = vperm.xlu0 %202, %v187
  %v204 = vpop.permute.xlu0 %203
  %207 = vset.pattern.permute.xlu0 0
  %208 = vperm.xlu0 %207, %v188
  %v209 = vpop.permute.xlu0 %208
  %v211 = vadd.f32 %v199, %v204
  %v212 = vadd.f32 %v200, %v209
  %v213 = vmax.f32 %v211, 0.0
  %v214 = vmax.f32 %v212, 0.0
  %v215 = vpack.c.bf16 %v214, %v213
  %v217 = vunpack.c.l.b16 %v215
  %v218 = vunpack.c.h.b16 %v215
  %v219 = vpack.c.b16 %v217, %v217
  %v220 = vpack.c.b16 %v218, %v218
  %vm223 = vcmask 257024
  %224 = vst.msk [vmem:[%s4] sm:$0xf] %vm223, %v219
  %225 = vst.msk [vmem:[%s4 + $0x4] sm:$0xf] %vm223, %v220
  // Predicated region
  $region18: #{dip_forward.20} parent=0 // pred_check
    _
  $region19: #{dip_forward.20} parent=0 // pred_check_branch
    %227 = sbr.rel (0) target = $region21
  $region20: #{dip_forward.20} parent=0 // pred_region
    _
  $region21: #{dip_forward.20} parent=0 // pred_fallthru
    _
  // Predicated region
  $region22: #{dip_forward.20} parent=0 // pred_check
    _
  $region23: #{dip_forward.20} parent=0 // pred_check_branch
    %229 = sbr.rel (0) target = $region25
  $region24: #{dip_forward.20} parent=0 // pred_region
    _
  $region25: #{dip_forward.20} parent=0 // pred_fallthru
    _

// kernel: dip_forward.22
$region0: #{dip_forward.22}
  #allocation0 [shape = 'u32[]', space=smem, size = 0x4, offset = 0x4, fixed_abs, tag = 'smem constant byte address 0x4 - core index']
  #allocation1 [shape = 'u32[144,128]{1,0:T(1,128)}', space=vmem, size = 0x12000, scoped, tag = 'internal scratch']
  %s0 = inlined_call_operand.vmem [shape: bf16[16,32], index: 0, kind: input, shape index: {}]
  %s1 = inlined_call_operand.vmem [shape: bf16[4,16], index: 1, kind: input, shape index: {}]
  %s2 = inlined_call_operand.vmem [shape: f32[4,1], index: 2, kind: input, shape index: {}]
  %s3 = inlined_call_operand.vmem [shape: f32[4,1], index: 3, kind: input, shape index: {}]
  %s4 = inlined_call_operand.vmem [shape: bf16[4,32], index: 4, kind: output, shape index: {}]
  %s5 = sld [smem:[#allocation0]]
  $region26: #{dip_forward.22} parent=0
    _
  %s7 = ssub.s32 1, %s5
  %s8 = scalar_select 0, %s7, %s5
  // Predicated region
  $region2: #{dip_forward.22} parent=0 // pred_check
    _
  $region3: #{dip_forward.22} parent=0 // pred_check_branch
    %10 = sbr.rel (0) target = $region5
  $region4: #{dip_forward.22} parent=0 // pred_region
    _
  $region5: #{dip_forward.22} parent=0 // pred_fallthru
    _
  // Predicated region
  $region6: #{dip_forward.22} parent=0 // pred_check
    _
  $region7: #{dip_forward.22} parent=0 // pred_check_branch
    %12 = sbr.rel (0) target = $region9
  $region8: #{dip_forward.22} parent=0 // pred_region
    _
  $region9: #{dip_forward.22} parent=0 // pred_fallthru
    _
  // Predicated region
  $region10: #{dip_forward.22} parent=0 // pred_check
    _
  $region11: #{dip_forward.22} parent=0 // pred_check_branch
    %14 = sbr.rel (0) target = $region13
  $region12: #{dip_forward.22} parent=0 // pred_region
    _
  $region13: #{dip_forward.22} parent=0 // pred_fallthru
    _
  // Predicated region
  $region14: #{dip_forward.22} parent=0 // pred_check
    _
  $region15: #{dip_forward.22} parent=0 // pred_check_branch
    %16 = sbr.rel (0) target = $region17
  $region16: #{dip_forward.22} parent=0 // pred_region
    _
  $region17: #{dip_forward.22} parent=0 // pred_fallthru
    _
  %v18 = vld [vmem:[%s1] sm:$0x3]
  %v19 = vld [vmem:[%s0] sm:$0xf]
  %v20 = vld [vmem:[%s0 + $0x4] sm:$0xf]
  %v23 = vunpack.c.l.b16 %v19
  %v24 = vunpack.c.l.b16 %v20
  %v25 = vpack.c.b16 %v24, %v23
  %vm27 = vcmask 130048
  %v29 = vsel %vm27, %v18, 0
  %31 = vmatprep.subr.bf16.mxu0 0
  %32 = vmatpush1.bf16.msra.mxu0 %v25
  %33 = vmatprep.subr.bf16.mxu0 0
  %34 = vmatpush1.bf16.msra.mxu0 0
  %35 = vmatprep.subr.bf16.mxu0 0
  %36 = vmatpush1.bf16.msra.mxu0 0
  %37 = vmatprep.subr.bf16.mxu0 0
  %38 = vmatpush1.bf16.msra.mxu0 0
  %39 = vmatprep.subr.bf16.mxu0 0
  %40 = vmatpush1.bf16.msra.mxu0 0
  %41 = vmatprep.subr.bf16.mxu0 0
  %42 = vmatpush1.bf16.msra.mxu0 0
  %43 = vmatprep.subr.bf16.mxu0 0
  %44 = vmatpush1.bf16.msra.mxu0 0
  %45 = vmatprep.subr.bf16.mxu0 0
  %46 = vmatpush1.bf16.msra.mxu0 0
  %47 = vmatprep.subr.bf16.mxu0 0
  %48 = vmatpush1.bf16.msra.mxu0 0
  %49 = vmatprep.subr.bf16.mxu0 0
  %50 = vmatpush1.bf16.msra.mxu0 0
  %51 = vmatprep.subr.bf16.mxu0 0
  %52 = vmatpush1.bf16.msra.mxu0 0
  %53 = vmatprep.subr.bf16.mxu0 0
  %54 = vmatpush1.bf16.msra.mxu0 0
  %55 = vmatprep.subr.bf16.mxu0 0
  %56 = vmatpush1.bf16.msra.mxu0 0
  %57 = vmatprep.subr.bf16.mxu0 0
  %58 = vmatpush1.bf16.msra.mxu0 0
  %59 = vmatprep.subr.bf16.mxu0 0
  %60 = vmatpush1.bf16.msra.mxu0 0
  %61 = vmatprep.subr.bf16.mxu0 0
  %62 = vmatpush1.bf16.msra.mxu0 0
  %63 = vmatprep.mubr.bf16.mxu0 0
  %64 = vmatmul.mubr.bf16.gmra.mrb[0].mxu0 %v29
  %v65 = vpop.f32.mrb[0].mxu0
  %v66 = vadd.f32 0.0, %v65
  %v67 = vpop.f32.mrb[0].mxu0
  %v68 = vpop.f32.mrb[0].mxu0
  %v69 = vpop.f32.mrb[0].mxu0
  %70 = vdwg.mxu0
  %v71 = vld [vmem:[%s2] sm:$0xf]
  %v72 = vld [vmem:[%s3] sm:$0xf]
  %vm73 = vcmask 257024
  %v74 = vsel %vm73, %v66, 0.0
  %75 = vadd.xlane.f32.xlu0 %v74
  %v76 = vpop.xlane.xlu0 %75
  %v77 = vmul.f32 %v76, 0.03125
  %v78 = vsub.f32 %v66, %v77
  %v79 = vmul.f32 %v78, %v78
  %v80 = vsel %vm73, %v79, 0.0
  %81 = vadd.xlane.f32.xlu0 %v80
  %v82 = vpop.xlane.xlu0 %81
  %v83 = vmul.f32 %v77, 0.0
  %v84 = vmul.f32 %v83, %v77
  %v85 = vsub.f32 %v82, %v84
  %v86 = vmul.f32 %v85, 0.03125
  %v87 = vmax.f32 %v86, 0.0
  %v88 = vadd.f32 %v87, 1e-05
  %v89 = vrsqrt.pop %v88
  %v90 = vmul.f32 %v71, %v89
  %v91 = vmul.f32 %v77, %v90
  %v92 = vsub.f32 %v72, %v91
  %94 = vset.pattern.permute.xlu0 0
  %95 = vperm.xlu0 %94, %v90
  %v96 = vpop.permute.xlu0 %95
  %v98 = vmul.f32 %v66, %v96
  %100 = vset.pattern.permute.xlu0 0
  %101 = vperm.xlu0 %100, %v92
  %v102 = vpop.permute.xlu0 %101
  %v104 = vadd.f32 %v98, %v102
  %v105 = vmax.f32 %v104, 0.0
  %v106 = vpack.c.bf16 %v105, %v105
  %vm107 = vcmask 254976
  %108 = vst.msk [vmem:[%s4] sm:$0x3] %vm107, %v106
  // Predicated region
  $region18: #{dip_forward.22} parent=0 // pred_check
    _
  $region19: #{dip_forward.22} parent=0 // pred_check_branch
    %110 = sbr.rel (0) target = $region21
  $region20: #{dip_forward.22} parent=0 // pred_region
    _
  $region21: #{dip_forward.22} parent=0 // pred_fallthru
    _
  // Predicated region
  $region22: #{dip_forward.22} parent=0 // pred_check
    _
  $region23: #{dip_forward.22} parent=0 // pred_check_branch
    %112 = sbr.rel (0) target = $region25
  $region24: #{dip_forward.22} parent=0 // pred_region
    _
  $region25: #{dip_forward.22} parent=0 // pred_fallthru
    _

// kernel: dip_forward.23
$region0: #{dip_forward.23}
  #allocation0 [shape = 'u32[]', space=smem, size = 0x4, offset = 0x4, fixed_abs, tag = 'smem constant byte address 0x4 - core index']
  #allocation1 [shape = 'u32[144,128]{1,0:T(1,128)}', space=vmem, size = 0x12000, scoped, tag = 'internal scratch']
  %s0 = inlined_call_operand.vmem [shape: bf16[144,8], index: 0, kind: input, shape index: {}]
  %s1 = inlined_call_operand.vmem [shape: bf16[16,144], index: 1, kind: input, shape index: {}]
  %s2 = inlined_call_operand.vmem [shape: f32[16,1], index: 2, kind: input, shape index: {}]
  %s3 = inlined_call_operand.vmem [shape: f32[16,1], index: 3, kind: input, shape index: {}]
  %s4 = inlined_call_operand.vmem [shape: bf16[16,8], index: 4, kind: output, shape index: {}]
  %s5 = sld [smem:[#allocation0]]
  $region26: #{dip_forward.23} parent=0
    _
  %s7 = ssub.s32 1, %s5
  %s8 = scalar_select 0, %s7, %s5
  // Predicated region
  $region2: #{dip_forward.23} parent=0 // pred_check
    _
  $region3: #{dip_forward.23} parent=0 // pred_check_branch
    %10 = sbr.rel (0) target = $region5
  $region4: #{dip_forward.23} parent=0 // pred_region
    _
  $region5: #{dip_forward.23} parent=0 // pred_fallthru
    _
  // Predicated region
  $region6: #{dip_forward.23} parent=0 // pred_check
    _
  $region7: #{dip_forward.23} parent=0 // pred_check_branch
    %12 = sbr.rel (0) target = $region9
  $region8: #{dip_forward.23} parent=0 // pred_region
    _
  $region9: #{dip_forward.23} parent=0 // pred_fallthru
    _
  // Predicated region
  $region10: #{dip_forward.23} parent=0 // pred_check
    _
  $region11: #{dip_forward.23} parent=0 // pred_check_branch
    %14 = sbr.rel (0) target = $region13
  $region12: #{dip_forward.23} parent=0 // pred_region
    _
  $region13: #{dip_forward.23} parent=0 // pred_fallthru
    _
  // Predicated region
  $region14: #{dip_forward.23} parent=0 // pred_check
    _
  $region15: #{dip_forward.23} parent=0 // pred_check_branch
    %16 = sbr.rel (0) target = $region17
  $region16: #{dip_forward.23} parent=0 // pred_region
    _
  $region17: #{dip_forward.23} parent=0 // pred_fallthru
    _
  %v18 = vld [vmem:[%s1] sm:$0xff]
  %v19 = vld [vmem:[%s1 + $0x8] sm:$0xff]
  %v20 = vld [vmem:[%s0] sm:$0xf]
  %v21 = vld [vmem:[%s0 + $0x4] sm:$0xf]
  %v22 = vld [vmem:[%s0 + $0x8] sm:$0xf]
  %v23 = vld [vmem:[%s0 + $0xc] sm:$0xf]
  %v24 = vld [vmem:[%s0 + $0x10] sm:$0xf]
  %v25 = vld [vmem:[%s0 + $0x14] sm:$0xf]
  %v26 = vld [vmem:[%s0 + $0x18] sm:$0xf]
  %v27 = vld [vmem:[%s0 + $0x1c] sm:$0xf]
  %v28 = vld [vmem:[%s0 + $0x20] sm:$0xf]
  %v29 = vld [vmem:[%s0 + $0x24] sm:$0xf]
  %v30 = vld [vmem:[%s0 + $0x28] sm:$0xf]
  %v31 = vld [vmem:[%s0 + $0x2c] sm:$0xf]
  %v32 = vld [vmem:[%s0 + $0x30] sm:$0xf]
  %v33 = vld [vmem:[%s0 + $0x34] sm:$0xf]
  %v34 = vld [vmem:[%s0 + $0x38] sm:$0xf]
  %v35 = vld [vmem:[%s0 + $0x3c] sm:$0xf]
  %v36 = vld [vmem:[%s0 + $0x40] sm:$0xf]
  %v37 = vld [vmem:[%s0 + $0x44] sm:$0xf]
  %v40 = vunpack.c.l.b16 %v18
  %v41 = vunpack.c.h.b16 %v18
  %v42 = vunpack.c.l.b16 %v19
  %v43 = vunpack.c.h.b16 %v19
  %v44 = vpack.c.b16 %v42, %v40
  %v45 = vpack.c.b16 %v43, %v41
  %v65 = vunpack.c.l.b16 %v20
  %v66 = vunpack.c.l.b16 %v21
  %v67 = vunpack.c.l.b16 %v22
  %v68 = vunpack.c.l.b16 %v23
  %v69 = vunpack.c.l.b16 %v24
  %v70 = vunpack.c.l.b16 %v25
  %v71 = vunpack.c.l.b16 %v26
  %v72 = vunpack.c.l.b16 %v27
  %v73 = vunpack.c.l.b16 %v28
  %v74 = vunpack.c.l.b16 %v29
  %v75 = vunpack.c.l.b16 %v30
  %v76 = vunpack.c.l.b16 %v31
  %v77 = vunpack.c.l.b16 %v32
  %v78 = vunpack.c.l.b16 %v33
  %v79 = vunpack.c.l.b16 %v34
  %v80 = vunpack.c.l.b16 %v35
  %v81 = vunpack.c.l.b16 %v36
  %v82 = vunpack.c.l.b16 %v37
  %v83 = vpack.c.b16 %v66, %v65
  %v84 = vpack.c.b16 %v68, %v67
  %v85 = vpack.c.b16 %v70, %v69
  %v86 = vpack.c.b16 %v72, %v71
  %v87 = vpack.c.b16 %v74, %v73
  %v88 = vpack.c.b16 %v76, %v75
  %v89 = vpack.c.b16 %v78, %v77
  %v90 = vpack.c.b16 %v80, %v79
  %v91 = vpack.c.b16 %v82, %v81
  %vm101 = vcmask 130048
  %v103 = vsel %vm101, %v45, 0
  %105 = vmatprep.subr.bf16.mxu0 0
  %106 = vmatpush1.bf16.msra.mxu0 %v83
  %107 = vmatprep.subr.bf16.mxu0 0
  %108 = vmatpush1.bf16.msra.mxu0 %v84
  %109 = vmatprep.subr.bf16.mxu0 0
  %110 = vmatpush1.bf16.msra.mxu0 %v85
  %111 = vmatprep.subr.bf16.mxu0 0
  %112 = vmatpush1.bf16.msra.mxu0 %v86
  %113 = vmatprep.subr.bf16.mxu0 0
  %114 = vmatpush1.bf16.msra.mxu0 %v87
  %115 = vmatprep.subr.bf16.mxu0 0
  %116 = vmatpush1.bf16.msra.mxu0 %v88
  %117 = vmatprep.subr.bf16.mxu0 0
  %118 = vmatpush1.bf16.msra.mxu0 %v89
  %119 = vmatprep.subr.bf16.mxu0 0
  %120 = vmatpush1.bf16.msra.mxu0 %v90
  %121 = vmatprep.subr.bf16.mxu0 0
  %122 = vmatpush1.bf16.msra.mxu0 %v91
  %123 = vmatprep.subr.bf16.mxu0 0
  %124 = vmatpush1.bf16.msra.mxu0 0
  %125 = vmatprep.subr.bf16.mxu0 0
  %126 = vmatpush1.bf16.msra.mxu0 0
  %127 = vmatprep.subr.bf16.mxu0 0
  %128 = vmatpush1.bf16.msra.mxu0 0
  %129 = vmatprep.subr.bf16.mxu0 0
  %130 = vmatpush1.bf16.msra.mxu0 0
  %131 = vmatprep.subr.bf16.mxu0 0
  %132 = vmatpush1.bf16.msra.mxu0 0
  %133 = vmatprep.subr.bf16.mxu0 0
  %134 = vmatpush1.bf16.msra.mxu0 0
  %135 = vmatprep.subr.bf16.mxu0 0
  %136 = vmatpush1.bf16.msra.mxu0 0
  %137 = vmatprep.mubr.bf16.mxu0 %v103
  %138 = vmatmul.mubr.bf16.gmra.mrb[0].mxu0 %v44
  %v139 = vpop.f32.mrb[0].mxu0
  %v140 = vadd.f32 0.0, %v139
  %v141 = vpop.f32.mrb[0].mxu0
  %v142 = vpop.f32.mrb[0].mxu0
  %v143 = vadd.f32 0.0, %v142
  %v144 = vpop.f32.mrb[0].mxu0
  %145 = vdwg.mxu0
  %v146 = vld [vmem:[%s2] sm:$0xff]
  %v147 = vld [vmem:[%s2 + $0x8] sm:$0xff]
  %v148 = vld [vmem:[%s3] sm:$0xff]
  %v149 = vld [vmem:[%s3 + $0x8] sm:$0xff]
  %vm150 = vcmask 64512
  %v151 = vsel %vm150, %v140, 0.0
  %152 = vadd.xlane.f32.xlu0 %v151
  %v153 = vpop.xlane.xlu0 %152
  %v154 = vsel %vm150, %v143, 0.0
  %155 = vadd.xlane.f32.xlu0 %v154
  %v156 = vpop.xlane.xlu0 %155
  %v157 = vmul.f32 %v153, 0.125
  %v158 = vmul.f32 %v156, 0.125
  %v159 = vsub.f32 %v140, %v157
  %v160 = vsub.f32 %v143, %v158
  %v161 = vmul.f32 %v159, %v159
  %v162 = vmul.f32 %v160, %v160
  %v163 = vsel %vm150, %v161, 0.0
  %164 = vadd.xlane.f32.xlu0 %v163
  %v165 = vpop.xlane.xlu0 %164
  %v166 = vsel %vm150, %v162, 0.0
  %167 = vadd.xlane.f32.xlu0 %v166
  %v168 = vpop.xlane.xlu0 %167
  %v169 = vmul.f32 %v157, 0.0
  %v170 = vmul.f32 %v158, 0.0
  %v171 = vmul.f32 %v169, %v157
  %v172 = vmul.f32 %v170, %v158
  %v173 = vsub.f32 %v165, %v171
  %v174 = vsub.f32 %v168, %v172
  %v175 = vmul.f32 %v173, 0.125
  %v176 = vmul.f32 %v174, 0.125
  %v177 = vmax.f32 %v175, 0.0
  %v178 = vmax.f32 %v176, 0.0
  %v179 = vadd.f32 %v177, 1e-05
  %v180 = vadd.f32 %v178, 1e-05
  %v181 = vrsqrt.pop %v179
  %v182 = vrsqrt.pop %v180
  %v183 = vmul.f32 %v146, %v181
  %v184 = vmul.f32 %v147, %v182
  %v185 = vmul.f32 %v157, %v183
  %v186 = vmul.f32 %v158, %v184
  %v187 = vsub.f32 %v148, %v185
  %v188 = vsub.f32 %v149, %v186
  %190 = vset.pattern.permute.xlu0 0
  %191 = vperm.xlu0 %190, %v183
  %v192 = vpop.permute.xlu0 %191
  %195 = vset.pattern.permute.xlu0 0
  %196 = vperm.xlu0 %195, %v184
  %v197 = vpop.permute.xlu0 %196
  %v199 = vmul.f32 %v140, %v192
  %v200 = vmul.f32 %v143, %v197
  %202 = vset.pattern.permute.xlu0 0
  %203 = vperm.xlu0 %202, %v187
  %v204 = vpop.permute.xlu0 %203
  %207 = vset.pattern.permute.xlu0 0
  %208 = vperm.xlu0 %207, %v188
  %v209 = vpop.permute.xlu0 %208
  %v211 = vadd.f32 %v199, %v204
  %v212 = vadd.f32 %v200, %v209
  %v213 = vmax.f32 %v211, 0.0
  %v214 = vmax.f32 %v212, 0.0
  %v215 = vpack.c.bf16 %v214, %v213
  %v217 = vunpack.c.l.b16 %v215
  %v218 = vunpack.c.h.b16 %v215
  %v219 = vpack.c.b16 %v217, %v217
  %v220 = vpack.c.b16 %v218, %v218
  %vm223 = vcmask 60416
  %224 = vst.msk [vmem:[%s4] sm:$0xf] %vm223, %v219
  %225 = vst.msk [vmem:[%s4 + $0x4] sm:$0xf] %vm223, %v220
  // Predicated region
  $region18: #{dip_forward.23} parent=0 // pred_check
    _
  $region19: #{dip_forward.23} parent=0 // pred_check_branch
    %227 = sbr.rel (0) target = $region21
  $region20: #{dip_forward.23} parent=0 // pred_region
    _
  $region21: #{dip_forward.23} parent=0 // pred_fallthru
    _
  // Predicated region
  $region22: #{dip_forward.23} parent=0 // pred_check
    _
  $region23: #{dip_forward.23} parent=0 // pred_check_branch
    %229 = sbr.rel (0) target = $region25
  $region24: #{dip_forward.23} parent=0 // pred_region
    _
  $region25: #{dip_forward.23} parent=0 // pred_fallthru
    _

// kernel: dip_forward.26
$region0: #{dip_forward.26}
  #allocation0 [shape = 'u32[]', space=smem, size = 0x4, offset = 0x4, fixed_abs, tag = 'smem constant byte address 0x4 - core index']
  #allocation1 [shape = 'u32[144,128]{1,0:T(1,128)}', space=vmem, size = 0x12000, scoped, tag = 'internal scratch']
  %s0 = inlined_call_operand.vmem [shape: bf16[16,8], index: 0, kind: input, shape index: {}]
  %s1 = inlined_call_operand.vmem [shape: bf16[16,16], index: 1, kind: input, shape index: {}]
  %s2 = inlined_call_operand.vmem [shape: f32[16,1], index: 2, kind: input, shape index: {}]
  %s3 = inlined_call_operand.vmem [shape: f32[16,1], index: 3, kind: input, shape index: {}]
  %s4 = inlined_call_operand.vmem [shape: bf16[16,8], index: 4, kind: output, shape index: {}]
  %s5 = sld [smem:[#allocation0]]
  $region26: #{dip_forward.26} parent=0
    _
  %s7 = ssub.s32 1, %s5
  %s8 = scalar_select 0, %s7, %s5
  // Predicated region
  $region2: #{dip_forward.26} parent=0 // pred_check
    _
  $region3: #{dip_forward.26} parent=0 // pred_check_branch
    %10 = sbr.rel (0) target = $region5
  $region4: #{dip_forward.26} parent=0 // pred_region
    _
  $region5: #{dip_forward.26} parent=0 // pred_fallthru
    _
  // Predicated region
  $region6: #{dip_forward.26} parent=0 // pred_check
    _
  $region7: #{dip_forward.26} parent=0 // pred_check_branch
    %12 = sbr.rel (0) target = $region9
  $region8: #{dip_forward.26} parent=0 // pred_region
    _
  $region9: #{dip_forward.26} parent=0 // pred_fallthru
    _
  // Predicated region
  $region10: #{dip_forward.26} parent=0 // pred_check
    _
  $region11: #{dip_forward.26} parent=0 // pred_check_branch
    %14 = sbr.rel (0) target = $region13
  $region12: #{dip_forward.26} parent=0 // pred_region
    _
  $region13: #{dip_forward.26} parent=0 // pred_fallthru
    _
  // Predicated region
  $region14: #{dip_forward.26} parent=0 // pred_check
    _
  $region15: #{dip_forward.26} parent=0 // pred_check_branch
    %16 = sbr.rel (0) target = $region17
  $region16: #{dip_forward.26} parent=0 // pred_region
    _
  $region17: #{dip_forward.26} parent=0 // pred_fallthru
    _
  %v18 = vld [vmem:[%s1] sm:$0xf]
  %v19 = vld [vmem:[%s1 + $0x4] sm:$0xf]
  %v20 = vld [vmem:[%s0] sm:$0xf]
  %v21 = vld [vmem:[%s0 + $0x4] sm:$0xf]
  %v24 = vunpack.c.l.b16 %v18
  %v25 = vunpack.c.l.b16 %v19
  %v26 = vpack.c.b16 %v25, %v24
  %v29 = vunpack.c.l.b16 %v20
  %v30 = vunpack.c.l.b16 %v21
  %v31 = vpack.c.b16 %v30, %v29
  %vm33 = vcmask 130048
  %v35 = vsel %vm33, %v26, 0
  %37 = vmatprep.subr.bf16.mxu0 0
  %38 = vmatpush1.bf16.msra.mxu0 %v31
  %39 = vmatprep.subr.bf16.mxu0 0
  %40 = vmatpush1.bf16.msra.mxu0 0
  %41 = vmatprep.subr.bf16.mxu0 0
  %42 = vmatpush1.bf16.msra.mxu0 0
  %43 = vmatprep.subr.bf16.mxu0 0
  %44 = vmatpush1.bf16.msra.mxu0 0
  %45 = vmatprep.subr.bf16.mxu0 0
  %46 = vmatpush1.bf16.msra.mxu0 0
  %47 = vmatprep.subr.bf16.mxu0 0
  %48 = vmatpush1.bf16.msra.mxu0 0
  %49 = vmatprep.subr.bf16.mxu0 0
  %50 = vmatpush1.bf16.msra.mxu0 0
  %51 = vmatprep.subr.bf16.mxu0 0
  %52 = vmatpush1.bf16.msra.mxu0 0
  %53 = vmatprep.subr.bf16.mxu0 0
  %54 = vmatpush1.bf16.msra.mxu0 0
  %55 = vmatprep.subr.bf16.mxu0 0
  %56 = vmatpush1.bf16.msra.mxu0 0
  %57 = vmatprep.subr.bf16.mxu0 0
  %58 = vmatpush1.bf16.msra.mxu0 0
  %59 = vmatprep.subr.bf16.mxu0 0
  %60 = vmatpush1.bf16.msra.mxu0 0
  %61 = vmatprep.subr.bf16.mxu0 0
  %62 = vmatpush1.bf16.msra.mxu0 0
  %63 = vmatprep.subr.bf16.mxu0 0
  %64 = vmatpush1.bf16.msra.mxu0 0
  %65 = vmatprep.subr.bf16.mxu0 0
  %66 = vmatpush1.bf16.msra.mxu0 0
  %67 = vmatprep.subr.bf16.mxu0 0
  %68 = vmatpush1.bf16.msra.mxu0 0
  %69 = vmatprep.mubr.bf16.mxu0 0
  %70 = vmatmul.mubr.bf16.gmra.mrb[0].mxu0 %v35
  %v71 = vpop.f32.mrb[0].mxu0
  %v72 = vadd.f32 0.0, %v71
  %v73 = vpop.f32.mrb[0].mxu0
  %v74 = vpop.f32.mrb[0].mxu0
  %v75 = vadd.f32 0.0, %v74
  %v76 = vpop.f32.mrb[0].mxu0
  %77 = vdwg.mxu0
  %v78 = vld [vmem:[%s2] sm:$0xff]
  %v79 = vld [vmem:[%s2 + $0x8] sm:$0xff]
  %v80 = vld [vmem:[%s3] sm:$0xff]
  %v81 = vld [vmem:[%s3 + $0x8] sm:$0xff]
  %vm82 = vcmask 64512
  %v83 = vsel %vm82, %v72, 0.0
  %84 = vadd.xlane.f32.xlu0 %v83
  %v85 = vpop.xlane.xlu0 %84
  %v86 = vsel %vm82, %v75, 0.0
  %87 = vadd.xlane.f32.xlu0 %v86
  %v88 = vpop.xlane.xlu0 %87
  %v89 = vmul.f32 %v85, 0.125
  %v90 = vmul.f32 %v88, 0.125
  %v91 = vsub.f32 %v72, %v89
  %v92 = vsub.f32 %v75, %v90
  %v93 = vmul.f32 %v91, %v91
  %v94 = vmul.f32 %v92, %v92
  %v95 = vsel %vm82, %v93, 0.0
  %96 = vadd.xlane.f32.xlu0 %v95
  %v97 = vpop.xlane.xlu0 %96
  %v98 = vsel %vm82, %v94, 0.0
  %99 = vadd.xlane.f32.xlu0 %v98
  %v100 = vpop.xlane.xlu0 %99
  %v101 = vmul.f32 %v89, 0.0
  %v102 = vmul.f32 %v90, 0.0
  %v103 = vmul.f32 %v101, %v89
  %v104 = vmul.f32 %v102, %v90
  %v105 = vsub.f32 %v97, %v103
  %v106 = vsub.f32 %v100, %v104
  %v107 = vmul.f32 %v105, 0.125
  %v108 = vmul.f32 %v106, 0.125
  %v109 = vmax.f32 %v107, 0.0
  %v110 = vmax.f32 %v108, 0.0
  %v111 = vadd.f32 %v109, 1e-05
  %v112 = vadd.f32 %v110, 1e-05
  %v113 = vrsqrt.pop %v111
  %v114 = vrsqrt.pop %v112
  %v115 = vmul.f32 %v78, %v113
  %v116 = vmul.f32 %v79, %v114
  %v117 = vmul.f32 %v89, %v115
  %v118 = vmul.f32 %v90, %v116
  %v119 = vsub.f32 %v80, %v117
  %v120 = vsub.f32 %v81, %v118
  %122 = vset.pattern.permute.xlu0 0
  %123 = vperm.xlu0 %122, %v115
  %v124 = vpop.permute.xlu0 %123
  %127 = vset.pattern.permute.xlu0 0
  %128 = vperm.xlu0 %127, %v116
  %v129 = vpop.permute.xlu0 %128
  %v131 = vmul.f32 %v72, %v124
  %v132 = vmul.f32 %v75, %v129
  %134 = vset.pattern.permute.xlu0 0
  %135 = vperm.xlu0 %134, %v119
  %v136 = vpop.permute.xlu0 %135
  %139 = vset.pattern.permute.xlu0 0
  %140 = vperm.xlu0 %139, %v120
  %v141 = vpop.permute.xlu0 %140
  %v143 = vadd.f32 %v131, %v136
  %v144 = vadd.f32 %v132, %v141
  %v145 = vmax.f32 %v143, 0.0
  %v146 = vmax.f32 %v144, 0.0
  %v147 = vpack.c.bf16 %v146, %v145
  %v149 = vunpack.c.l.b16 %v147
  %v150 = vunpack.c.h.b16 %v147
  %v151 = vpack.c.b16 %v149, %v149
  %v152 = vpack.c.b16 %v150, %v150
  %vm155 = vcmask 60416
  %156 = vst.msk [vmem:[%s4] sm:$0xf] %vm155, %v151
  %157 = vst.msk [vmem:[%s4 + $0x4] sm:$0xf] %vm155, %v152
  // Predicated region
  $region18: #{dip_forward.26} parent=0 // pred_check
    _
  $region19: #{dip_forward.26} parent=0 // pred_check_branch
    %159 = sbr.rel (0) target = $region21
  $region20: #{dip_forward.26} parent=0 // pred_region
    _
  $region21: #{dip_forward.26} parent=0 // pred_fallthru
    _
  // Predicated region
  $region22: #{dip_forward.26} parent=0 // pred_check
    _
  $region23: #{dip_forward.26} parent=0 // pred_check_branch
    %161 = sbr.rel (0) target = $region25
  $region24: #{dip_forward.26} parent=0 // pred_region
    _
  $region25: #{dip_forward.26} parent=0 // pred_fallthru
    _

// kernel: dip_forward.28
$region0: #{dip_forward.28}
  #allocation0 [shape = 'u32[]', space=smem, size = 0x4, offset = 0x4, fixed_abs, tag = 'smem constant byte address 0x4 - core index']
  #allocation1 [shape = 'u32[144,128]{1,0:T(1,128)}', space=vmem, size = 0x12000, scoped, tag = 'internal scratch']
  %s0 = inlined_call_operand.vmem [shape: bf16[16,32], index: 0, kind: input, shape index: {}]
  %s1 = inlined_call_operand.vmem [shape: bf16[16,16], index: 1, kind: input, shape index: {}]
  %s2 = inlined_call_operand.vmem [shape: f32[16,1], index: 2, kind: input, shape index: {}]
  %s3 = inlined_call_operand.vmem [shape: f32[16,1], index: 3, kind: input, shape index: {}]
  %s4 = inlined_call_operand.vmem [shape: bf16[16,32], index: 4, kind: output, shape index: {}]
  %s5 = sld [smem:[#allocation0]]
  $region26: #{dip_forward.28} parent=0
    _
  %s7 = ssub.s32 1, %s5
  %s8 = scalar_select 0, %s7, %s5
  // Predicated region
  $region2: #{dip_forward.28} parent=0 // pred_check
    _
  $region3: #{dip_forward.28} parent=0 // pred_check_branch
    %10 = sbr.rel (0) target = $region5
  $region4: #{dip_forward.28} parent=0 // pred_region
    _
  $region5: #{dip_forward.28} parent=0 // pred_fallthru
    _
  // Predicated region
  $region6: #{dip_forward.28} parent=0 // pred_check
    _
  $region7: #{dip_forward.28} parent=0 // pred_check_branch
    %12 = sbr.rel (0) target = $region9
  $region8: #{dip_forward.28} parent=0 // pred_region
    _
  $region9: #{dip_forward.28} parent=0 // pred_fallthru
    _
  // Predicated region
  $region10: #{dip_forward.28} parent=0 // pred_check
    _
  $region11: #{dip_forward.28} parent=0 // pred_check_branch
    %14 = sbr.rel (0) target = $region13
  $region12: #{dip_forward.28} parent=0 // pred_region
    _
  $region13: #{dip_forward.28} parent=0 // pred_fallthru
    _
  // Predicated region
  $region14: #{dip_forward.28} parent=0 // pred_check
    _
  $region15: #{dip_forward.28} parent=0 // pred_check_branch
    %16 = sbr.rel (0) target = $region17
  $region16: #{dip_forward.28} parent=0 // pred_region
    _
  $region17: #{dip_forward.28} parent=0 // pred_fallthru
    _
  %v18 = vld [vmem:[%s1] sm:$0xf]
  %v19 = vld [vmem:[%s1 + $0x4] sm:$0xf]
  %v20 = vld [vmem:[%s0] sm:$0xf]
  %v21 = vld [vmem:[%s0 + $0x4] sm:$0xf]
  %v24 = vunpack.c.l.b16 %v18
  %v25 = vunpack.c.l.b16 %v19
  %v26 = vpack.c.b16 %v25, %v24
  %v29 = vunpack.c.l.b16 %v20
  %v30 = vunpack.c.l.b16 %v21
  %v31 = vpack.c.b16 %v30, %v29
  %vm33 = vcmask 130048
  %v35 = vsel %vm33, %v26, 0
  %37 = vmatprep.subr.bf16.mxu0 0
  %38 = vmatpush1.bf16.msra.mxu0 %v31
  %39 = vmatprep.subr.bf16.mxu0 0
  %40 = vmatpush1.bf16.msra.mxu0 0
  %41 = vmatprep.subr.bf16.mxu0 0
  %42 = vmatpush1.bf16.msra.mxu0 0
  %43 = vmatprep.subr.bf16.mxu0 0
  %44 = vmatpush1.bf16.msra.mxu0 0
  %45 = vmatprep.subr.bf16.mxu0 0
  %46 = vmatpush1.bf16.msra.mxu0 0
  %47 = vmatprep.subr.bf16.mxu0 0
  %48 = vmatpush1.bf16.msra.mxu0 0
  %49 = vmatprep.subr.bf16.mxu0 0
  %50 = vmatpush1.bf16.msra.mxu0 0
  %51 = vmatprep.subr.bf16.mxu0 0
  %52 = vmatpush1.bf16.msra.mxu0 0
  %53 = vmatprep.subr.bf16.mxu0 0
  %54 = vmatpush1.bf16.msra.mxu0 0
  %55 = vmatprep.subr.bf16.mxu0 0
  %56 = vmatpush1.bf16.msra.mxu0 0
  %57 = vmatprep.subr.bf16.mxu0 0
  %58 = vmatpush1.bf16.msra.mxu0 0
  %59 = vmatprep.subr.bf16.mxu0 0
  %60 = vmatpush1.bf16.msra.mxu0 0
  %61 = vmatprep.subr.bf16.mxu0 0
  %62 = vmatpush1.bf16.msra.mxu0 0
  %63 = vmatprep.subr.bf16.mxu0 0
  %64 = vmatpush1.bf16.msra.mxu0 0
  %65 = vmatprep.subr.bf16.mxu0 0
  %66 = vmatpush1.bf16.msra.mxu0 0
  %67 = vmatprep.subr.bf16.mxu0 0
  %68 = vmatpush1.bf16.msra.mxu0 0
  %69 = vmatprep.mubr.bf16.mxu0 0
  %70 = vmatmul.mubr.bf16.gmra.mrb[0].mxu0 %v35
  %v71 = vpop.f32.mrb[0].mxu0
  %v72 = vadd.f32 0.0, %v71
  %v73 = vpop.f32.mrb[0].mxu0
  %v74 = vpop.f32.mrb[0].mxu0
  %v75 = vadd.f32 0.0, %v74
  %v76 = vpop.f32.mrb[0].mxu0
  %77 = vdwg.mxu0
  %v78 = vld [vmem:[%s2] sm:$0xff]
  %v79 = vld [vmem:[%s2 + $0x8] sm:$0xff]
  %v80 = vld [vmem:[%s3] sm:$0xff]
  %v81 = vld [vmem:[%s3 + $0x8] sm:$0xff]
  %vm82 = vcmask 261120
  %v83 = vsel %vm82, %v72, 0.0
  %84 = vadd.xlane.f32.xlu0 %v83
  %v85 = vpop.xlane.xlu0 %84
  %v86 = vsel %vm82, %v75, 0.0
  %87 = vadd.xlane.f32.xlu0 %v86
  %v88 = vpop.xlane.xlu0 %87
  %v89 = vmul.f32 %v85, 0.03125
  %v90 = vmul.f32 %v88, 0.03125
  %v91 = vsub.f32 %v72, %v89
  %v92 = vsub.f32 %v75, %v90
  %v93 = vmul.f32 %v91, %v91
  %v94 = vmul.f32 %v92, %v92
  %v95 = vsel %vm82, %v93, 0.0
  %96 = vadd.xlane.f32.xlu0 %v95
  %v97 = vpop.xlane.xlu0 %96
  %v98 = vsel %vm82, %v94, 0.0
  %99 = vadd.xlane.f32.xlu0 %v98
  %v100 = vpop.xlane.xlu0 %99
  %v101 = vmul.f32 %v89, 0.0
  %v102 = vmul.f32 %v90, 0.0
  %v103 = vmul.f32 %v101, %v89
  %v104 = vmul.f32 %v102, %v90
  %v105 = vsub.f32 %v97, %v103
  %v106 = vsub.f32 %v100, %v104
  %v107 = vmul.f32 %v105, 0.03125
  %v108 = vmul.f32 %v106, 0.03125
  %v109 = vmax.f32 %v107, 0.0
  %v110 = vmax.f32 %v108, 0.0
  %v111 = vadd.f32 %v109, 1e-05
  %v112 = vadd.f32 %v110, 1e-05
  %v113 = vrsqrt.pop %v111
  %v114 = vrsqrt.pop %v112
  %v115 = vmul.f32 %v78, %v113
  %v116 = vmul.f32 %v79, %v114
  %v117 = vmul.f32 %v89, %v115
  %v118 = vmul.f32 %v90, %v116
  %v119 = vsub.f32 %v80, %v117
  %v120 = vsub.f32 %v81, %v118
  %122 = vset.pattern.permute.xlu0 0
  %123 = vperm.xlu0 %122, %v115
  %v124 = vpop.permute.xlu0 %123
  %127 = vset.pattern.permute.xlu0 0
  %128 = vperm.xlu0 %127, %v116
  %v129 = vpop.permute.xlu0 %128
  %v131 = vmul.f32 %v72, %v124
  %v132 = vmul.f32 %v75, %v129
  %134 = vset.pattern.permute.xlu0 0
  %135 = vperm.xlu0 %134, %v119
  %v136 = vpop.permute.xlu0 %135
  %139 = vset.pattern.permute.xlu0 0
  %140 = vperm.xlu0 %139, %v120
  %v141 = vpop.permute.xlu0 %140
  %v143 = vadd.f32 %v131, %v136
  %v144 = vadd.f32 %v132, %v141
  %v145 = vmax.f32 %v143, 0.0
  %v146 = vmax.f32 %v144, 0.0
  %v147 = vpack.c.bf16 %v146, %v145
  %v149 = vunpack.c.l.b16 %v147
  %v150 = vunpack.c.h.b16 %v147
  %v151 = vpack.c.b16 %v149, %v149
  %v152 = vpack.c.b16 %v150, %v150
  %vm155 = vcmask 257024
  %156 = vst.msk [vmem:[%s4] sm:$0xf] %vm155, %v151
  %157 = vst.msk [vmem:[%s4 + $0x4] sm:$0xf] %vm155, %v152
  // Predicated region
  $region18: #{dip_forward.28} parent=0 // pred_check
    _
  $region19: #{dip_forward.28} parent=0 // pred_check_branch
    %159 = sbr.rel (0) target = $region21
  $region20: #{dip_forward.28} parent=0 // pred_region
    _
  $region21: #{dip_forward.28} parent=0 // pred_fallthru
    _
  // Predicated region
  $region22: #{dip_forward.28} parent=0 // pred_check
    _
  $region23: #{dip_forward.28} parent=0 // pred_check_branch
    %161 = sbr.rel (0) target = $region25
  $region24: #{dip_forward.28} parent=0 // pred_region
    _
  $region25: #{dip_forward.28} parent=0 // pred_fallthru
    _

// kernel: dip_forward.27
$region0: #{dip_forward.27}
  #allocation0 [shape = 'u32[]', space=smem, size = 0x4, offset = 0x4, fixed_abs, tag = 'smem constant byte address 0x4 - core index']
  #allocation1 [shape = 'u32[144,128]{1,0:T(1,128)}', space=vmem, size = 0x12000, scoped, tag = 'internal scratch']
  %s0 = inlined_call_operand.vmem [shape: bf16[144,32], index: 0, kind: input, shape index: {}]
  %s1 = inlined_call_operand.vmem [shape: bf16[36,32], index: 1, kind: input, shape index: {}]
  %s2 = inlined_call_operand.vmem [shape: bf16[16,144], index: 2, kind: input, shape index: {}]
  %s3 = inlined_call_operand.vmem [shape: bf16[16,36], index: 3, kind: input, shape index: {}]
  %s4 = inlined_call_operand.vmem [shape: f32[16,1], index: 4, kind: input, shape index: {}]
  %s5 = inlined_call_operand.vmem [shape: f32[16,1], index: 5, kind: input, shape index: {}]
  %s6 = inlined_call_operand.vmem [shape: bf16[16,32], index: 6, kind: output, shape index: {}]
  %s7 = sld [smem:[#allocation0]]
  $region34: #{dip_forward.27} parent=0
    _
  %s9 = ssub.s32 1, %s7
  %s10 = scalar_select 0, %s9, %s7
  // Predicated region
  $region2: #{dip_forward.27} parent=0 // pred_check
    _
  $region3: #{dip_forward.27} parent=0 // pred_check_branch
    %12 = sbr.rel (0) target = $region5
  $region4: #{dip_forward.27} parent=0 // pred_region
    _
  $region5: #{dip_forward.27} parent=0 // pred_fallthru
    _
  // Predicated region
  $region6: #{dip_forward.27} parent=0 // pred_check
    _
  $region7: #{dip_forward.27} parent=0 // pred_check_branch
    %14 = sbr.rel (0) target = $region9
  $region8: #{dip_forward.27} parent=0 // pred_region
    _
  $region9: #{dip_forward.27} parent=0 // pred_fallthru
    _
  // Predicated region
  $region10: #{dip_forward.27} parent=0 // pred_check
    _
  $region11: #{dip_forward.27} parent=0 // pred_check_branch
    %16 = sbr.rel (0) target = $region13
  $region12: #{dip_forward.27} parent=0 // pred_region
    _
  $region13: #{dip_forward.27} parent=0 // pred_fallthru
    _
  // Predicated region
  $region14: #{dip_forward.27} parent=0 // pred_check
    _
  $region15: #{dip_forward.27} parent=0 // pred_check_branch
    %18 = sbr.rel (0) target = $region17
  $region16: #{dip_forward.27} parent=0 // pred_region
    _
  $region17: #{dip_forward.27} parent=0 // pred_fallthru
    _
  // Predicated region
  $region18: #{dip_forward.27} parent=0 // pred_check
    _
  $region19: #{dip_forward.27} parent=0 // pred_check_branch
    %20 = sbr.rel (0) target = $region21
  $region20: #{dip_forward.27} parent=0 // pred_region
    _
  $region21: #{dip_forward.27} parent=0 // pred_fallthru
    _
  // Predicated region
  $region22: #{dip_forward.27} parent=0 // pred_check
    _
  $region23: #{dip_forward.27} parent=0 // pred_check_branch
    %22 = sbr.rel (0) target = $region25
  $region24: #{dip_forward.27} parent=0 // pred_region
    _
  $region25: #{dip_forward.27} parent=0 // pred_fallthru
    _
  %v24 = vld [vmem:[%s2] sm:$0xff]
  %v25 = vld [vmem:[%s2 + $0x8] sm:$0xff]
  %v26 = vld [vmem:[%s0] sm:$0xf]
  %v27 = vld [vmem:[%s0 + $0x4] sm:$0xf]
  %v28 = vld [vmem:[%s0 + $0x8] sm:$0xf]
  %v29 = vld [vmem:[%s0 + $0xc] sm:$0xf]
  %v30 = vld [vmem:[%s0 + $0x10] sm:$0xf]
  %v31 = vld [vmem:[%s0 + $0x14] sm:$0xf]
  %v32 = vld [vmem:[%s0 + $0x18] sm:$0xf]
  %v33 = vld [vmem:[%s0 + $0x1c] sm:$0xf]
  %v34 = vld [vmem:[%s0 + $0x20] sm:$0xf]
  %v35 = vld [vmem:[%s0 + $0x24] sm:$0xf]
  %v36 = vld [vmem:[%s0 + $0x28] sm:$0xf]
  %v37 = vld [vmem:[%s0 + $0x2c] sm:$0xf]
  %v38 = vld [vmem:[%s0 + $0x30] sm:$0xf]
  %v39 = vld [vmem:[%s0 + $0x34] sm:$0xf]
  %v40 = vld [vmem:[%s0 + $0x38] sm:$0xf]
  %v41 = vld [vmem:[%s0 + $0x3c] sm:$0xf]
  %v42 = vld [vmem:[%s0 + $0x40] sm:$0xf]
  %v43 = vld [vmem:[%s0 + $0x44] sm:$0xf]
  %v44 = vld [vmem:[%s3] sm:$0xf]
  %v45 = vld [vmem:[%s3 + $0x4] sm:$0xf]
  %v46 = vld [vmem:[%s1] sm:$0xf]
  %v47 = vld [vmem:[%s1 + $0x4] sm:$0xf]
  %v48 = vld [vmem:[%s1 + $0x8] sm:$0xf]
  %v49 = vld [vmem:[%s1 + $0xc] sm:$0xf]
  %v50 = vld [vmem:[%s1 + $0x10] sm:$0x3]
  %v53 = vunpack.c.l.b16 %v44
  %v54 = vunpack.c.l.b16 %v45
  %v55 = vpack.c.b16 %v54, %v53
  %v61 = vunpack.c.l.b16 %v46
  %v62 = vunpack.c.l.b16 %v47
  %v63 = vunpack.c.l.b16 %v48
  %v64 = vunpack.c.l.b16 %v49
  %v65 = vunpack.c.l.b16 %v50
  %v66 = vpack.c.b16 %v62, %v61
  %v67 = vpack.c.b16 %v64, %v63
  %v68 = vpack.c.b16 %v65, %v65
  %vm71 = vcmask 293888
  %v73 = vsel %vm71, %v55, 0
  %vm75 = vcmask 1041408
  %v77 = vsel %vm75, %v68, 0
  %79 = vmatprep.subr.bf16.mxu0 0
  %80 = vmatpush1.bf16.msra.mxu0 %v66
  %81 = vmatprep.subr.bf16.mxu0 0
  %82 = vmatpush1.bf16.msra.mxu0 %v67
  %83 = vmatprep.subr.bf16.mxu0 0
  %84 = vmatpush1.bf16.msra.mxu0 %v77
  %85 = vmatprep.subr.bf16.mxu0 0
  %86 = vmatpush1.bf16.msra.mxu0 0
  %87 = vmatprep.subr.bf16.mxu0 0
  %88 = vmatpush1.bf16.msra.mxu0 0
  %89 = vmatprep.subr.bf16.mxu0 0
  %90 = vmatpush1.bf16.msra.mxu0 0
  %91 = vmatprep.subr.bf16.mxu0 0
  %92 = vmatpush1.bf16.msra.mxu0 0
  %93 = vmatprep.subr.bf16.mxu0 0
  %94 = vmatpush1.bf16.msra.mxu0 0
  %95 = vmatprep.subr.bf16.mxu0 0
  %96 = vmatpush1.bf16.msra.mxu0 0
  %97 = vmatprep.subr.bf16.mxu0 0
  %98 = vmatpush1.bf16.msra.mxu0 0
  %99 = vmatprep.subr.bf16.mxu0 0
  %100 = vmatpush1.bf16.msra.mxu0 0
  %101 = vmatprep.subr.bf16.mxu0 0
  %102 = vmatpush1.bf16.msra.mxu0 0
  %103 = vmatprep.subr.bf16.mxu0 0
  %104 = vmatpush1.bf16.msra.mxu0 0
  %105 = vmatprep.subr.bf16.mxu0 0
  %106 = vmatpush1.bf16.msra.mxu0 0
  %107 = vmatprep.subr.bf16.mxu0 0
  %108 = vmatpush1.bf16.msra.mxu0 0
  %109 = vmatprep.subr.bf16.mxu0 0
  %110 = vmatpush1.bf16.msra.mxu0 0
  %111 = vmatprep.mubr.bf16.mxu0 0
  %112 = vmatmul.mubr.bf16.gmra.mrb[0].mxu0 %v73
  %v113 = vpop.f32.mrb[0].mxu0
  %v114 = vadd.f32 0.0, %v113
  %v115 = vpop.f32.mrb[0].mxu0
  %v116 = vpop.f32.mrb[0].mxu0
  %v117 = vadd.f32 0.0, %v116
  %v118 = vpop.f32.mrb[0].mxu0
  %119 = vdwg.mxu0
  %v122 = vunpack.c.l.b16 %v24
  %v123 = vunpack.c.h.b16 %v24
  %v124 = vunpack.c.l.b16 %v25
  %v125 = vunpack.c.h.b16 %v25
  %v126 = vpack.c.b16 %v124, %v122
  %v127 = vpack.c.b16 %v125, %v123
  %v147 = vunpack.c.l.b16 %v26
  %v148 = vunpack.c.l.b16 %v27
  %v149 = vunpack.c.l.b16 %v28
  %v150 = vunpack.c.l.b16 %v29
  %v151 = vunpack.c.l.b16 %v30
  %v152 = vunpack.c.l.b16 %v31
  %v153 = vunpack.c.l.b16 %v32
  %v154 = vunpack.c.l.b16 %v33
  %v155 = vunpack.c.l.b16 %v34
  %v156 = vunpack.c.l.b16 %v35
  %v157 = vunpack.c.l.b16 %v36
  %v158 = vunpack.c.l.b16 %v37
  %v159 = vunpack.c.l.b16 %v38
  %v160 = vunpack.c.l.b16 %v39
  %v161 = vunpack.c.l.b16 %v40
  %v162 = vunpack.c.l.b16 %v41
  %v163 = vunpack.c.l.b16 %v42
  %v164 = vunpack.c.l.b16 %v43
  %v165 = vpack.c.b16 %v148, %v147
  %v166 = vpack.c.b16 %v150, %v149
  %v167 = vpack.c.b16 %v152, %v151
  %v168 = vpack.c.b16 %v154, %v153
  %v169 = vpack.c.b16 %v156, %v155
  %v170 = vpack.c.b16 %v158, %v157
  %v171 = vpack.c.b16 %v160, %v159
  %v172 = vpack.c.b16 %v162, %v161
  %v173 = vpack.c.b16 %v164, %v163
  %vm183 = vcmask 130048
  %v185 = vsel %vm183, %v127, 0
  %187 = vmatprep.subr.bf16.mxu0 0
  %188 = vmatpush1.bf16.msra.mxu0 %v165
  %189 = vmatprep.subr.bf16.mxu0 0
  %190 = vmatpush1.bf16.msra.mxu0 %v166
  %191 = vmatprep.subr.bf16.mxu0 0
  %192 = vmatpush1.bf16.msra.mxu0 %v167
  %193 = vmatprep.subr.bf16.mxu0 0
  %194 = vmatpush1.bf16.msra.mxu0 %v168
  %195 = vmatprep.subr.bf16.mxu0 0
  %196 = vmatpush1.bf16.msra.mxu0 %v169
  %197 = vmatprep.subr.bf16.mxu0 0
  %198 = vmatpush1.bf16.msra.mxu0 %v170
  %199 = vmatprep.subr.bf16.mxu0 0
  %200 = vmatpush1.bf16.msra.mxu0 %v171
  %201 = vmatprep.subr.bf16.mxu0 0
  %202 = vmatpush1.bf16.msra.mxu0 %v172
  %203 = vmatprep.subr.bf16.mxu0 0
  %204 = vmatpush1.bf16.msra.mxu0 %v173
  %205 = vmatprep.subr.bf16.mxu0 0
  %206 = vmatpush1.bf16.msra.mxu0 0
  %207 = vmatprep.subr.bf16.mxu0 0
  %208 = vmatpush1.bf16.msra.mxu0 0
  %209 = vmatprep.subr.bf16.mxu0 0
  %210 = vmatpush1.bf16.msra.mxu0 0
  %211 = vmatprep.subr.bf16.mxu0 0
  %212 = vmatpush1.bf16.msra.mxu0 0
  %213 = vmatprep.subr.bf16.mxu0 0
  %214 = vmatpush1.bf16.msra.mxu0 0
  %215 = vmatprep.subr.bf16.mxu0 0
  %216 = vmatpush1.bf16.msra.mxu0 0
  %217 = vmatprep.subr.bf16.mxu0 0
  %218 = vmatpush1.bf16.msra.mxu0 0
  %219 = vmatprep.mubr.bf16.mxu0 %v185
  %220 = vmatmul.mubr.bf16.gmra.mrb[0].mxu0 %v126
  %v221 = vpop.f32.mrb[0].mxu0
  %v222 = vadd.f32 %v114, %v221
  %v223 = vpop.f32.mrb[0].mxu0
  %v224 = vpop.f32.mrb[0].mxu0
  %v225 = vadd.f32 %v117, %v224
  %v226 = vpop.f32.mrb[0].mxu0
  %227 = vdwg.mxu0
  %v228 = vld [vmem:[%s4] sm:$0xff]
  %v229 = vld [vmem:[%s4 + $0x8] sm:$0xff]
  %v230 = vld [vmem:[%s5] sm:$0xff]
  %v231 = vld [vmem:[%s5 + $0x8] sm:$0xff]
  %vm232 = vcmask 261120
  %v233 = vsel %vm232, %v222, 0.0
  %234 = vadd.xlane.f32.xlu0 %v233
  %v235 = vpop.xlane.xlu0 %234
  %v236 = vsel %vm232, %v225, 0.0
  %237 = vadd.xlane.f32.xlu0 %v236
  %v238 = vpop.xlane.xlu0 %237
  %v239 = vmul.f32 %v235, 0.03125
  %v240 = vmul.f32 %v238, 0.03125
  %v241 = vsub.f32 %v222, %v239
  %v242 = vsub.f32 %v225, %v240
  %v243 = vmul.f32 %v241, %v241
  %v244 = vmul.f32 %v242, %v242
  %v245 = vsel %vm232, %v243, 0.0
  %246 = vadd.xlane.f32.xlu0 %v245
  %v247 = vpop.xlane.xlu0 %246
  %v248 = vsel %vm232, %v244, 0.0
  %249 = vadd.xlane.f32.xlu0 %v248
  %v250 = vpop.xlane.xlu0 %249
  %v251 = vmul.f32 %v239, 0.0
  %v252 = vmul.f32 %v240, 0.0
  %v253 = vmul.f32 %v251, %v239
  %v254 = vmul.f32 %v252, %v240
  %v255 = vsub.f32 %v247, %v253
  %v256 = vsub.f32 %v250, %v254
  %v257 = vmul.f32 %v255, 0.03125
  %v258 = vmul.f32 %v256, 0.03125
  %v259 = vmax.f32 %v257, 0.0
  %v260 = vmax.f32 %v258, 0.0
  %v261 = vadd.f32 %v259, 1e-05
  %v262 = vadd.f32 %v260, 1e-05
  %v263 = vrsqrt.pop %v261
  %v264 = vrsqrt.pop %v262
  %v265 = vmul.f32 %v228, %v263
  %v266 = vmul.f32 %v229, %v264
  %v267 = vmul.f32 %v239, %v265
  %v268 = vmul.f32 %v240, %v266
  %v269 = vsub.f32 %v230, %v267
  %v270 = vsub.f32 %v231, %v268
  %272 = vset.pattern.permute.xlu0 0
  %273 = vperm.xlu0 %272, %v265
  %v274 = vpop.permute.xlu0 %273
  %277 = vset.pattern.permute.xlu0 0
  %278 = vperm.xlu0 %277, %v266
  %v279 = vpop.permute.xlu0 %278
  %v281 = vmul.f32 %v222, %v274
  %v282 = vmul.f32 %v225, %v279
  %284 = vset.pattern.permute.xlu0 0
  %285 = vperm.xlu0 %284, %v269
  %v286 = vpop.permute.xlu0 %285
  %289 = vset.pattern.permute.xlu0 0
  %290 = vperm.xlu0 %289, %v270
  %v291 = vpop.permute.xlu0 %290
  %v293 = vadd.f32 %v281, %v286
  %v294 = vadd.f32 %v282, %v291
  %v295 = vmax.f32 %v293, 0.0
  %v296 = vmax.f32 %v294, 0.0
  %v297 = vpack.c.bf16 %v296, %v295
  %v299 = vunpack.c.l.b16 %v297
  %v300 = vunpack.c.h.b16 %v297
  %v301 = vpack.c.b16 %v299, %v299
  %v302 = vpack.c.b16 %v300, %v300
  %vm305 = vcmask 257024
  %306 = vst.msk [vmem:[%s6] sm:$0xf] %vm305, %v301
  %307 = vst.msk [vmem:[%s6 + $0x4] sm:$0xf] %vm305, %v302
  // Predicated region
  $region26: #{dip_forward.27} parent=0 // pred_check
    _
  $region27: #{dip_forward.27} parent=0 // pred_check_branch
    %309 = sbr.rel (0) target = $region29
  $region28: #{dip_forward.27} parent=0 // pred_region
    _
  $region29: #{dip_forward.27} parent=0 // pred_fallthru
    _
  // Predicated region
  $region30: #{dip_forward.27} parent=0 // pred_check
    _
  $region31: #{dip_forward.27} parent=0 // pred_check_branch
    %311 = sbr.rel (0) target = $region33
  $region32: #{dip_forward.27} parent=0 // pred_region
    _
  $region33: #{dip_forward.27} parent=0 // pred_fallthru
    _

// kernel: dip_forward.29
$region0: #{dip_forward.29}
  #allocation0 [shape = 'u32[]', space=smem, size = 0x4, offset = 0x4, fixed_abs, tag = 'smem constant byte address 0x4 - core index']
  #allocation1 [shape = 'u32[144,128]{1,0:T(1,128)}', space=vmem, size = 0x12000, scoped, tag = 'internal scratch']
  %s0 = inlined_call_operand.vmem [shape: bf16[144,128], index: 0, kind: input, shape index: {}]
  %s1 = inlined_call_operand.vmem [shape: bf16[36,128], index: 1, kind: input, shape index: {}]
  %s2 = inlined_call_operand.vmem [shape: bf16[16,144], index: 2, kind: input, shape index: {}]
  %s3 = inlined_call_operand.vmem [shape: bf16[16,36], index: 3, kind: input, shape index: {}]
  %s4 = inlined_call_operand.vmem [shape: f32[16,1], index: 4, kind: input, shape index: {}]
  %s5 = inlined_call_operand.vmem [shape: f32[16,1], index: 5, kind: input, shape index: {}]
  %s6 = inlined_call_operand.vmem [shape: bf16[16,128], index: 6, kind: output, shape index: {}]
  %s7 = sld [smem:[#allocation0]]
  $region34: #{dip_forward.29} parent=0
    _
  %s9 = ssub.s32 1, %s7
  %s10 = scalar_select 0, %s9, %s7
  // Predicated region
  $region2: #{dip_forward.29} parent=0 // pred_check
    _
  $region3: #{dip_forward.29} parent=0 // pred_check_branch
    %12 = sbr.rel (0) target = $region5
  $region4: #{dip_forward.29} parent=0 // pred_region
    _
  $region5: #{dip_forward.29} parent=0 // pred_fallthru
    _
  // Predicated region
  $region6: #{dip_forward.29} parent=0 // pred_check
    _
  $region7: #{dip_forward.29} parent=0 // pred_check_branch
    %14 = sbr.rel (0) target = $region9
  $region8: #{dip_forward.29} parent=0 // pred_region
    _
  $region9: #{dip_forward.29} parent=0 // pred_fallthru
    _
  // Predicated region
  $region10: #{dip_forward.29} parent=0 // pred_check
    _
  $region11: #{dip_forward.29} parent=0 // pred_check_branch
    %16 = sbr.rel (0) target = $region13
  $region12: #{dip_forward.29} parent=0 // pred_region
    _
  $region13: #{dip_forward.29} parent=0 // pred_fallthru
    _
  // Predicated region
  $region14: #{dip_forward.29} parent=0 // pred_check
    _
  $region15: #{dip_forward.29} parent=0 // pred_check_branch
    %18 = sbr.rel (0) target = $region17
  $region16: #{dip_forward.29} parent=0 // pred_region
    _
  $region17: #{dip_forward.29} parent=0 // pred_fallthru
    _
  // Predicated region
  $region18: #{dip_forward.29} parent=0 // pred_check
    _
  $region19: #{dip_forward.29} parent=0 // pred_check_branch
    %20 = sbr.rel (0) target = $region21
  $region20: #{dip_forward.29} parent=0 // pred_region
    _
  $region21: #{dip_forward.29} parent=0 // pred_fallthru
    _
  // Predicated region
  $region22: #{dip_forward.29} parent=0 // pred_check
    _
  $region23: #{dip_forward.29} parent=0 // pred_check_branch
    %22 = sbr.rel (0) target = $region25
  $region24: #{dip_forward.29} parent=0 // pred_region
    _
  $region25: #{dip_forward.29} parent=0 // pred_fallthru
    _
  %v24 = vld [vmem:[%s2] sm:$0xff]
  %v25 = vld [vmem:[%s2 + $0x8] sm:$0xff]
  %v26 = vld [vmem:[%s0] sm:$0xf]
  %v27 = vld [vmem:[%s0 + $0x4] sm:$0xf]
  %v28 = vld [vmem:[%s0 + $0x8] sm:$0xf]
  %v29 = vld [vmem:[%s0 + $0xc] sm:$0xf]
  %v30 = vld [vmem:[%s0 + $0x10] sm:$0xf]
  %v31 = vld [vmem:[%s0 + $0x14] sm:$0xf]
  %v32 = vld [vmem:[%s0 + $0x18] sm:$0xf]
  %v33 = vld [vmem:[%s0 + $0x1c] sm:$0xf]
  %v34 = vld [vmem:[%s0 + $0x20] sm:$0xf]
  %v35 = vld [vmem:[%s0 + $0x24] sm:$0xf]
  %v36 = vld [vmem:[%s0 + $0x28] sm:$0xf]
  %v37 = vld [vmem:[%s0 + $0x2c] sm:$0xf]
  %v38 = vld [vmem:[%s0 + $0x30] sm:$0xf]
  %v39 = vld [vmem:[%s0 + $0x34] sm:$0xf]
  %v40 = vld [vmem:[%s0 + $0x38] sm:$0xf]
  %v41 = vld [vmem:[%s0 + $0x3c] sm:$0xf]
  %v42 = vld [vmem:[%s0 + $0x40] sm:$0xf]
  %v43 = vld [vmem:[%s0 + $0x44] sm:$0xf]
  %v44 = vld [vmem:[%s3] sm:$0xf]
  %v45 = vld [vmem:[%s3 + $0x4] sm:$0xf]
  %v46 = vld [vmem:[%s1] sm:$0xf]
  %v47 = vld [vmem:[%s1 + $0x4] sm:$0xf]
  %v48 = vld [vmem:[%s1 + $0x8] sm:$0xf]
  %v49 = vld [vmem:[%s1 + $0xc] sm:$0xf]
  %v50 = vld [vmem:[%s1 + $0x10] sm:$0x3]
  %v53 = vunpack.c.l.b16 %v44
  %v54 = vunpack.c.l.b16 %v45
  %v55 = vpack.c.b16 %v54, %v53
  %v61 = vunpack.c.l.b16 %v46
  %v62 = vunpack.c.l.b16 %v47
  %v63 = vunpack.c.l.b16 %v48
  %v64 = vunpack.c.l.b16 %v49
  %v65 = vunpack.c.l.b16 %v50
  %v66 = vpack.c.b16 %v62, %v61
  %v67 = vpack.c.b16 %v64, %v63
  %v68 = vpack.c.b16 %v65, %v65
  %vm71 = vcmask 293888
  %v73 = vsel %vm71, %v55, 0
  %vm75 = vcmask 1041408
  %v77 = vsel %vm75, %v68, 0
  %79 = vmatprep.subr.bf16.mxu0 0
  %80 = vmatpush1.bf16.msra.mxu0 %v66
  %81 = vmatprep.subr.bf16.mxu0 0
  %82 = vmatpush1.bf16.msra.mxu0 %v67
  %83 = vmatprep.subr.bf16.mxu0 0
  %84 = vmatpush1.bf16.msra.mxu0 %v77
  %85 = vmatprep.subr.bf16.mxu0 0
  %86 = vmatpush1.bf16.msra.mxu0 0
  %87 = vmatprep.subr.bf16.mxu0 0
  %88 = vmatpush1.bf16.msra.mxu0 0
  %89 = vmatprep.subr.bf16.mxu0 0
  %90 = vmatpush1.bf16.msra.mxu0 0
  %91 = vmatprep.subr.bf16.mxu0 0
  %92 = vmatpush1.bf16.msra.mxu0 0
  %93 = vmatprep.subr.bf16.mxu0 0
  %94 = vmatpush1.bf16.msra.mxu0 0
  %95 = vmatprep.subr.bf16.mxu0 0
  %96 = vmatpush1.bf16.msra.mxu0 0
  %97 = vmatprep.subr.bf16.mxu0 0
  %98 = vmatpush1.bf16.msra.mxu0 0
  %99 = vmatprep.subr.bf16.mxu0 0
  %100 = vmatpush1.bf16.msra.mxu0 0
  %101 = vmatprep.subr.bf16.mxu0 0
  %102 = vmatpush1.bf16.msra.mxu0 0
  %103 = vmatprep.subr.bf16.mxu0 0
  %104 = vmatpush1.bf16.msra.mxu0 0
  %105 = vmatprep.subr.bf16.mxu0 0
  %106 = vmatpush1.bf16.msra.mxu0 0
  %107 = vmatprep.subr.bf16.mxu0 0
  %108 = vmatpush1.bf16.msra.mxu0 0
  %109 = vmatprep.subr.bf16.mxu0 0
  %110 = vmatpush1.bf16.msra.mxu0 0
  %111 = vmatprep.mubr.bf16.mxu0 0
  %112 = vmatmul.mubr.bf16.gmra.mrb[0].mxu0 %v73
  %v113 = vpop.f32.mrb[0].mxu0
  %v114 = vadd.f32 0.0, %v113
  %v115 = vpop.f32.mrb[0].mxu0
  %v116 = vpop.f32.mrb[0].mxu0
  %v117 = vadd.f32 0.0, %v116
  %v118 = vpop.f32.mrb[0].mxu0
  %119 = vdwg.mxu0
  %v122 = vunpack.c.l.b16 %v24
  %v123 = vunpack.c.h.b16 %v24
  %v124 = vunpack.c.l.b16 %v25
  %v125 = vunpack.c.h.b16 %v25
  %v126 = vpack.c.b16 %v124, %v122
  %v127 = vpack.c.b16 %v125, %v123
  %v147 = vunpack.c.l.b16 %v26
  %v148 = vunpack.c.l.b16 %v27
  %v149 = vunpack.c.l.b16 %v28
  %v150 = vunpack.c.l.b16 %v29
  %v151 = vunpack.c.l.b16 %v30
  %v152 = vunpack.c.l.b16 %v31
  %v153 = vunpack.c.l.b16 %v32
  %v154 = vunpack.c.l.b16 %v33
  %v155 = vunpack.c.l.b16 %v34
  %v156 = vunpack.c.l.b16 %v35
  %v157 = vunpack.c.l.b16 %v36
  %v158 = vunpack.c.l.b16 %v37
  %v159 = vunpack.c.l.b16 %v38
  %v160 = vunpack.c.l.b16 %v39
  %v161 = vunpack.c.l.b16 %v40
  %v162 = vunpack.c.l.b16 %v41
  %v163 = vunpack.c.l.b16 %v42
  %v164 = vunpack.c.l.b16 %v43
  %v165 = vpack.c.b16 %v148, %v147
  %v166 = vpack.c.b16 %v150, %v149
  %v167 = vpack.c.b16 %v152, %v151
  %v168 = vpack.c.b16 %v154, %v153
  %v169 = vpack.c.b16 %v156, %v155
  %v170 = vpack.c.b16 %v158, %v157
  %v171 = vpack.c.b16 %v160, %v159
  %v172 = vpack.c.b16 %v162, %v161
  %v173 = vpack.c.b16 %v164, %v163
  %vm183 = vcmask 130048
  %v185 = vsel %vm183, %v127, 0
  %187 = vmatprep.subr.bf16.mxu0 0
  %188 = vmatpush1.bf16.msra.mxu0 %v165
  %189 = vmatprep.subr.bf16.mxu0 0
  %190 = vmatpush1.bf16.msra.mxu0 %v166
  %191 = vmatprep.subr.bf16.mxu0 0
  %192 = vmatpush1.bf16.msra.mxu0 %v167
  %193 = vmatprep.subr.bf16.mxu0 0
  %194 = vmatpush1.bf16.msra.mxu0 %v168
  %195 = vmatprep.subr.bf16.mxu0 0
  %196 = vmatpush1.bf16.msra.mxu0 %v169
  %197 = vmatprep.subr.bf16.mxu0 0
  %198 = vmatpush1.bf16.msra.mxu0 %v170
  %199 = vmatprep.subr.bf16.mxu0 0
  %200 = vmatpush1.bf16.msra.mxu0 %v171
  %201 = vmatprep.subr.bf16.mxu0 0
  %202 = vmatpush1.bf16.msra.mxu0 %v172
  %203 = vmatprep.subr.bf16.mxu0 0
  %204 = vmatpush1.bf16.msra.mxu0 %v173
  %205 = vmatprep.subr.bf16.mxu0 0
  %206 = vmatpush1.bf16.msra.mxu0 0
  %207 = vmatprep.subr.bf16.mxu0 0
  %208 = vmatpush1.bf16.msra.mxu0 0
  %209 = vmatprep.subr.bf16.mxu0 0
  %210 = vmatpush1.bf16.msra.mxu0 0
  %211 = vmatprep.subr.bf16.mxu0 0
  %212 = vmatpush1.bf16.msra.mxu0 0
  %213 = vmatprep.subr.bf16.mxu0 0
  %214 = vmatpush1.bf16.msra.mxu0 0
  %215 = vmatprep.subr.bf16.mxu0 0
  %216 = vmatpush1.bf16.msra.mxu0 0
  %217 = vmatprep.subr.bf16.mxu0 0
  %218 = vmatpush1.bf16.msra.mxu0 0
  %219 = vmatprep.mubr.bf16.mxu0 %v185
  %220 = vmatmul.mubr.bf16.gmra.mrb[0].mxu0 %v126
  %v221 = vpop.f32.mrb[0].mxu0
  %v222 = vadd.f32 %v114, %v221
  %v223 = vpop.f32.mrb[0].mxu0
  %v224 = vpop.f32.mrb[0].mxu0
  %v225 = vadd.f32 %v117, %v224
  %v226 = vpop.f32.mrb[0].mxu0
  %227 = vdwg.mxu0
  %v228 = vld [vmem:[%s4] sm:$0xff]
  %v229 = vld [vmem:[%s4 + $0x8] sm:$0xff]
  %v230 = vld [vmem:[%s5] sm:$0xff]
  %v231 = vld [vmem:[%s5 + $0x8] sm:$0xff]
  %232 = vadd.xlane.f32.xlu0 %v222
  %v233 = vpop.xlane.xlu0 %232
  %234 = vadd.xlane.f32.xlu0 %v225
  %v235 = vpop.xlane.xlu0 %234
  %v236 = vmul.f32 %v233, 0.0078125
  %v237 = vmul.f32 %v235, 0.0078125
  %v238 = vsub.f32 %v222, %v236
  %v239 = vsub.f32 %v225, %v237
  %v240 = vmul.f32 %v238, %v238
  %v241 = vmul.f32 %v239, %v239
  %242 = vadd.xlane.f32.xlu0 %v240
  %v243 = vpop.xlane.xlu0 %242
  %244 = vadd.xlane.f32.xlu0 %v241
  %v245 = vpop.xlane.xlu0 %244
  %v246 = vmul.f32 %v236, 0.0
  %v247 = vmul.f32 %v237, 0.0
  %v248 = vmul.f32 %v246, %v236
  %v249 = vmul.f32 %v247, %v237
  %v250 = vsub.f32 %v243, %v248
  %v251 = vsub.f32 %v245, %v249
  %v252 = vmul.f32 %v250, 0.0078125
  %v253 = vmul.f32 %v251, 0.0078125
  %v254 = vmax.f32 %v252, 0.0
  %v255 = vmax.f32 %v253, 0.0
  %v256 = vadd.f32 %v254, 1e-05
  %v257 = vadd.f32 %v255, 1e-05
  %v258 = vrsqrt.pop %v256
  %v259 = vrsqrt.pop %v257
  %v260 = vmul.f32 %v228, %v258
  %v261 = vmul.f32 %v229, %v259
  %v262 = vmul.f32 %v236, %v260
  %v263 = vmul.f32 %v237, %v261
  %v264 = vsub.f32 %v230, %v262
  %v265 = vsub.f32 %v231, %v263
  %267 = vset.pattern.permute.xlu0 0
  %268 = vperm.xlu0 %267, %v260
  %v269 = vpop.permute.xlu0 %268
  %272 = vset.pattern.permute.xlu0 0
  %273 = vperm.xlu0 %272, %v261
  %v274 = vpop.permute.xlu0 %273
  %v276 = vmul.f32 %v222, %v269
  %v277 = vmul.f32 %v225, %v274
  %279 = vset.pattern.permute.xlu0 0
  %280 = vperm.xlu0 %279, %v264
  %v281 = vpop.permute.xlu0 %280
  %284 = vset.pattern.permute.xlu0 0
  %285 = vperm.xlu0 %284, %v265
  %v286 = vpop.permute.xlu0 %285
  %v288 = vadd.f32 %v276, %v281
  %v289 = vadd.f32 %v277, %v286
  %v290 = vmax.f32 %v288, 0.0
  %v291 = vmax.f32 %v289, 0.0
  %v292 = vpack.c.bf16 %v291, %v290
  %v294 = vunpack.c.l.b16 %v292
  %v295 = vunpack.c.h.b16 %v292
  %v296 = vpack.c.b16 %v294, %v294
  %v297 = vpack.c.b16 %v295, %v295
  %300 = vst [vmem:[%s6] sm:$0xf] %v296
  %301 = vst [vmem:[%s6 + $0x4] sm:$0xf] %v297
  // Predicated region
  $region26: #{dip_forward.29} parent=0 // pred_check
    _
  $region27: #{dip_forward.29} parent=0 // pred_check_branch
    %303 = sbr.rel (0) target = $region29
  $region28: #{dip_forward.29} parent=0 // pred_region
    _
  $region29: #{dip_forward.29} parent=0 // pred_fallthru
    _
  // Predicated region
  $region30: #{dip_forward.29} parent=0 // pred_check
    _
  $region31: #{dip_forward.29} parent=0 // pred_check_branch
    %305 = sbr.rel (0) target = $region33
  $region32: #{dip_forward.29} parent=0 // pred_region
    _
  $region33: #{dip_forward.29} parent=0 // pred_fallthru
    _

// kernel: dip_forward.30
$region0: #{dip_forward.30}
  #allocation0 [shape = 'u32[]', space=smem, size = 0x4, offset = 0x4, fixed_abs, tag = 'smem constant byte address 0x4 - core index']
  #allocation1 [shape = 'u32[144,128]{1,0:T(1,128)}', space=vmem, size = 0x12000, scoped, tag = 'internal scratch']
  %s0 = inlined_call_operand.vmem [shape: bf16[16,128], index: 0, kind: input, shape index: {}]
  %s1 = inlined_call_operand.vmem [shape: bf16[16,16], index: 1, kind: input, shape index: {}]
  %s2 = inlined_call_operand.vmem [shape: f32[16,1], index: 2, kind: input, shape index: {}]
  %s3 = inlined_call_operand.vmem [shape: f32[16,1], index: 3, kind: input, shape index: {}]
  %s4 = inlined_call_operand.vmem [shape: bf16[16,128], index: 4, kind: output, shape index: {}]
  %s5 = sld [smem:[#allocation0]]
  $region26: #{dip_forward.30} parent=0
    _
  %s7 = ssub.s32 1, %s5
  %s8 = scalar_select 0, %s7, %s5
  // Predicated region
  $region2: #{dip_forward.30} parent=0 // pred_check
    _
  $region3: #{dip_forward.30} parent=0 // pred_check_branch
    %10 = sbr.rel (0) target = $region5
  $region4: #{dip_forward.30} parent=0 // pred_region
    _
  $region5: #{dip_forward.30} parent=0 // pred_fallthru
    _
  // Predicated region
  $region6: #{dip_forward.30} parent=0 // pred_check
    _
  $region7: #{dip_forward.30} parent=0 // pred_check_branch
    %12 = sbr.rel (0) target = $region9
  $region8: #{dip_forward.30} parent=0 // pred_region
    _
  $region9: #{dip_forward.30} parent=0 // pred_fallthru
    _
  // Predicated region
  $region10: #{dip_forward.30} parent=0 // pred_check
    _
  $region11: #{dip_forward.30} parent=0 // pred_check_branch
    %14 = sbr.rel (0) target = $region13
  $region12: #{dip_forward.30} parent=0 // pred_region
    _
  $region13: #{dip_forward.30} parent=0 // pred_fallthru
    _
  // Predicated region
  $region14: #{dip_forward.30} parent=0 // pred_check
    _
  $region15: #{dip_forward.30} parent=0 // pred_check_branch
    %16 = sbr.rel (0) target = $region17
  $region16: #{dip_forward.30} parent=0 // pred_region
    _
  $region17: #{dip_forward.30} parent=0 // pred_fallthru
    _
  %v18 = vld [vmem:[%s1] sm:$0xf]
  %v19 = vld [vmem:[%s1 + $0x4] sm:$0xf]
  %v20 = vld [vmem:[%s0] sm:$0xf]
  %v21 = vld [vmem:[%s0 + $0x4] sm:$0xf]
  %v24 = vunpack.c.l.b16 %v18
  %v25 = vunpack.c.l.b16 %v19
  %v26 = vpack.c.b16 %v25, %v24
  %v29 = vunpack.c.l.b16 %v20
  %v30 = vunpack.c.l.b16 %v21
  %v31 = vpack.c.b16 %v30, %v29
  %vm33 = vcmask 130048
  %v35 = vsel %vm33, %v26, 0
  %37 = vmatprep.subr.bf16.mxu0 0
  %38 = vmatpush1.bf16.msra.mxu0 %v31
  %39 = vmatprep.subr.bf16.mxu0 0
  %40 = vmatpush1.bf16.msra.mxu0 0
  %41 = vmatprep.subr.bf16.mxu0 0
  %42 = vmatpush1.bf16.msra.mxu0 0
  %43 = vmatprep.subr.bf16.mxu0 0
  %44 = vmatpush1.bf16.msra.mxu0 0
  %45 = vmatprep.subr.bf16.mxu0 0
  %46 = vmatpush1.bf16.msra.mxu0 0
  %47 = vmatprep.subr.bf16.mxu0 0
  %48 = vmatpush1.bf16.msra.mxu0 0
  %49 = vmatprep.subr.bf16.mxu0 0
  %50 = vmatpush1.bf16.msra.mxu0 0
  %51 = vmatprep.subr.bf16.mxu0 0
  %52 = vmatpush1.bf16.msra.mxu0 0
  %53 = vmatprep.subr.bf16.mxu0 0
  %54 = vmatpush1.bf16.msra.mxu0 0
  %55 = vmatprep.subr.bf16.mxu0 0
  %56 = vmatpush1.bf16.msra.mxu0 0
  %57 = vmatprep.subr.bf16.mxu0 0
  %58 = vmatpush1.bf16.msra.mxu0 0
  %59 = vmatprep.subr.bf16.mxu0 0
  %60 = vmatpush1.bf16.msra.mxu0 0
  %61 = vmatprep.subr.bf16.mxu0 0
  %62 = vmatpush1.bf16.msra.mxu0 0
  %63 = vmatprep.subr.bf16.mxu0 0
  %64 = vmatpush1.bf16.msra.mxu0 0
  %65 = vmatprep.subr.bf16.mxu0 0
  %66 = vmatpush1.bf16.msra.mxu0 0
  %67 = vmatprep.subr.bf16.mxu0 0
  %68 = vmatpush1.bf16.msra.mxu0 0
  %69 = vmatprep.mubr.bf16.mxu0 0
  %70 = vmatmul.mubr.bf16.gmra.mrb[0].mxu0 %v35
  %v71 = vpop.f32.mrb[0].mxu0
  %v72 = vadd.f32 0.0, %v71
  %v73 = vpop.f32.mrb[0].mxu0
  %v74 = vpop.f32.mrb[0].mxu0
  %v75 = vadd.f32 0.0, %v74
  %v76 = vpop.f32.mrb[0].mxu0
  %77 = vdwg.mxu0
  %v78 = vld [vmem:[%s2] sm:$0xff]
  %v79 = vld [vmem:[%s2 + $0x8] sm:$0xff]
  %v80 = vld [vmem:[%s3] sm:$0xff]
  %v81 = vld [vmem:[%s3 + $0x8] sm:$0xff]
  %82 = vadd.xlane.f32.xlu0 %v72
  %v83 = vpop.xlane.xlu0 %82
  %84 = vadd.xlane.f32.xlu0 %v75
  %v85 = vpop.xlane.xlu0 %84
  %v86 = vmul.f32 %v83, 0.0078125
  %v87 = vmul.f32 %v85, 0.0078125
  %v88 = vsub.f32 %v72, %v86
  %v89 = vsub.f32 %v75, %v87
  %v90 = vmul.f32 %v88, %v88
  %v91 = vmul.f32 %v89, %v89
  %92 = vadd.xlane.f32.xlu0 %v90
  %v93 = vpop.xlane.xlu0 %92
  %94 = vadd.xlane.f32.xlu0 %v91
  %v95 = vpop.xlane.xlu0 %94
  %v96 = vmul.f32 %v86, 0.0
  %v97 = vmul.f32 %v87, 0.0
  %v98 = vmul.f32 %v96, %v86
  %v99 = vmul.f32 %v97, %v87
  %v100 = vsub.f32 %v93, %v98
  %v101 = vsub.f32 %v95, %v99
  %v102 = vmul.f32 %v100, 0.0078125
  %v103 = vmul.f32 %v101, 0.0078125
  %v104 = vmax.f32 %v102, 0.0
  %v105 = vmax.f32 %v103, 0.0
  %v106 = vadd.f32 %v104, 1e-05
  %v107 = vadd.f32 %v105, 1e-05
  %v108 = vrsqrt.pop %v106
  %v109 = vrsqrt.pop %v107
  %v110 = vmul.f32 %v78, %v108
  %v111 = vmul.f32 %v79, %v109
  %v112 = vmul.f32 %v86, %v110
  %v113 = vmul.f32 %v87, %v111
  %v114 = vsub.f32 %v80, %v112
  %v115 = vsub.f32 %v81, %v113
  %117 = vset.pattern.permute.xlu0 0
  %118 = vperm.xlu0 %117, %v110
  %v119 = vpop.permute.xlu0 %118
  %122 = vset.pattern.permute.xlu0 0
  %123 = vperm.xlu0 %122, %v111
  %v124 = vpop.permute.xlu0 %123
  %v126 = vmul.f32 %v72, %v119
  %v127 = vmul.f32 %v75, %v124
  %129 = vset.pattern.permute.xlu0 0
  %130 = vperm.xlu0 %129, %v114
  %v131 = vpop.permute.xlu0 %130
  %134 = vset.pattern.permute.xlu0 0
  %135 = vperm.xlu0 %134, %v115
  %v136 = vpop.permute.xlu0 %135
  %v138 = vadd.f32 %v126, %v131
  %v139 = vadd.f32 %v127, %v136
  %v140 = vmax.f32 %v138, 0.0
  %v141 = vmax.f32 %v139, 0.0
  %v142 = vpack.c.bf16 %v141, %v140
  %v144 = vunpack.c.l.b16 %v142
  %v145 = vunpack.c.h.b16 %v142
  %v146 = vpack.c.b16 %v144, %v144
  %v147 = vpack.c.b16 %v145, %v145
  %150 = vst [vmem:[%s4] sm:$0xf] %v146
  %151 = vst [vmem:[%s4 + $0x4] sm:$0xf] %v147
  // Predicated region
  $region18: #{dip_forward.30} parent=0 // pred_check
    _
  $region19: #{dip_forward.30} parent=0 // pred_check_branch
    %153 = sbr.rel (0) target = $region21
  $region20: #{dip_forward.30} parent=0 // pred_region
    _
  $region21: #{dip_forward.30} parent=0 // pred_fallthru
    _
  // Predicated region
  $region22: #{dip_forward.30} parent=0 // pred_check
    _
  $region23: #{dip_forward.30} parent=0 // pred_check_branch
    %155 = sbr.rel (0) target = $region25
  $region24: #{dip_forward.30} parent=0 // pred_region
    _
  $region25: #{dip_forward.30} parent=0 // pred_fallthru
    _

// kernel: dip_forward.16
$region0: #{dip_forward.16}
  #allocation0 [shape = 'u32[]', space=smem, size = 0x4, offset = 0x4, fixed_abs, tag = 'smem constant byte address 0x4 - core index']
  #allocation1 [shape = 'u32[144,128]{1,0:T(1,128)}', space=vmem, size = 0x12000, scoped, tag = 'internal scratch']
  %s0 = inlined_call_operand.vmem [shape: bf16[8,512], index: 0, kind: input, shape index: {}]
  %s1 = inlined_call_operand.vmem [shape: bf16[4,8], index: 1, kind: input, shape index: {}]
  %s2 = inlined_call_operand.vmem [shape: f32[4,1], index: 2, kind: input, shape index: {}]
  %s3 = inlined_call_operand.vmem [shape: f32[4,1], index: 3, kind: input, shape index: {}]
  %s4 = inlined_call_operand.vmem [shape: bf16[4,512], index: 4, kind: output, shape index: {}]
  %s5 = sld [smem:[#allocation0]]
  $region26: #{dip_forward.16} parent=0
    _
  %s7 = ssub.s32 1, %s5
  %s8 = scalar_select 0, %s7, %s5
  // Predicated region
  $region2: #{dip_forward.16} parent=0 // pred_check
    _
  $region3: #{dip_forward.16} parent=0 // pred_check_branch
    %10 = sbr.rel (0) target = $region5
  $region4: #{dip_forward.16} parent=0 // pred_region
    _
  $region5: #{dip_forward.16} parent=0 // pred_fallthru
    _
  // Predicated region
  $region6: #{dip_forward.16} parent=0 // pred_check
    _
  $region7: #{dip_forward.16} parent=0 // pred_check_branch
    %12 = sbr.rel (0) target = $region9
  $region8: #{dip_forward.16} parent=0 // pred_region
    _
  $region9: #{dip_forward.16} parent=0 // pred_fallthru
    _
  // Predicated region
  $region10: #{dip_forward.16} parent=0 // pred_check
    _
  $region11: #{dip_forward.16} parent=0 // pred_check_branch
    %14 = sbr.rel (0) target = $region13
  $region12: #{dip_forward.16} parent=0 // pred_region
    _
  $region13: #{dip_forward.16} parent=0 // pred_fallthru
    _
  // Predicated region
  $region14: #{dip_forward.16} parent=0 // pred_check
    _
  $region15: #{dip_forward.16} parent=0 // pred_check_branch
    %16 = sbr.rel (0) target = $region17
  $region16: #{dip_forward.16} parent=0 // pred_region
    _
  $region17: #{dip_forward.16} parent=0 // pred_fallthru
    _
  %v18 = vld [vmem:[%s1] sm:$0x3]
  %v19 = vld [vmem:[%s0] sm:$0xff]
  %v20 = vld [vmem:[%s0 + $0x8] sm:$0xff]
  %v23 = vunpack.c.l.b16 %v19
  %v24 = vunpack.c.h.b16 %v19
  %v25 = vunpack.c.l.b16 %v20
  %v26 = vunpack.c.h.b16 %v20
  %v27 = vpack.c.b16 %v23, %v23
  %v28 = vpack.c.b16 %v24, %v24
  %v29 = vpack.c.b16 %v25, %v25
  %v30 = vpack.c.b16 %v26, %v26
  %vm31 = vcmask 64512
  %v33 = vsel %vm31, %v18, 0
  %vm35 = vcmask 1043456
  %v37 = vsel %vm35, %v27, 0
  %v40 = vsel %vm35, %v28, 0
  %v43 = vsel %vm35, %v29, 0
  %v46 = vsel %vm35, %v30, 0
  %48 = vmatprep.subr.bf16.mxu0 %v40
  %49 = vmatpush1.bf16.msra.mxu0 %v37
  %50 = vmatprep.subr.bf16.mxu0 0
  %51 = vmatpush1.bf16.msra.mxu0 0
  %52 = vmatprep.subr.bf16.mxu0 0
  %53 = vmatpush1.bf16.msra.mxu0 0
  %54 = vmatprep.subr.bf16.mxu0 0
  %55 = vmatpush1.bf16.msra.mxu0 0
  %56 = vmatprep.subr.bf16.mxu0 0
  %57 = vmatpush1.bf16.msra.mxu0 0
  %58 = vmatprep.subr.bf16.mxu0 0
  %59 = vmatpush1.bf16.msra.mxu0 0
  %60 = vmatprep.subr.bf16.mxu0 0
  %61 = vmatpush1.bf16.msra.mxu0 0
  %62 = vmatprep.subr.bf16.mxu0 0
  %63 = vmatpush1.bf16.msra.mxu0 0
  %64 = vmatprep.subr.bf16.mxu0 0
  %65 = vmatpush1.bf16.msra.mxu0 0
  %66 = vmatprep.subr.bf16.mxu0 0
  %67 = vmatpush1.bf16.msra.mxu0 0
  %68 = vmatprep.subr.bf16.mxu0 0
  %69 = vmatpush1.bf16.msra.mxu0 0
  %70 = vmatprep.subr.bf16.mxu0 0
  %71 = vmatpush1.bf16.msra.mxu0 0
  %72 = vmatprep.subr.bf16.mxu0 0
  %73 = vmatpush1.bf16.msra.mxu0 0
  %74 = vmatprep.subr.bf16.mxu0 0
  %75 = vmatpush1.bf16.msra.mxu0 0
  %76 = vmatprep.subr.bf16.mxu0 0
  %77 = vmatpush1.bf16.msra.mxu0 0
  %78 = vmatprep.subr.bf16.mxu0 0
  %79 = vmatpush1.bf16.msra.mxu0 0
  %80 = vmatprep.mubr.bf16.mxu0 0
  %81 = vmatmul.mubr.bf16.gmra.mrb[0].mxu0 %v33
  %v82 = vpop.f32.mrb[0].mxu0
  %v83 = vadd.f32 0.0, %v82
  %v84 = vpop.f32.mrb[0].mxu0
  %v85 = vadd.f32 0.0, %v84
  %v86 = vpop.f32.mrb[0].mxu0
  %v87 = vpop.f32.mrb[0].mxu0
  %88 = vdwg.mxu0
  %89 = vmatprep.subr.bf16.mxu0 %v46
  %90 = vmatpush1.bf16.msra.mxu0 %v43
  %91 = vmatprep.subr.bf16.mxu0 0
  %92 = vmatpush1.bf16.msra.mxu0 0
  %93 = vmatprep.subr.bf16.mxu0 0
  %94 = vmatpush1.bf16.msra.mxu0 0
  %95 = vmatprep.subr.bf16.mxu0 0
  %96 = vmatpush1.bf16.msra.mxu0 0
  %97 = vmatprep.subr.bf16.mxu0 0
  %98 = vmatpush1.bf16.msra.mxu0 0
  %99 = vmatprep.subr.bf16.mxu0 0
  %100 = vmatpush1.bf16.msra.mxu0 0
  %101 = vmatprep.subr.bf16.mxu0 0
  %102 = vmatpush1.bf16.msra.mxu0 0
  %103 = vmatprep.subr.bf16.mxu0 0
  %104 = vmatpush1.bf16.msra.mxu0 0
  %105 = vmatprep.subr.bf16.mxu0 0
  %106 = vmatpush1.bf16.msra.mxu0 0
  %107 = vmatprep.subr.bf16.mxu0 0
  %108 = vmatpush1.bf16.msra.mxu0 0
  %109 = vmatprep.subr.bf16.mxu0 0
  %110 = vmatpush1.bf16.msra.mxu0 0
  %111 = vmatprep.subr.bf16.mxu0 0
  %112 = vmatpush1.bf16.msra.mxu0 0
  %113 = vmatprep.subr.bf16.mxu0 0
  %114 = vmatpush1.bf16.msra.mxu0 0
  %115 = vmatprep.subr.bf16.mxu0 0
  %116 = vmatpush1.bf16.msra.mxu0 0
  %117 = vmatprep.subr.bf16.mxu0 0
  %118 = vmatpush1.bf16.msra.mxu0 0
  %119 = vmatprep.subr.bf16.mxu0 0
  %120 = vmatpush1.bf16.msra.mxu0 0
  %121 = vmatprep.mubr.bf16.mxu0 0
  %122 = vmatmul.mubr.bf16.gmra.mrb[0].mxu0 %v33
  %v123 = vpop.f32.mrb[0].mxu0
  %v124 = vadd.f32 0.0, %v123
  %v125 = vpop.f32.mrb[0].mxu0
  %v126 = vadd.f32 0.0, %v125
  %v127 = vpop.f32.mrb[0].mxu0
  %v128 = vpop.f32.mrb[0].mxu0
  %129 = vdwg.mxu0
  %v130 = vld [vmem:[%s2] sm:$0xf]
  %v131 = vld [vmem:[%s3] sm:$0xf]
  %v132 = vsel %vm35, %v83, 0.0
  %v133 = vsel %vm35, %v85, 0.0
  %v134 = vadd.f32 %v132, %v133
  %v135 = vsel %vm35, %v124, 0.0
  %v136 = vadd.f32 %v134, %v135
  %v137 = vsel %vm35, %v126, 0.0
  %v138 = vadd.f32 %v136, %v137
  %139 = vadd.xlane.f32.xlu0 %v138
  %v140 = vpop.xlane.xlu0 %139
  %v141 = vmul.f32 %v140, 0.001953125
  %v142 = vsub.f32 %v83, %v141
  %v143 = vsub.f32 %v85, %v141
  %v144 = vsub.f32 %v124, %v141
  %v145 = vsub.f32 %v126, %v141
  %v146 = vmul.f32 %v142, %v142
  %v147 = vmul.f32 %v143, %v143
  %v148 = vmul.f32 %v144, %v144
  %v149 = vmul.f32 %v145, %v145
  %v150 = vsel %vm35, %v146, 0.0
  %v151 = vsel %vm35, %v147, 0.0
  %v152 = vadd.f32 %v150, %v151
  %v153 = vsel %vm35, %v148, 0.0
  %v154 = vadd.f32 %v152, %v153
  %v155 = vsel %vm35, %v149, 0.0
  %v156 = vadd.f32 %v154, %v155
  %157 = vadd.xlane.f32.xlu0 %v156
  %v158 = vpop.xlane.xlu0 %157
  %v159 = vmul.f32 %v141, 0.0
  %v160 = vmul.f32 %v159, %v141
  %v161 = vsub.f32 %v158, %v160
  %v162 = vmul.f32 %v161, 0.001953125
  %v163 = vmax.f32 %v162, 0.0
  %v164 = vadd.f32 %v163, 1e-05
  %v165 = vrsqrt.pop %v164
  %v166 = vmul.f32 %v130, %v165
  %v167 = vmul.f32 %v141, %v166
  %v168 = vsub.f32 %v131, %v167
  %170 = vset.pattern.permute.xlu0 0
  %171 = vperm.xlu0 %170, %v166
  %v172 = vpop.permute.xlu0 %171
  %v174 = vmul.f32 %v83, %v172
  %v175 = vmul.f32 %v85, %v172
  %v176 = vmul.f32 %v124, %v172
  %v177 = vmul.f32 %v126, %v172
  %179 = vset.pattern.permute.xlu0 0
  %180 = vperm.xlu0 %179, %v168
  %v181 = vpop.permute.xlu0 %180
  %v183 = vadd.f32 %v174, %v181
  %v184 = vadd.f32 %v175, %v181
  %v185 = vadd.f32 %v176, %v181
  %v186 = vadd.f32 %v177, %v181
  %v187 = vmax.f32 %v183, 0.0
  %v188 = vmax.f32 %v184, 0.0
  %v189 = vmax.f32 %v185, 0.0
  %v190 = vmax.f32 %v186, 0.0
  %v191 = vpack.c.bf16 %v187, %v187
  %v192 = vpack.c.bf16 %v188, %v188
  %v193 = vpack.c.bf16 %v189, %v189
  %v194 = vpack.c.bf16 %v190, %v190
  %v199 = vcombine.low %v191, %v192
  %v200 = vcombine.low %v193, %v194
  %v202 = vunpack.c.l.s4 1983009808
  %v203 = vunpack.c.0.s8 %v202
  %v204 = vlaneseq
  %v205 = vshrl.u32 %v204, 7
  %v206 = vsub.s32 %v203, %v205
  %v207 = vrot.slane %v199, %v206
  %v209 = vunpack.c.l.s4 1983009808
  %v210 = vunpack.c.0.s8 %v209
  %v211 = vlaneseq
  %v212 = vshrl.u32 %v211, 7
  %v213 = vsub.s32 %v210, %v212
  %v214 = vrot.slane %v200, %v213
  %v215 = vcombine.low %v207, %v214
  %217 = vst [vmem:[%s4] sm:$0xff] %v215
  // Predicated region
  $region18: #{dip_forward.16} parent=0 // pred_check
    _
  $region19: #{dip_forward.16} parent=0 // pred_check_branch
    %219 = sbr.rel (0) target = $region21
  $region20: #{dip_forward.16} parent=0 // pred_region
    _
  $region21: #{dip_forward.16} parent=0 // pred_fallthru
    _
  // Predicated region
  $region22: #{dip_forward.16} parent=0 // pred_check
    _
  $region23: #{dip_forward.16} parent=0 // pred_check_branch
    %221 = sbr.rel (0) target = $region25
  $region24: #{dip_forward.16} parent=0 // pred_region
    _
  $region25: #{dip_forward.16} parent=0 // pred_fallthru
    _

// kernel: dip_forward.31
$region0: #{dip_forward.31}
  #allocation0 [shape = 'u32[]', space=smem, size = 0x4, offset = 0x4, fixed_abs, tag = 'smem constant byte address 0x4 - core index']
  #allocation1 [shape = 'u32[144,128]{1,0:T(1,128)}', space=vmem, size = 0x12000, scoped, tag = 'internal scratch']
  %s0 = inlined_call_operand.vmem [shape: bf16[16,512], index: 0, kind: input, shape index: {}]
  %s1 = inlined_call_operand.vmem [shape: bf16[4,512], index: 1, kind: input, shape index: {}]
  %s2 = inlined_call_operand.vmem [shape: bf16[3,16], index: 2, kind: input, shape index: {}]
  %s3 = inlined_call_operand.vmem [shape: bf16[3,4], index: 3, kind: input, shape index: {}]
  %s4 = inlined_call_operand.vmem [shape: f32[3,1], index: 4, kind: input, shape index: {}]
  %s5 = inlined_call_operand.vmem [shape: f32[3,512], index: 5, kind: output, shape index: {}]
  %s6 = sld [smem:[#allocation0]]
  $region30: #{dip_forward.31} parent=0
    _
  %s8 = ssub.s32 1, %s6
  %s9 = scalar_select 0, %s8, %s6
  // Predicated region
  $region2: #{dip_forward.31} parent=0 // pred_check
    _
  $region3: #{dip_forward.31} parent=0 // pred_check_branch
    %11 = sbr.rel (0) target = $region5
  $region4: #{dip_forward.31} parent=0 // pred_region
    _
  $region5: #{dip_forward.31} parent=0 // pred_fallthru
    _
  // Predicated region
  $region6: #{dip_forward.31} parent=0 // pred_check
    _
  $region7: #{dip_forward.31} parent=0 // pred_check_branch
    %13 = sbr.rel (0) target = $region9
  $region8: #{dip_forward.31} parent=0 // pred_region
    _
  $region9: #{dip_forward.31} parent=0 // pred_fallthru
    _
  // Predicated region
  $region10: #{dip_forward.31} parent=0 // pred_check
    _
  $region11: #{dip_forward.31} parent=0 // pred_check_branch
    %15 = sbr.rel (0) target = $region13
  $region12: #{dip_forward.31} parent=0 // pred_region
    _
  $region13: #{dip_forward.31} parent=0 // pred_fallthru
    _
  // Predicated region
  $region14: #{dip_forward.31} parent=0 // pred_check
    _
  $region15: #{dip_forward.31} parent=0 // pred_check_branch
    %17 = sbr.rel (0) target = $region17
  $region16: #{dip_forward.31} parent=0 // pred_region
    _
  $region17: #{dip_forward.31} parent=0 // pred_fallthru
    _
  // Predicated region
  $region18: #{dip_forward.31} parent=0 // pred_check
    _
  $region19: #{dip_forward.31} parent=0 // pred_check_branch
    %19 = sbr.rel (0) target = $region21
  $region20: #{dip_forward.31} parent=0 // pred_region
    _
  $region21: #{dip_forward.31} parent=0 // pred_fallthru
    _
  %v21 = vld [vmem:[%s2] sm:$0x3]
  %v22 = vld [vmem:[%s0] sm:$0xff]
  %v23 = vld [vmem:[%s0 + $0x8] sm:$0xff]
  %v24 = vld [vmem:[%s0 + $0x10] sm:$0xff]
  %v25 = vld [vmem:[%s0 + $0x18] sm:$0xff]
  %v26 = vld [vmem:[%s3] sm:$0x3]
  %v27 = vld [vmem:[%s1] sm:$0xff]
  %v29 = vcombine.high %v27, %v27
  %v31 = vunpack.c.l.s4 1983009808
  %v32 = vunpack.c.0.s8 %v31
  %v33 = vlaneseq
  %v34 = vshrl.u32 %v33, 7
  %v35 = vsub.s32 %v32, %v34
  %v36 = vrot.slane %v27, %v35
  %v38 = vunpack.c.l.s4 1983009808
  %v39 = vunpack.c.0.s8 %v38
  %v40 = vlaneseq
  %v41 = vshrl.u32 %v40, 7
  %v42 = vsub.s32 %v39, %v41
  %v43 = vrot.slane %v29, %v42
  %v44 = vcombine.high %v36, %v36
  %v45 = vcombine.high %v43, %v43
  %vm46 = vcmask 31744
  %v48 = vsel %vm46, %v26, 0
  %vm50 = vcmask 1041408
  %v52 = vsel %vm50, %v36, 0
  %v55 = vsel %vm50, %v44, 0
  %v58 = vsel %vm50, %v43, 0
  %v61 = vsel %vm50, %v45, 0
  %63 = vmatprep.subr.bf16.mxu0 %v55
  %64 = vmatpush1.bf16.msra.mxu0 %v52
  %65 = vmatprep.subr.bf16.mxu0 0
  %66 = vmatpush1.bf16.msra.mxu0 0
  %67 = vmatprep.subr.bf16.mxu0 0
  %68 = vmatpush1.bf16.msra.mxu0 0
  %69 = vmatprep.subr.bf16.mxu0 0
  %70 = vmatpush1.bf16.msra.mxu0 0
  %71 = vmatprep.subr.bf16.mxu0 0
  %72 = vmatpush1.bf16.msra.mxu0 0
  %73 = vmatprep.subr.bf16.mxu0 0
  %74 = vmatpush1.bf16.msra.mxu0 0
  %75 = vmatprep.subr.bf16.mxu0 0
  %76 = vmatpush1.bf16.msra.mxu0 0
  %77 = vmatprep.subr.bf16.mxu0 0
  %78 = vmatpush1.bf16.msra.mxu0 0
  %79 = vmatprep.subr.bf16.mxu0 0
  %80 = vmatpush1.bf16.msra.mxu0 0
  %81 = vmatprep.subr.bf16.mxu0 0
  %82 = vmatpush1.bf16.msra.mxu0 0
  %83 = vmatprep.subr.bf16.mxu0 0
  %84 = vmatpush1.bf16.msra.mxu0 0
  %85 = vmatprep.subr.bf16.mxu0 0
  %86 = vmatpush1.bf16.msra.mxu0 0
  %87 = vmatprep.subr.bf16.mxu0 0
  %88 = vmatpush1.bf16.msra.mxu0 0
  %89 = vmatprep.subr.bf16.mxu0 0
  %90 = vmatpush1.bf16.msra.mxu0 0
  %91 = vmatprep.subr.bf16.mxu0 0
  %92 = vmatpush1.bf16.msra.mxu0 0
  %93 = vmatprep.subr.bf16.mxu0 0
  %94 = vmatpush1.bf16.msra.mxu0 0
  %95 = vmatprep.mubr.bf16.mxu0 0
  %96 = vmatmul.mubr.bf16.gmra.mrb[0].mxu0 %v48
  %v97 = vpop.f32.mrb[0].mxu0
  %v98 = vadd.f32 0.0, %v97
  %v99 = vpop.f32.mrb[0].mxu0
  %v100 = vadd.f32 0.0, %v99
  %v101 = vpop.f32.mrb[0].mxu0
  %v102 = vpop.f32.mrb[0].mxu0
  %103 = vdwg.mxu0
  %104 = vmatprep.subr.bf16.mxu0 %v61
  %105 = vmatpush1.bf16.msra.mxu0 %v58
  %106 = vmatprep.subr.bf16.mxu0 0
  %107 = vmatpush1.bf16.msra.mxu0 0
  %108 = vmatprep.subr.bf16.mxu0 0
  %109 = vmatpush1.bf16.msra.mxu0 0
  %110 = vmatprep.subr.bf16.mxu0 0
  %111 = vmatpush1.bf16.msra.mxu0 0
  %112 = vmatprep.subr.bf16.mxu0 0
  %113 = vmatpush1.bf16.msra.mxu0 0
  %114 = vmatprep.subr.bf16.mxu0 0
  %115 = vmatpush1.bf16.msra.mxu0 0
  %116 = vmatprep.subr.bf16.mxu0 0
  %117 = vmatpush1.bf16.msra.mxu0 0
  %118 = vmatprep.subr.bf16.mxu0 0
  %119 = vmatpush1.bf16.msra.mxu0 0
  %120 = vmatprep.subr.bf16.mxu0 0
  %121 = vmatpush1.bf16.msra.mxu0 0
  %122 = vmatprep.subr.bf16.mxu0 0
  %123 = vmatpush1.bf16.msra.mxu0 0
  %124 = vmatprep.subr.bf16.mxu0 0
  %125 = vmatpush1.bf16.msra.mxu0 0
  %126 = vmatprep.subr.bf16.mxu0 0
  %127 = vmatpush1.bf16.msra.mxu0 0
  %128 = vmatprep.subr.bf16.mxu0 0
  %129 = vmatpush1.bf16.msra.mxu0 0
  %130 = vmatprep.subr.bf16.mxu0 0
  %131 = vmatpush1.bf16.msra.mxu0 0
  %132 = vmatprep.subr.bf16.mxu0 0
  %133 = vmatpush1.bf16.msra.mxu0 0
  %134 = vmatprep.subr.bf16.mxu0 0
  %135 = vmatpush1.bf16.msra.mxu0 0
  %136 = vmatprep.mubr.bf16.mxu0 0
  %137 = vmatmul.mubr.bf16.gmra.mrb[0].mxu0 %v48
  %v138 = vpop.f32.mrb[0].mxu0
  %v139 = vadd.f32 0.0, %v138
  %v140 = vpop.f32.mrb[0].mxu0
  %v141 = vadd.f32 0.0, %v140
  %v142 = vpop.f32.mrb[0].mxu0
  %v143 = vpop.f32.mrb[0].mxu0
  %144 = vdwg.mxu0
  %v149 = vunpack.c.l.b16 %v22
  %v150 = vunpack.c.h.b16 %v22
  %v151 = vunpack.c.l.b16 %v23
  %v152 = vunpack.c.h.b16 %v23
  %v153 = vunpack.c.l.b16 %v24
  %v154 = vunpack.c.h.b16 %v24
  %v155 = vunpack.c.l.b16 %v25
  %v156 = vunpack.c.h.b16 %v25
  %v157 = vpack.c.b16 %v153, %v149
  %v158 = vpack.c.b16 %v154, %v150
  %v159 = vpack.c.b16 %v155, %v151
  %v160 = vpack.c.b16 %v156, %v152
  %vm165 = vcmask 130048
  %v167 = vsel %vm165, %v21, 0
  %169 = vmatprep.subr.bf16.mxu0 %v158
  %170 = vmatpush1.bf16.msra.mxu0 %v157
  %171 = vmatprep.subr.bf16.mxu0 0
  %172 = vmatpush1.bf16.msra.mxu0 0
  %173 = vmatprep.subr.bf16.mxu0 0
  %174 = vmatpush1.bf16.msra.mxu0 0
  %175 = vmatprep.subr.bf16.mxu0 0
  %176 = vmatpush1.bf16.msra.mxu0 0
  %177 = vmatprep.subr.bf16.mxu0 0
  %178 = vmatpush1.bf16.msra.mxu0 0
  %179 = vmatprep.subr.bf16.mxu0 0
  %180 = vmatpush1.bf16.msra.mxu0 0
  %181 = vmatprep.subr.bf16.mxu0 0
  %182 = vmatpush1.bf16.msra.mxu0 0
  %183 = vmatprep.subr.bf16.mxu0 0
  %184 = vmatpush1.bf16.msra.mxu0 0
  %185 = vmatprep.subr.bf16.mxu0 0
  %186 = vmatpush1.bf16.msra.mxu0 0
  %187 = vmatprep.subr.bf16.mxu0 0
  %188 = vmatpush1.bf16.msra.mxu0 0
  %189 = vmatprep.subr.bf16.mxu0 0
  %190 = vmatpush1.bf16.msra.mxu0 0
  %191 = vmatprep.subr.bf16.mxu0 0
  %192 = vmatpush1.bf16.msra.mxu0 0
  %193 = vmatprep.subr.bf16.mxu0 0
  %194 = vmatpush1.bf16.msra.mxu0 0
  %195 = vmatprep.subr.bf16.mxu0 0
  %196 = vmatpush1.bf16.msra.mxu0 0
  %197 = vmatprep.subr.bf16.mxu0 0
  %198 = vmatpush1.bf16.msra.mxu0 0
  %199 = vmatprep.subr.bf16.mxu0 0
  %200 = vmatpush1.bf16.msra.mxu0 0
  %201 = vmatprep.mubr.bf16.mxu0 0
  %202 = vmatmul.mubr.bf16.gmra.mrb[0].mxu0 %v167
  %v203 = vpop.f32.mrb[0].mxu0
  %v204 = vadd.f32 %v98, %v203
  %v205 = vpop.f32.mrb[0].mxu0
  %v206 = vadd.f32 %v100, %v205
  %v207 = vpop.f32.mrb[0].mxu0
  %v208 = vpop.f32.mrb[0].mxu0
  %209 = vdwg.mxu0
  %210 = vmatprep.subr.bf16.mxu0 %v160
  %211 = vmatpush1.bf16.msra.mxu0 %v159
  %212 = vmatprep.subr.bf16.mxu0 0
  %213 = vmatpush1.bf16.msra.mxu0 0
  %214 = vmatprep.subr.bf16.mxu0 0
  %215 = vmatpush1.bf16.msra.mxu0 0
  %216 = vmatprep.subr.bf16.mxu0 0
  %217 = vmatpush1.bf16.msra.mxu0 0
  %218 = vmatprep.subr.bf16.mxu0 0
  %219 = vmatpush1.bf16.msra.mxu0 0
  %220 = vmatprep.subr.bf16.mxu0 0
  %221 = vmatpush1.bf16.msra.mxu0 0
  %222 = vmatprep.subr.bf16.mxu0 0
  %223 = vmatpush1.bf16.msra.mxu0 0
  %224 = vmatprep.subr.bf16.mxu0 0
  %225 = vmatpush1.bf16.msra.mxu0 0
  %226 = vmatprep.subr.bf16.mxu0 0
  %227 = vmatpush1.bf16.msra.mxu0 0
  %228 = vmatprep.subr.bf16.mxu0 0
  %229 = vmatpush1.bf16.msra.mxu0 0
  %230 = vmatprep.subr.bf16.mxu0 0
  %231 = vmatpush1.bf16.msra.mxu0 0
  %232 = vmatprep.subr.bf16.mxu0 0
  %233 = vmatpush1.bf16.msra.mxu0 0
  %234 = vmatprep.subr.bf16.mxu0 0
  %235 = vmatpush1.bf16.msra.mxu0 0
  %236 = vmatprep.subr.bf16.mxu0 0
  %237 = vmatpush1.bf16.msra.mxu0 0
  %238 = vmatprep.subr.bf16.mxu0 0
  %239 = vmatpush1.bf16.msra.mxu0 0
  %240 = vmatprep.subr.bf16.mxu0 0
  %241 = vmatpush1.bf16.msra.mxu0 0
  %242 = vmatprep.mubr.bf16.mxu0 0
  %243 = vmatmul.mubr.bf16.gmra.mrb[0].mxu0 %v167
  %v244 = vpop.f32.mrb[0].mxu0
  %v245 = vadd.f32 %v139, %v244
  %v246 = vpop.f32.mrb[0].mxu0
  %v247 = vadd.f32 %v141, %v246
  %v248 = vpop.f32.mrb[0].mxu0
  %v249 = vpop.f32.mrb[0].mxu0
  %250 = vdwg.mxu0
  %v251 = vld [vmem:[%s4] sm:$0x7]
  %253 = vset.pattern.permute.xlu0 0
  %254 = vperm.xlu0 %253, %v251
  %v255 = vpop.permute.xlu0 %254
  %v257 = vadd.f32 %v204, %v255
  %v258 = vadd.f32 %v206, %v255
  %v259 = vadd.f32 %v245, %v255
  %v260 = vadd.f32 %v247, %v255
  %v261 = vsub.f32 0.0, %v257
  %v262 = vsub.f32 0.0, %v258
  %v263 = vsub.f32 0.0, %v259
  %v264 = vsub.f32 0.0, %v260
  %v265 = vmul.f32 %v261, 1.442695
  %v266 = vpow.pop %v265
  %v267 = vmul.f32 %v262, 1.442695
  %v268 = vpow.pop %v267
  %v269 = vmul.f32 %v263, 1.442695
  %v270 = vpow.pop %v269
  %v271 = vmul.f32 %v264, 1.442695
  %v272 = vpow.pop %v271
  %v273 = vadd.f32 %v266, 1.0
  %v274 = vadd.f32 %v268, 1.0
  %v275 = vadd.f32 %v270, 1.0
  %v276 = vadd.f32 %v272, 1.0
  %v277 = vrcp.pop %v273
  %v278 = vmul.f32 1.0, %v277
  %v279 = vrcp.pop %v274
  %v280 = vmul.f32 1.0, %v279
  %v281 = vrcp.pop %v275
  %v282 = vmul.f32 1.0, %v281
  %v283 = vrcp.pop %v276
  %v284 = vmul.f32 1.0, %v283
  %v289 = vcombine.low %v278, %v280
  %v290 = vcombine.low %v282, %v284
  %293 = vst [vmem:[%s5] sm:$0x77] %v289
  %294 = vst [vmem:[%s5 + $0x8] sm:$0x77] %v290
  // Predicated region
  $region22: #{dip_forward.31} parent=0 // pred_check
    _
  $region23: #{dip_forward.31} parent=0 // pred_check_branch
    %296 = sbr.rel (0) target = $region25
  $region24: #{dip_forward.31} parent=0 // pred_region
    _
  $region25: #{dip_forward.31} parent=0 // pred_fallthru
    _
  // Predicated region
  $region26: #{dip_forward.31} parent=0 // pred_check
    _
  $region27: #{dip_forward.31} parent=0 // pred_check_branch
    %298 = sbr.rel (0) target = $region29
  $region28: #{dip_forward.31} parent=0 // pred_region
    _
  $region29: #{dip_forward.31} parent=0 // pred_fallthru
    _

</llo_original>
